<compile_context>
chip_gen: v6e
topology: v6e:2x2x1
jax: 0.10.0
libtpu: 0.0.40
codegen_flags: <defaults>
</compile_context>

<pallas_src>
import jax
import jax.numpy as jnp
from jax import lax
from jax.experimental import pallas as pl
from jax.experimental.pallas import tpu as pltpu

INPUT_SIZE = 2
HIDDEN = 64                  # per-gate width (PyTorch hidden_size)
OUTPUT_DIM = 128
GATES = 4 * HIDDEN           # 256: de-padded gate width, order [i | f | o | g]
BP = 8                       # batch padded to one full sublane group
UNROLL = 8                   # recurrence unroll factor


def encoder_kernel(x_ref, wih0_ref, whh0_ref, b0_ref,
                   w1ih_ref, w1hh_ref, b1_ref, wfc_ref, bfc_ref,
                   out_ref, xp_ref):
    """2-layer LSTM recurrence + FC; states live in vregs.

    x_ref    : [T*BP, INPUT_SIZE]  time-major, batch padded to BP
    wih0_ref : [INPUT_SIZE, GATES] layer-0 input weights (gate order i,f,o,g)
    whh0_ref : [HIDDEN, GATES]     layer-0 recurrent weights
    b0_ref   : [1, GATES]          b_ih0 + b_hh0
    w1ih_ref : [HIDDEN, GATES]     layer-1 input weights (takes h0)
    w1hh_ref : [HIDDEN, GATES]     layer-1 recurrent weights (takes h1)
    b1_ref   : [BP, GATES]         b_ih1 + b_hh1, pre-broadcast over batch
    wfc_ref  : [HIDDEN, OUTPUT_DIM]
    bfc_ref  : [BP, OUTPUT_DIM]    fc bias, pre-broadcast
    out_ref  : [BP, OUTPUT_DIM]
    xp_ref   : VMEM scratch [T*BP, GATES] — hoisted layer-0 input projection
    """
    T = x_ref.shape[0] // BP
    H = HIDDEN

    # --- Prologue: hoist layer-0 input projection out of the recurrence. ---
    xp_ref[...] = (jnp.dot(x_ref[...], wih0_ref[...],
                           preferred_element_type=jnp.float32)
                   + b0_ref[...])

    whh0 = whh0_ref[...]
    w1ih = w1ih_ref[...]
    w1hh = w1hh_ref[...]
    b1 = b1_ref[...]

    def gates_to_hc(g, c):
        # g: [BP, 4H], layout [i | f | o | g], each field exactly H=64 lanes.
        sig = jax.nn.sigmoid(g[:, :3 * H])      # one EUP slab for i, f, o
        i = sig[:, 0 * H:1 * H]
        f = sig[:, 1 * H:2 * H]
        o = sig[:, 2 * H:3 * H]
        gg = jnp.tanh(g[:, 3 * H:])
        c_new = f * c + i * gg
        h_new = o * jnp.tanh(c_new)
        return h_new, c_new

    def step(t, carry):
        # g1hh = h1(t-1) @ W_hh1 was issued at the end of the previous step
        # (software pipelining): it only depends on h1(t-1), so it is off the
        # h0 critical path and overlaps layer-0's matmul/activations.
        h0, c0, h1, c1, g1hh = carry
        off = pl.multiple_of(t * BP, BP)

        # Layer 0 (critical path): recurrent matmul only; input proj is hoisted.
        g0 = (xp_ref[pl.ds(off, BP), :]
              + jnp.dot(h0, whh0, preferred_element_type=jnp.float32))
        h0, c0 = gates_to_hc(g0, c0)

        # Layer 1: two independent accumulating dots (no concat copy).
        g1 = (jnp.dot(h0, w1ih, preferred_element_type=jnp.float32)
              + g1hh + b1)
        h1, c1 = gates_to_hc(g1, c1)

        # Immediately issue next step's h1 contribution (skewed one step ahead).
        g1hh = jnp.dot(h1, w1hh, preferred_element_type=jnp.float32)
        return (h0, c0, h1, c1, g1hh)

    unroll = UNROLL if T % UNROLL == 0 else 1

    def body(tt, carry):
        for u in range(unroll):   # manual unroll: scheduler interleaves steps
            carry = step(tt * unroll + u, carry)
        return carry

    zh = jnp.zeros((BP, H), jnp.float32)
    zg = jnp.zeros((BP, 4 * H), jnp.float32)
    h0, c0, h1, c1, _ = lax.fori_loop(0, T // unroll, body,
                                      (zh, zh, zh, zh, zg))

    # encoding = fc(hn[-1]) : hn[-1] is layer-2 hidden state at the last step.
    out_ref[...] = (jnp.dot(h1, wfc_ref[...],
                            preferred_element_type=jnp.float32)
                    + bfc_ref[...])


def _pack_gate_cols(w):
    """[in, 4*HIDDEN] in PyTorch gate order (i,f,g,o) -> order (i,f,o,g).
    No lane padding: each gate keeps its true 64-lane width."""
    i = w[:, 0 * HIDDEN:1 * HIDDEN]
    f = w[:, 1 * HIDDEN:2 * HIDDEN]
    g = w[:, 2 * HIDDEN:3 * HIDDEN]
    o = w[:, 3 * HIDDEN:4 * HIDDEN]
    return jnp.concatenate([i, f, o, g], axis=1)


def encoder_forward(x, params):
    B, C, H, W = x.shape
    assert C == INPUT_SIZE
    T = H * W

    # [B,C,H,W] -> [B,C,T] -> [T,B,C] (time-major), pad batch to BP, flatten to
    # [T*BP, C] so each timestep's rows are one aligned sublane group.
    x_seq = x.reshape(B, C, T).transpose(2, 0, 1)
    x_pad = jnp.zeros((T, BP, C), x.dtype).at[:, :B, :].set(x_seq)
    x_flat = x_pad.reshape(T * BP, C)

    # Permute gates to (i,f,o,g); no padding anywhere (K=64, N=256).
    wih0_p = _pack_gate_cols(params["wih0"])                 # [2, 256]
    whh0_p = _pack_gate_cols(params["whh0"])                 # [64, 256]
    b0_p = _pack_gate_cols(params["b0"])                     # [1, 256]
    w1ih_p = _pack_gate_cols(params["wih1"])                 # [64, 256]
    w1hh_p = _pack_gate_cols(params["whh1"])                 # [64, 256]
    b1_p = jnp.broadcast_to(_pack_gate_cols(params["b1"]), (BP, GATES))
    wfc_p = params["wfc"]                                    # [64, 128]
    bfc_p = jnp.broadcast_to(params["bfc"], (BP, OUTPUT_DIM))

    vmem = pl.BlockSpec(memory_space=pltpu.MemorySpace.VMEM)
    args = (x_flat, wih0_p, whh0_p, b0_p, w1ih_p, w1hh_p, b1_p, wfc_p, bfc_p)

    out = pl.pallas_call(
        encoder_kernel,
        out_shape=jax.ShapeDtypeStruct((BP, OUTPUT_DIM), jnp.float32),
        in_specs=[vmem] * len(args),
        out_specs=vmem,
        scratch_shapes=[pltpu.VMEM((T * BP, GATES), jnp.float32)],
    )(*args)
    return out[:B]


def encoder_ref(x, params):
    """Pure-JAX reference (mirrors torch.nn.LSTM semantics, gate order ifgo)."""
    B, C, H, W = x.shape
    T = H * W
    x_seq = x.reshape(B, C, T).transpose(2, 0, 1)  # [T, B, C]

    def cell(x_t, h, c, wih, whh, b):
        gates = x_t @ wih + h @ whh + b
        i = jax.nn.sigmoid(gates[:, :HIDDEN])
        f = jax.nn.sigmoid(gates[:, HIDDEN:2 * HIDDEN])
        g = jnp.tanh(gates[:, 2 * HIDDEN:3 * HIDDEN])
        o = jax.nn.sigmoid(gates[:, 3 * HIDDEN:])
        c = f * c + i * g
        h = o * jnp.tanh(c)
        return h, c

    def step(carry, x_t):
        h0, c0, h1, c1 = carry
        h0, c0 = cell(x_t, h0, c0, params["wih0"], params["whh0"], params["b0"])
        h1, c1 = cell(h0, h1, c1, params["wih1"], params["whh1"], params["b1"])
        return (h0, c0, h1, c1), None

    init = tuple(jnp.zeros((B, HIDDEN), jnp.float32) for _ in range(4))
    (h0, c0, h1, c1), _ = lax.scan(step, init, x_seq)
    return h1 @ params["wfc"] + params["bfc"]


if __name__ == "__main__":
    key = jax.random.PRNGKey(0)
    keys = jax.random.split(key, 11)

    # Deterministic parameter init (PyTorch-style uniform(-1/sqrt(H), 1/sqrt(H))).
    bound = 1.0 / (HIDDEN ** 0.5)

    def u(k, shape):
        return jax.random.uniform(k, shape, jnp.float32, -bound, bound)

    params = dict(
        wih0=u(keys[0], (INPUT_SIZE, GATES)),                 # weight_ih_l0^T
        whh0=u(keys[1], (HIDDEN, GATES)),                     # weight_hh_l0^T
        b0=u(keys[2], (1, GATES)) + u(keys[3], (1, GATES)),   # b_ih_l0 + b_hh_l0
        wih1=u(keys[4], (HIDDEN, GATES)),                     # weight_ih_l1^T
        whh1=u(keys[5], (HIDDEN, GATES)),                     # weight_hh_l1^T
        b1=u(keys[6], (1, GATES)) + u(keys[7], (1, GATES)),   # b_ih_l1 + b_hh_l1
        wfc=u(keys[8], (HIDDEN, OUTPUT_DIM)),                 # fc.weight^T
        bfc=u(keys[9], (1, OUTPUT_DIM)),                      # fc.bias
    )

    B, C, H, W = 2, 2, 8, 8   # input_size must be 2; T = H*W = 64
    x = jax.random.normal(keys[10], (B, C, H, W), jnp.float32)

    out = encoder_forward(x, params)
    jax.block_until_ready(out)

    ref = encoder_ref(x, params)
    assert out.shape == (B, OUTPUT_DIM)
    assert jnp.allclose(out, ref, atol=1e-5, rtol=1e-5), float(
        jnp.max(jnp.abs(out - ref)))

    print("KERNEL_OK")
</pallas_src>

<mosaic_0001>
module attributes {stable_mosaic.version = 11 : i64} {
  func.func @encoder_kernel(%arg0: memref<512x2xf32, #tpu.memory_space<vmem>>, %arg1: memref<2x256xf32, #tpu.memory_space<vmem>>, %arg2: memref<64x256xf32, #tpu.memory_space<vmem>>, %arg3: memref<1x256xf32, #tpu.memory_space<vmem>>, %arg4: memref<64x256xf32, #tpu.memory_space<vmem>>, %arg5: memref<64x256xf32, #tpu.memory_space<vmem>>, %arg6: memref<8x256xf32, #tpu.memory_space<vmem>>, %arg7: memref<64x128xf32, #tpu.memory_space<vmem>>, %arg8: memref<8x128xf32, #tpu.memory_space<vmem>>, %arg9: memref<8x128xf32, #tpu.memory_space<vmem>>, %arg10: memref<512x256xf32, #tpu.memory_space<vmem>>) attributes {dimension_semantics = [], scalar_prefetch = 0 : i64, scratch_operands = 1 : i64, tpu.core_type = #tpu.core_type<tc>} {
    %c0 = arith.constant 0 : index
    %c0_0 = arith.constant 0 : index
    %0 = vector.load %arg0[%c0, %c0_0] : memref<512x2xf32, #tpu.memory_space<vmem>>, vector<512x2xf32>
    %c0_1 = arith.constant 0 : index
    %c0_2 = arith.constant 0 : index
    %1 = vector.load %arg1[%c0_1, %c0_2] : memref<2x256xf32, #tpu.memory_space<vmem>>, vector<2x256xf32>
    %cst = arith.constant dense<0.000000e+00> : vector<512x256xf32>
    %2 = tpu.matmul %0, %1, %cst {dimension_numbers = #tpu.dot_dimension_numbers<[1], [0], [0], [1], [0, 0, 1, 1], [], []>} : vector<512x2xf32>, vector<2x256xf32>, vector<512x256xf32> -> vector<512x256xf32>
    %c0_3 = arith.constant 0 : index
    %c0_4 = arith.constant 0 : index
    %3 = vector.load %arg3[%c0_3, %c0_4] : memref<1x256xf32, #tpu.memory_space<vmem>>, vector<1x256xf32>
    %4 = vector.broadcast %3 : vector<1x256xf32> to vector<512x256xf32>
    %5 = arith.addf %2, %4 : vector<512x256xf32>
    %c0_5 = arith.constant 0 : index
    %c0_6 = arith.constant 0 : index
    %6 = vector.load %arg10[%c0_5, %c0_6] : memref<512x256xf32, #tpu.memory_space<vmem>>, vector<512x256xf32>
    tpu.vector_store %arg10[%c0_5, %c0_6], %5 {strides = array<i32>} : memref<512x256xf32, #tpu.memory_space<vmem>>, vector<512x256xf32>,
    %c0_7 = arith.constant 0 : index
    %c0_8 = arith.constant 0 : index
    %7 = vector.load %arg2[%c0_7, %c0_8] : memref<64x256xf32, #tpu.memory_space<vmem>>, vector<64x256xf32>
    %c0_9 = arith.constant 0 : index
    %c0_10 = arith.constant 0 : index
    %8 = vector.load %arg4[%c0_9, %c0_10] : memref<64x256xf32, #tpu.memory_space<vmem>>, vector<64x256xf32>
    %c0_11 = arith.constant 0 : index
    %c0_12 = arith.constant 0 : index
    %9 = vector.load %arg5[%c0_11, %c0_12] : memref<64x256xf32, #tpu.memory_space<vmem>>, vector<64x256xf32>
    %c0_13 = arith.constant 0 : index
    %c0_14 = arith.constant 0 : index
    %10 = vector.load %arg6[%c0_13, %c0_14] : memref<8x256xf32, #tpu.memory_space<vmem>>, vector<8x256xf32>
    %cst_15 = arith.constant 0.000000e+00 : f32
    %11 = vector.broadcast %cst_15 : f32 to vector<8x64xf32>
    %cst_16 = arith.constant 0.000000e+00 : f32
    %12 = vector.broadcast %cst_16 : f32 to vector<8x256xf32>
    %c0_i32 = arith.constant 0 : i32
    %c8_i32 = arith.constant 8 : i32
    %13 = arith.addi %c0_i32, %c8_i32 : i32
    %c1_i32 = arith.constant 1 : i32
    %14:5 = scf.for %arg11 = %c0_i32 to %13 step %c1_i32 iter_args(%arg12 = %11, %arg13 = %11, %arg14 = %11, %arg15 = %11, %arg16 = %12) -> (vector<8x64xf32>, vector<8x64xf32>, vector<8x64xf32>, vector<8x64xf32>, vector<8x256xf32>)  : i32 {
      %c8_i32_25 = arith.constant 8 : i32
      %20 = arith.muli %arg11, %c8_i32_25 : i32
      %c0_i32_26 = arith.constant 0 : i32
      %21 = arith.addi %20, %c0_i32_26 : i32
      %c8_i32_27 = arith.constant 8 : i32
      %22 = arith.muli %21, %c8_i32_27 : i32
      %23 = tpu.assume_multiple %22, 8 : i32
      %24 = arith.index_cast %23 : i32 to index
      %c0_28 = arith.constant 0 : index
      %25 = vector.load %arg10[%24, %c0_28] : memref<512x256xf32, #tpu.memory_space<vmem>>, vector<8x256xf32>
      %cst_29 = arith.constant dense<0.000000e+00> : vector<8x256xf32>
      %26 = tpu.matmul %arg12, %7, %cst_29 {dimension_numbers = #tpu.dot_dimension_numbers<[1], [0], [0], [1], [0, 0, 1, 1], [], []>} : vector<8x64xf32>, vector<64x256xf32>, vector<8x256xf32> -> vector<8x256xf32>
      %27 = arith.addf %25, %26 : vector<8x256xf32>
      %28 = vector.extract_strided_slice %27 {offsets = [0, 0], sizes = [8, 192], strides = [1, 1]} : vector<8x256xf32> to vector<8x192xf32>
      %29 = arith.negf %28 : vector<8x192xf32>
      %30 = math.exp %29 : vector<8x192xf32>
      %cst_30 = arith.constant 1.000000e+00 : f32
      %31 = vector.broadcast %cst_30 : f32 to vector<8x192xf32>
      %32 = arith.addf %31, %30 : vector<8x192xf32>
      %33 = arith.divf %31, %32 : vector<8x192xf32>
      %34 = vector.extract_strided_slice %33 {offsets = [0, 0], sizes = [8, 64], strides = [1, 1]} : vector<8x192xf32> to vector<8x64xf32>
      %35 = vector.extract_strided_slice %33 {offsets = [0, 64], sizes = [8, 64], strides = [1, 1]} : vector<8x192xf32> to vector<8x64xf32>
      %36 = vector.extract_strided_slice %33 {offsets = [0, 128], sizes = [8, 64], strides = [1, 1]} : vector<8x192xf32> to vector<8x64xf32>
      %37 = vector.extract_strided_slice %27 {offsets = [0, 192], sizes = [8, 64], strides = [1, 1]} : vector<8x256xf32> to vector<8x64xf32>
      %38 = math.tanh %37 : vector<8x64xf32>
      %39 = arith.mulf %35, %arg13 : vector<8x64xf32>
      %40 = arith.mulf %34, %38 : vector<8x64xf32>
      %41 = arith.addf %39, %40 : vector<8x64xf32>
      %42 = math.tanh %41 : vector<8x64xf32>
      %43 = arith.mulf %36, %42 : vector<8x64xf32>
      %cst_31 = arith.constant dense<0.000000e+00> : vector<8x256xf32>
      %44 = tpu.matmul %43, %8, %cst_31 {dimension_numbers = #tpu.dot_dimension_numbers<[1], [0], [0], [1], [0, 0, 1, 1], [], []>} : vector<8x64xf32>, vector<64x256xf32>, vector<8x256xf32> -> vector<8x256xf32>
      %45 = arith.addf %44, %arg16 : vector<8x256xf32>
      %46 = arith.addf %45, %10 : vector<8x256xf32>
      %47 = vector.extract_strided_slice %46 {offsets = [0, 0], sizes = [8, 192], strides = [1, 1]} : vector<8x256xf32> to vector<8x192xf32>
      %48 = arith.negf %47 : vector<8x192xf32>
      %49 = math.exp %48 : vector<8x192xf32>
      %cst_32 = arith.constant 1.000000e+00 : f32
      %50 = vector.broadcast %cst_32 : f32 to vector<8x192xf32>
      %51 = arith.addf %50, %49 : vector<8x192xf32>
      %52 = arith.divf %50, %51 : vector<8x192xf32>
      %53 = vector.extract_strided_slice %52 {offsets = [0, 0], sizes = [8, 64], strides = [1, 1]} : vector<8x192xf32> to vector<8x64xf32>
      %54 = vector.extract_strided_slice %52 {offsets = [0, 64], sizes = [8, 64], strides = [1, 1]} : vector<8x192xf32> to vector<8x64xf32>
      %55 = vector.extract_strided_slice %52 {offsets = [0, 128], sizes = [8, 64], strides = [1, 1]} : vector<8x192xf32> to vector<8x64xf32>
      %56 = vector.extract_strided_slice %46 {offsets = [0, 192], sizes = [8, 64], strides = [1, 1]} : vector<8x256xf32> to vector<8x64xf32>
      %57 = math.tanh %56 : vector<8x64xf32>
      %58 = arith.mulf %54, %arg15 : vector<8x64xf32>
      %59 = arith.mulf %53, %57 : vector<8x64xf32>
      %60 = arith.addf %58, %59 : vector<8x64xf32>
      %61 = math.tanh %60 : vector<8x64xf32>
      %62 = arith.mulf %55, %61 : vector<8x64xf32>
      %cst_33 = arith.constant dense<0.000000e+00> : vector<8x256xf32>
      %63 = tpu.matmul %62, %9, %cst_33 {dimension_numbers = #tpu.dot_dimension_numbers<[1], [0], [0], [1], [0, 0, 1, 1], [], []>} : vector<8x64xf32>, vector<64x256xf32>, vector<8x256xf32> -> vector<8x256xf32>
      %c8_i32_34 = arith.constant 8 : i32
      %64 = arith.muli %arg11, %c8_i32_34 : i32
      %c1_i32_35 = arith.constant 1 : i32
      %65 = arith.addi %64, %c1_i32_35 : i32
      %c8_i32_36 = arith.constant 8 : i32
      %66 = arith.muli %65, %c8_i32_36 : i32
      %67 = tpu.assume_multiple %66, 8 : i32
      %68 = arith.index_cast %67 : i32 to index
      %c0_37 = arith.constant 0 : index
      %69 = vector.load %arg10[%68, %c0_37] : memref<512x256xf32, #tpu.memory_space<vmem>>, vector<8x256xf32>
      %cst_38 = arith.constant dense<0.000000e+00> : vector<8x256xf32>
      %70 = tpu.matmul %43, %7, %cst_38 {dimension_numbers = #tpu.dot_dimension_numbers<[1], [0], [0], [1], [0, 0, 1, 1], [], []>} : vector<8x64xf32>, vector<64x256xf32>, vector<8x256xf32> -> vector<8x256xf32>
      %71 = arith.addf %69, %70 : vector<8x256xf32>
      %72 = vector.extract_strided_slice %71 {offsets = [0, 0], sizes = [8, 192], strides = [1, 1]} : vector<8x256xf32> to vector<8x192xf32>
      %73 = arith.negf %72 : vector<8x192xf32>
      %74 = math.exp %73 : vector<8x192xf32>
      %cst_39 = arith.constant 1.000000e+00 : f32
      %75 = vector.broadcast %cst_39 : f32 to vector<8x192xf32>
      %76 = arith.addf %75, %74 : vector<8x192xf32>
      %77 = arith.divf %75, %76 : vector<8x192xf32>
      %78 = vector.extract_strided_slice %77 {offsets = [0, 0], sizes = [8, 64], strides = [1, 1]} : vector<8x192xf32> to vector<8x64xf32>
      %79 = vector.extract_strided_slice %77 {offsets = [0, 64], sizes = [8, 64], strides = [1, 1]} : vector<8x192xf32> to vector<8x64xf32>
      %80 = vector.extract_strided_slice %77 {offsets = [0, 128], sizes = [8, 64], strides = [1, 1]} : vector<8x192xf32> to vector<8x64xf32>
      %81 = vector.extract_strided_slice %71 {offsets = [0, 192], sizes = [8, 64], strides = [1, 1]} : vector<8x256xf32> to vector<8x64xf32>
      %82 = math.tanh %81 : vector<8x64xf32>
      %83 = arith.mulf %79, %41 : vector<8x64xf32>
      %84 = arith.mulf %78, %82 : vector<8x64xf32>
      %85 = arith.addf %83, %84 : vector<8x64xf32>
      %86 = math.tanh %85 : vector<8x64xf32>
      %87 = arith.mulf %80, %86 : vector<8x64xf32>
      %cst_40 = arith.constant dense<0.000000e+00> : vector<8x256xf32>
      %88 = tpu.matmul %87, %8, %cst_40 {dimension_numbers = #tpu.dot_dimension_numbers<[1], [0], [0], [1], [0, 0, 1, 1], [], []>} : vector<8x64xf32>, vector<64x256xf32>, vector<8x256xf32> -> vector<8x256xf32>
      %89 = arith.addf %88, %63 : vector<8x256xf32>
      %90 = arith.addf %89, %10 : vector<8x256xf32>
      %91 = vector.extract_strided_slice %90 {offsets = [0, 0], sizes = [8, 192], strides = [1, 1]} : vector<8x256xf32> to vector<8x192xf32>
      %92 = arith.negf %91 : vector<8x192xf32>
      %93 = math.exp %92 : vector<8x192xf32>
      %cst_41 = arith.constant 1.000000e+00 : f32
      %94 = vector.broadcast %cst_41 : f32 to vector<8x192xf32>
      %95 = arith.addf %94, %93 : vector<8x192xf32>
      %96 = arith.divf %94, %95 : vector<8x192xf32>
      %97 = vector.extract_strided_slice %96 {offsets = [0, 0], sizes = [8, 64], strides = [1, 1]} : vector<8x192xf32> to vector<8x64xf32>
      %98 = vector.extract_strided_slice %96 {offsets = [0, 64], sizes = [8, 64], strides = [1, 1]} : vector<8x192xf32> to vector<8x64xf32>
      %99 = vector.extract_strided_slice %96 {offsets = [0, 128], sizes = [8, 64], strides = [1, 1]} : vector<8x192xf32> to vector<8x64xf32>
      %100 = vector.extract_strided_slice %90 {offsets = [0, 192], sizes = [8, 64], strides = [1, 1]} : vector<8x256xf32> to vector<8x64xf32>
      %101 = math.tanh %100 : vector<8x64xf32>
      %102 = arith.mulf %98, %60 : vector<8x64xf32>
      %103 = arith.mulf %97, %101 : vector<8x64xf32>
      %104 = arith.addf %102, %103 : vector<8x64xf32>
      %105 = math.tanh %104 : vector<8x64xf32>
      %106 = arith.mulf %99, %105 : vector<8x64xf32>
      %cst_42 = arith.constant dense<0.000000e+00> : vector<8x256xf32>
      %107 = tpu.matmul %106, %9, %cst_42 {dimension_numbers = #tpu.dot_dimension_numbers<[1], [0], [0], [1], [0, 0, 1, 1], [], []>} : vector<8x64xf32>, vector<64x256xf32>, vector<8x256xf32> -> vector<8x256xf32>
      %c8_i32_43 = arith.constant 8 : i32
      %108 = arith.muli %arg11, %c8_i32_43 : i32
      %c2_i32 = arith.constant 2 : i32
      %109 = arith.addi %108, %c2_i32 : i32
      %c8_i32_44 = arith.constant 8 : i32
      %110 = arith.muli %109, %c8_i32_44 : i32
      %111 = tpu.assume_multiple %110, 8 : i32
      %112 = arith.index_cast %111 : i32 to index
      %c0_45 = arith.constant 0 : index
      %113 = vector.load %arg10[%112, %c0_45] : memref<512x256xf32, #tpu.memory_space<vmem>>, vector<8x256xf32>
      %cst_46 = arith.constant dense<0.000000e+00> : vector<8x256xf32>
      %114 = tpu.matmul %87, %7, %cst_46 {dimension_numbers = #tpu.dot_dimension_numbers<[1], [0], [0], [1], [0, 0, 1, 1], [], []>} : vector<8x64xf32>, vector<64x256xf32>, vector<8x256xf32> -> vector<8x256xf32>
      %115 = arith.addf %113, %114 : vector<8x256xf32>
      %116 = vector.extract_strided_slice %115 {offsets = [0, 0], sizes = [8, 192], strides = [1, 1]} : vector<8x256xf32> to vector<8x192xf32>
      %117 = arith.negf %116 : vector<8x192xf32>
      %118 = math.exp %117 : vector<8x192xf32>
      %cst_47 = arith.constant 1.000000e+00 : f32
      %119 = vector.broadcast %cst_47 : f32 to vector<8x192xf32>
      %120 = arith.addf %119, %118 : vector<8x192xf32>
      %121 = arith.divf %119, %120 : vector<8x192xf32>
      %122 = vector.extract_strided_slice %121 {offsets = [0, 0], sizes = [8, 64], strides = [1, 1]} : vector<8x192xf32> to vector<8x64xf32>
      %123 = vector.extract_strided_slice %121 {offsets = [0, 64], sizes = [8, 64], strides = [1, 1]} : vector<8x192xf32> to vector<8x64xf32>
      %124 = vector.extract_strided_slice %121 {offsets = [0, 128], sizes = [8, 64], strides = [1, 1]} : vector<8x192xf32> to vector<8x64xf32>
      %125 = vector.extract_strided_slice %115 {offsets = [0, 192], sizes = [8, 64], strides = [1, 1]} : vector<8x256xf32> to vector<8x64xf32>
      %126 = math.tanh %125 : vector<8x64xf32>
      %127 = arith.mulf %123, %85 : vector<8x64xf32>
      %128 = arith.mulf %122, %126 : vector<8x64xf32>
      %129 = arith.addf %127, %128 : vector<8x64xf32>
      %130 = math.tanh %129 : vector<8x64xf32>
      %131 = arith.mulf %124, %130 : vector<8x64xf32>
      %cst_48 = arith.constant dense<0.000000e+00> : vector<8x256xf32>
      %132 = tpu.matmul %131, %8, %cst_48 {dimension_numbers = #tpu.dot_dimension_numbers<[1], [0], [0], [1], [0, 0, 1, 1], [], []>} : vector<8x64xf32>, vector<64x256xf32>, vector<8x256xf32> -> vector<8x256xf32>
      %133 = arith.addf %132, %107 : vector<8x256xf32>
      %134 = arith.addf %133, %10 : vector<8x256xf32>
      %135 = vector.extract_strided_slice %134 {offsets = [0, 0], sizes = [8, 192], strides = [1, 1]} : vector<8x256xf32> to vector<8x192xf32>
      %136 = arith.negf %135 : vector<8x192xf32>
      %137 = math.exp %136 : vector<8x192xf32>
      %cst_49 = arith.constant 1.000000e+00 : f32
      %138 = vector.broadcast %cst_49 : f32 to vector<8x192xf32>
      %139 = arith.addf %138, %137 : vector<8x192xf32>
      %140 = arith.divf %138, %139 : vector<8x192xf32>
      %141 = vector.extract_strided_slice %140 {offsets = [0, 0], sizes = [8, 64], strides = [1, 1]} : vector<8x192xf32> to vector<8x64xf32>
      %142 = vector.extract_strided_slice %140 {offsets = [0, 64], sizes = [8, 64], strides = [1, 1]} : vector<8x192xf32> to vector<8x64xf32>
      %143 = vector.extract_strided_slice %140 {offsets = [0, 128], sizes = [8, 64], strides = [1, 1]} : vector<8x192xf32> to vector<8x64xf32>
      %144 = vector.extract_strided_slice %134 {offsets = [0, 192], sizes = [8, 64], strides = [1, 1]} : vector<8x256xf32> to vector<8x64xf32>
      %145 = math.tanh %144 : vector<8x64xf32>
      %146 = arith.mulf %142, %104 : vector<8x64xf32>
      %147 = arith.mulf %141, %145 : vector<8x64xf32>
      %148 = arith.addf %146, %147 : vector<8x64xf32>
      %149 = math.tanh %148 : vector<8x64xf32>
      %150 = arith.mulf %143, %149 : vector<8x64xf32>
      %cst_50 = arith.constant dense<0.000000e+00> : vector<8x256xf32>
      %151 = tpu.matmul %150, %9, %cst_50 {dimension_numbers = #tpu.dot_dimension_numbers<[1], [0], [0], [1], [0, 0, 1, 1], [], []>} : vector<8x64xf32>, vector<64x256xf32>, vector<8x256xf32> -> vector<8x256xf32>
      %c8_i32_51 = arith.constant 8 : i32
      %152 = arith.muli %arg11, %c8_i32_51 : i32
      %c3_i32 = arith.constant 3 : i32
      %153 = arith.addi %152, %c3_i32 : i32
      %c8_i32_52 = arith.constant 8 : i32
      %154 = arith.muli %153, %c8_i32_52 : i32
      %155 = tpu.assume_multiple %154, 8 : i32
      %156 = arith.index_cast %155 : i32 to index
      %c0_53 = arith.constant 0 : index
      %157 = vector.load %arg10[%156, %c0_53] : memref<512x256xf32, #tpu.memory_space<vmem>>, vector<8x256xf32>
      %cst_54 = arith.constant dense<0.000000e+00> : vector<8x256xf32>
      %158 = tpu.matmul %131, %7, %cst_54 {dimension_numbers = #tpu.dot_dimension_numbers<[1], [0], [0], [1], [0, 0, 1, 1], [], []>} : vector<8x64xf32>, vector<64x256xf32>, vector<8x256xf32> -> vector<8x256xf32>
      %159 = arith.addf %157, %158 : vector<8x256xf32>
      %160 = vector.extract_strided_slice %159 {offsets = [0, 0], sizes = [8, 192], strides = [1, 1]} : vector<8x256xf32> to vector<8x192xf32>
      %161 = arith.negf %160 : vector<8x192xf32>
      %162 = math.exp %161 : vector<8x192xf32>
      %cst_55 = arith.constant 1.000000e+00 : f32
      %163 = vector.broadcast %cst_55 : f32 to vector<8x192xf32>
      %164 = arith.addf %163, %162 : vector<8x192xf32>
      %165 = arith.divf %163, %164 : vector<8x192xf32>
      %166 = vector.extract_strided_slice %165 {offsets = [0, 0], sizes = [8, 64], strides = [1, 1]} : vector<8x192xf32> to vector<8x64xf32>
      %167 = vector.extract_strided_slice %165 {offsets = [0, 64], sizes = [8, 64], strides = [1, 1]} : vector<8x192xf32> to vector<8x64xf32>
      %168 = vector.extract_strided_slice %165 {offsets = [0, 128], sizes = [8, 64], strides = [1, 1]} : vector<8x192xf32> to vector<8x64xf32>
      %169 = vector.extract_strided_slice %159 {offsets = [0, 192], sizes = [8, 64], strides = [1, 1]} : vector<8x256xf32> to vector<8x64xf32>
      %170 = math.tanh %169 : vector<8x64xf32>
      %171 = arith.mulf %167, %129 : vector<8x64xf32>
      %172 = arith.mulf %166, %170 : vector<8x64xf32>
      %173 = arith.addf %171, %172 : vector<8x64xf32>
      %174 = math.tanh %173 : vector<8x64xf32>
      %175 = arith.mulf %168, %174 : vector<8x64xf32>
      %cst_56 = arith.constant dense<0.000000e+00> : vector<8x256xf32>
      %176 = tpu.matmul %175, %8, %cst_56 {dimension_numbers = #tpu.dot_dimension_numbers<[1], [0], [0], [1], [0, 0, 1, 1], [], []>} : vector<8x64xf32>, vector<64x256xf32>, vector<8x256xf32> -> vector<8x256xf32>
      %177 = arith.addf %176, %151 : vector<8x256xf32>
      %178 = arith.addf %177, %10 : vector<8x256xf32>
      %179 = vector.extract_strided_slice %178 {offsets = [0, 0], sizes = [8, 192], strides = [1, 1]} : vector<8x256xf32> to vector<8x192xf32>
      %180 = arith.negf %179 : vector<8x192xf32>
      %181 = math.exp %180 : vector<8x192xf32>
      %cst_57 = arith.constant 1.000000e+00 : f32
      %182 = vector.broadcast %cst_57 : f32 to vector<8x192xf32>
      %183 = arith.addf %182, %181 : vector<8x192xf32>
      %184 = arith.divf %182, %183 : vector<8x192xf32>
      %185 = vector.extract_strided_slice %184 {offsets = [0, 0], sizes = [8, 64], strides = [1, 1]} : vector<8x192xf32> to vector<8x64xf32>
      %186 = vector.extract_strided_slice %184 {offsets = [0, 64], sizes = [8, 64], strides = [1, 1]} : vector<8x192xf32> to vector<8x64xf32>
      %187 = vector.extract_strided_slice %184 {offsets = [0, 128], sizes = [8, 64], strides = [1, 1]} : vector<8x192xf32> to vector<8x64xf32>
      %188 = vector.extract_strided_slice %178 {offsets = [0, 192], sizes = [8, 64], strides = [1, 1]} : vector<8x256xf32> to vector<8x64xf32>
      %189 = math.tanh %188 : vector<8x64xf32>
      %190 = arith.mulf %186, %148 : vector<8x64xf32>
      %191 = arith.mulf %185, %189 : vector<8x64xf32>
      %192 = arith.addf %190, %191 : vector<8x64xf32>
      %193 = math.tanh %192 : vector<8x64xf32>
      %194 = arith.mulf %187, %193 : vector<8x64xf32>
      %cst_58 = arith.constant dense<0.000000e+00> : vector<8x256xf32>
      %195 = tpu.matmul %194, %9, %cst_58 {dimension_numbers = #tpu.dot_dimension_numbers<[1], [0], [0], [1], [0, 0, 1, 1], [], []>} : vector<8x64xf32>, vector<64x256xf32>, vector<8x256xf32> -> vector<8x256xf32>
      %c8_i32_59 = arith.constant 8 : i32
      %196 = arith.muli %arg11, %c8_i32_59 : i32
      %c4_i32 = arith.constant 4 : i32
      %197 = arith.addi %196, %c4_i32 : i32
      %c8_i32_60 = arith.constant 8 : i32
      %198 = arith.muli %197, %c8_i32_60 : i32
      %199 = tpu.assume_multiple %198, 8 : i32
      %200 = arith.index_cast %199 : i32 to index
      %c0_61 = arith.constant 0 : index
      %201 = vector.load %arg10[%200, %c0_61] : memref<512x256xf32, #tpu.memory_space<vmem>>, vector<8x256xf32>
      %cst_62 = arith.constant dense<0.000000e+00> : vector<8x256xf32>
      %202 = tpu.matmul %175, %7, %cst_62 {dimension_numbers = #tpu.dot_dimension_numbers<[1], [0], [0], [1], [0, 0, 1, 1], [], []>} : vector<8x64xf32>, vector<64x256xf32>, vector<8x256xf32> -> vector<8x256xf32>
      %203 = arith.addf %201, %202 : vector<8x256xf32>
      %204 = vector.extract_strided_slice %203 {offsets = [0, 0], sizes = [8, 192], strides = [1, 1]} : vector<8x256xf32> to vector<8x192xf32>
      %205 = arith.negf %204 : vector<8x192xf32>
      %206 = math.exp %205 : vector<8x192xf32>
      %cst_63 = arith.constant 1.000000e+00 : f32
      %207 = vector.broadcast %cst_63 : f32 to vector<8x192xf32>
      %208 = arith.addf %207, %206 : vector<8x192xf32>
      %209 = arith.divf %207, %208 : vector<8x192xf32>
      %210 = vector.extract_strided_slice %209 {offsets = [0, 0], sizes = [8, 64], strides = [1, 1]} : vector<8x192xf32> to vector<8x64xf32>
      %211 = vector.extract_strided_slice %209 {offsets = [0, 64], sizes = [8, 64], strides = [1, 1]} : vector<8x192xf32> to vector<8x64xf32>
      %212 = vector.extract_strided_slice %209 {offsets = [0, 128], sizes = [8, 64], strides = [1, 1]} : vector<8x192xf32> to vector<8x64xf32>
      %213 = vector.extract_strided_slice %203 {offsets = [0, 192], sizes = [8, 64], strides = [1, 1]} : vector<8x256xf32> to vector<8x64xf32>
      %214 = math.tanh %213 : vector<8x64xf32>
      %215 = arith.mulf %211, %173 : vector<8x64xf32>
      %216 = arith.mulf %210, %214 : vector<8x64xf32>
      %217 = arith.addf %215, %216 : vector<8x64xf32>
      %218 = math.tanh %217 : vector<8x64xf32>
      %219 = arith.mulf %212, %218 : vector<8x64xf32>
      %cst_64 = arith.constant dense<0.000000e+00> : vector<8x256xf32>
      %220 = tpu.matmul %219, %8, %cst_64 {dimension_numbers = #tpu.dot_dimension_numbers<[1], [0], [0], [1], [0, 0, 1, 1], [], []>} : vector<8x64xf32>, vector<64x256xf32>, vector<8x256xf32> -> vector<8x256xf32>
      %221 = arith.addf %220, %195 : vector<8x256xf32>
      %222 = arith.addf %221, %10 : vector<8x256xf32>
      %223 = vector.extract_strided_slice %222 {offsets = [0, 0], sizes = [8, 192], strides = [1, 1]} : vector<8x256xf32> to vector<8x192xf32>
      %224 = arith.negf %223 : vector<8x192xf32>
      %225 = math.exp %224 : vector<8x192xf32>
      %cst_65 = arith.constant 1.000000e+00 : f32
      %226 = vector.broadcast %cst_65 : f32 to vector<8x192xf32>
      %227 = arith.addf %226, %225 : vector<8x192xf32>
      %228 = arith.divf %226, %227 : vector<8x192xf32>
      %229 = vector.extract_strided_slice %228 {offsets = [0, 0], sizes = [8, 64], strides = [1, 1]} : vector<8x192xf32> to vector<8x64xf32>
      %230 = vector.extract_strided_slice %228 {offsets = [0, 64], sizes = [8, 64], strides = [1, 1]} : vector<8x192xf32> to vector<8x64xf32>
      %231 = vector.extract_strided_slice %228 {offsets = [0, 128], sizes = [8, 64], strides = [1, 1]} : vector<8x192xf32> to vector<8x64xf32>
      %232 = vector.extract_strided_slice %222 {offsets = [0, 192], sizes = [8, 64], strides = [1, 1]} : vector<8x256xf32> to vector<8x64xf32>
      %233 = math.tanh %232 : vector<8x64xf32>
      %234 = arith.mulf %230, %192 : vector<8x64xf32>
      %235 = arith.mulf %229, %233 : vector<8x64xf32>
      %236 = arith.addf %234, %235 : vector<8x64xf32>
      %237 = math.tanh %236 : vector<8x64xf32>
      %238 = arith.mulf %231, %237 : vector<8x64xf32>
      %cst_66 = arith.constant dense<0.000000e+00> : vector<8x256xf32>
      %239 = tpu.matmul %238, %9, %cst_66 {dimension_numbers = #tpu.dot_dimension_numbers<[1], [0], [0], [1], [0, 0, 1, 1], [], []>} : vector<8x64xf32>, vector<64x256xf32>, vector<8x256xf32> -> vector<8x256xf32>
      %c8_i32_67 = arith.constant 8 : i32
      %240 = arith.muli %arg11, %c8_i32_67 : i32
      %c5_i32 = arith.constant 5 : i32
      %241 = arith.addi %240, %c5_i32 : i32
      %c8_i32_68 = arith.constant 8 : i32
      %242 = arith.muli %241, %c8_i32_68 : i32
      %243 = tpu.assume_multiple %242, 8 : i32
      %244 = arith.index_cast %243 : i32 to index
      %c0_69 = arith.constant 0 : index
      %245 = vector.load %arg10[%244, %c0_69] : memref<512x256xf32, #tpu.memory_space<vmem>>, vector<8x256xf32>
      %cst_70 = arith.constant dense<0.000000e+00> : vector<8x256xf32>
      %246 = tpu.matmul %219, %7, %cst_70 {dimension_numbers = #tpu.dot_dimension_numbers<[1], [0], [0], [1], [0, 0, 1, 1], [], []>} : vector<8x64xf32>, vector<64x256xf32>, vector<8x256xf32> -> vector<8x256xf32>
      %247 = arith.addf %245, %246 : vector<8x256xf32>
      %248 = vector.extract_strided_slice %247 {offsets = [0, 0], sizes = [8, 192], strides = [1, 1]} : vector<8x256xf32> to vector<8x192xf32>
      %249 = arith.negf %248 : vector<8x192xf32>
      %250 = math.exp %249 : vector<8x192xf32>
      %cst_71 = arith.constant 1.000000e+00 : f32
      %251 = vector.broadcast %cst_71 : f32 to vector<8x192xf32>
      %252 = arith.addf %251, %250 : vector<8x192xf32>
      %253 = arith.divf %251, %252 : vector<8x192xf32>
      %254 = vector.extract_strided_slice %253 {offsets = [0, 0], sizes = [8, 64], strides = [1, 1]} : vector<8x192xf32> to vector<8x64xf32>
      %255 = vector.extract_strided_slice %253 {offsets = [0, 64], sizes = [8, 64], strides = [1, 1]} : vector<8x192xf32> to vector<8x64xf32>
      %256 = vector.extract_strided_slice %253 {offsets = [0, 128], sizes = [8, 64], strides = [1, 1]} : vector<8x192xf32> to vector<8x64xf32>
      %257 = vector.extract_strided_slice %247 {offsets = [0, 192], sizes = [8, 64], strides = [1, 1]} : vector<8x256xf32> to vector<8x64xf32>
      %258 = math.tanh %257 : vector<8x64xf32>
      %259 = arith.mulf %255, %217 : vector<8x64xf32>
      %260 = arith.mulf %254, %258 : vector<8x64xf32>
      %261 = arith.addf %259, %260 : vector<8x64xf32>
      %262 = math.tanh %261 : vector<8x64xf32>
      %263 = arith.mulf %256, %262 : vector<8x64xf32>
      %cst_72 = arith.constant dense<0.000000e+00> : vector<8x256xf32>
      %264 = tpu.matmul %263, %8, %cst_72 {dimension_numbers = #tpu.dot_dimension_numbers<[1], [0], [0], [1], [0, 0, 1, 1], [], []>} : vector<8x64xf32>, vector<64x256xf32>, vector<8x256xf32> -> vector<8x256xf32>
      %265 = arith.addf %264, %239 : vector<8x256xf32>
      %266 = arith.addf %265, %10 : vector<8x256xf32>
      %267 = vector.extract_strided_slice %266 {offsets = [0, 0], sizes = [8, 192], strides = [1, 1]} : vector<8x256xf32> to vector<8x192xf32>
      %268 = arith.negf %267 : vector<8x192xf32>
      %269 = math.exp %268 : vector<8x192xf32>
      %cst_73 = arith.constant 1.000000e+00 : f32
      %270 = vector.broadcast %cst_73 : f32 to vector<8x192xf32>
      %271 = arith.addf %270, %269 : vector<8x192xf32>
      %272 = arith.divf %270, %271 : vector<8x192xf32>
      %273 = vector.extract_strided_slice %272 {offsets = [0, 0], sizes = [8, 64], strides = [1, 1]} : vector<8x192xf32> to vector<8x64xf32>
      %274 = vector.extract_strided_slice %272 {offsets = [0, 64], sizes = [8, 64], strides = [1, 1]} : vector<8x192xf32> to vector<8x64xf32>
      %275 = vector.extract_strided_slice %272 {offsets = [0, 128], sizes = [8, 64], strides = [1, 1]} : vector<8x192xf32> to vector<8x64xf32>
      %276 = vector.extract_strided_slice %266 {offsets = [0, 192], sizes = [8, 64], strides = [1, 1]} : vector<8x256xf32> to vector<8x64xf32>
      %277 = math.tanh %276 : vector<8x64xf32>
      %278 = arith.mulf %274, %236 : vector<8x64xf32>
      %279 = arith.mulf %273, %277 : vector<8x64xf32>
      %280 = arith.addf %278, %279 : vector<8x64xf32>
      %281 = math.tanh %280 : vector<8x64xf32>
      %282 = arith.mulf %275, %281 : vector<8x64xf32>
      %cst_74 = arith.constant dense<0.000000e+00> : vector<8x256xf32>
      %283 = tpu.matmul %282, %9, %cst_74 {dimension_numbers = #tpu.dot_dimension_numbers<[1], [0], [0], [1], [0, 0, 1, 1], [], []>} : vector<8x64xf32>, vector<64x256xf32>, vector<8x256xf32> -> vector<8x256xf32>
      %c8_i32_75 = arith.constant 8 : i32
      %284 = arith.muli %arg11, %c8_i32_75 : i32
      %c6_i32 = arith.constant 6 : i32
      %285 = arith.addi %284, %c6_i32 : i32
      %c8_i32_76 = arith.constant 8 : i32
      %286 = arith.muli %285, %c8_i32_76 : i32
      %287 = tpu.assume_multiple %286, 8 : i32
      %288 = arith.index_cast %287 : i32 to index
      %c0_77 = arith.constant 0 : index
      %289 = vector.load %arg10[%288, %c0_77] : memref<512x256xf32, #tpu.memory_space<vmem>>, vector<8x256xf32>
      %cst_78 = arith.constant dense<0.000000e+00> : vector<8x256xf32>
      %290 = tpu.matmul %263, %7, %cst_78 {dimension_numbers = #tpu.dot_dimension_numbers<[1], [0], [0], [1], [0, 0, 1, 1], [], []>} : vector<8x64xf32>, vector<64x256xf32>, vector<8x256xf32> -> vector<8x256xf32>
      %291 = arith.addf %289, %290 : vector<8x256xf32>
      %292 = vector.extract_strided_slice %291 {offsets = [0, 0], sizes = [8, 192], strides = [1, 1]} : vector<8x256xf32> to vector<8x192xf32>
      %293 = arith.negf %292 : vector<8x192xf32>
      %294 = math.exp %293 : vector<8x192xf32>
      %cst_79 = arith.constant 1.000000e+00 : f32
      %295 = vector.broadcast %cst_79 : f32 to vector<8x192xf32>
      %296 = arith.addf %295, %294 : vector<8x192xf32>
      %297 = arith.divf %295, %296 : vector<8x192xf32>
      %298 = vector.extract_strided_slice %297 {offsets = [0, 0], sizes = [8, 64], strides = [1, 1]} : vector<8x192xf32> to vector<8x64xf32>
      %299 = vector.extract_strided_slice %297 {offsets = [0, 64], sizes = [8, 64], strides = [1, 1]} : vector<8x192xf32> to vector<8x64xf32>
      %300 = vector.extract_strided_slice %297 {offsets = [0, 128], sizes = [8, 64], strides = [1, 1]} : vector<8x192xf32> to vector<8x64xf32>
      %301 = vector.extract_strided_slice %291 {offsets = [0, 192], sizes = [8, 64], strides = [1, 1]} : vector<8x256xf32> to vector<8x64xf32>
      %302 = math.tanh %301 : vector<8x64xf32>
      %303 = arith.mulf %299, %261 : vector<8x64xf32>
      %304 = arith.mulf %298, %302 : vector<8x64xf32>
      %305 = arith.addf %303, %304 : vector<8x64xf32>
      %306 = math.tanh %305 : vector<8x64xf32>
      %307 = arith.mulf %300, %306 : vector<8x64xf32>
      %cst_80 = arith.constant dense<0.000000e+00> : vector<8x256xf32>
      %308 = tpu.matmul %307, %8, %cst_80 {dimension_numbers = #tpu.dot_dimension_numbers<[1], [0], [0], [1], [0, 0, 1, 1], [], []>} : vector<8x64xf32>, vector<64x256xf32>, vector<8x256xf32> -> vector<8x256xf32>
      %309 = arith.addf %308, %283 : vector<8x256xf32>
      %310 = arith.addf %309, %10 : vector<8x256xf32>
      %311 = vector.extract_strided_slice %310 {offsets = [0, 0], sizes = [8, 192], strides = [1, 1]} : vector<8x256xf32> to vector<8x192xf32>
      %312 = arith.negf %311 : vector<8x192xf32>
      %313 = math.exp %312 : vector<8x192xf32>
      %cst_81 = arith.constant 1.000000e+00 : f32
      %314 = vector.broadcast %cst_81 : f32 to vector<8x192xf32>
      %315 = arith.addf %314, %313 : vector<8x192xf32>
      %316 = arith.divf %314, %315 : vector<8x192xf32>
      %317 = vector.extract_strided_slice %316 {offsets = [0, 0], sizes = [8, 64], strides = [1, 1]} : vector<8x192xf32> to vector<8x64xf32>
      %318 = vector.extract_strided_slice %316 {offsets = [0, 64], sizes = [8, 64], strides = [1, 1]} : vector<8x192xf32> to vector<8x64xf32>
      %319 = vector.extract_strided_slice %316 {offsets = [0, 128], sizes = [8, 64], strides = [1, 1]} : vector<8x192xf32> to vector<8x64xf32>
      %320 = vector.extract_strided_slice %310 {offsets = [0, 192], sizes = [8, 64], strides = [1, 1]} : vector<8x256xf32> to vector<8x64xf32>
      %321 = math.tanh %320 : vector<8x64xf32>
      %322 = arith.mulf %318, %280 : vector<8x64xf32>
      %323 = arith.mulf %317, %321 : vector<8x64xf32>
      %324 = arith.addf %322, %323 : vector<8x64xf32>
      %325 = math.tanh %324 : vector<8x64xf32>
      %326 = arith.mulf %319, %325 : vector<8x64xf32>
      %cst_82 = arith.constant dense<0.000000e+00> : vector<8x256xf32>
      %327 = tpu.matmul %326, %9, %cst_82 {dimension_numbers = #tpu.dot_dimension_numbers<[1], [0], [0], [1], [0, 0, 1, 1], [], []>} : vector<8x64xf32>, vector<64x256xf32>, vector<8x256xf32> -> vector<8x256xf32>
      %c8_i32_83 = arith.constant 8 : i32
      %328 = arith.muli %arg11, %c8_i32_83 : i32
      %c7_i32 = arith.constant 7 : i32
      %329 = arith.addi %328, %c7_i32 : i32
      %c8_i32_84 = arith.constant 8 : i32
      %330 = arith.muli %329, %c8_i32_84 : i32
      %331 = tpu.assume_multiple %330, 8 : i32
      %332 = arith.index_cast %331 : i32 to index
      %c0_85 = arith.constant 0 : index
      %333 = vector.load %arg10[%332, %c0_85] : memref<512x256xf32, #tpu.memory_space<vmem>>, vector<8x256xf32>
      %cst_86 = arith.constant dense<0.000000e+00> : vector<8x256xf32>
      %334 = tpu.matmul %307, %7, %cst_86 {dimension_numbers = #tpu.dot_dimension_numbers<[1], [0], [0], [1], [0, 0, 1, 1], [], []>} : vector<8x64xf32>, vector<64x256xf32>, vector<8x256xf32> -> vector<8x256xf32>
      %335 = arith.addf %333, %334 : vector<8x256xf32>
      %336 = vector.extract_strided_slice %335 {offsets = [0, 0], sizes = [8, 192], strides = [1, 1]} : vector<8x256xf32> to vector<8x192xf32>
      %337 = arith.negf %336 : vector<8x192xf32>
      %338 = math.exp %337 : vector<8x192xf32>
      %cst_87 = arith.constant 1.000000e+00 : f32
      %339 = vector.broadcast %cst_87 : f32 to vector<8x192xf32>
      %340 = arith.addf %339, %338 : vector<8x192xf32>
      %341 = arith.divf %339, %340 : vector<8x192xf32>
      %342 = vector.extract_strided_slice %341 {offsets = [0, 0], sizes = [8, 64], strides = [1, 1]} : vector<8x192xf32> to vector<8x64xf32>
      %343 = vector.extract_strided_slice %341 {offsets = [0, 64], sizes = [8, 64], strides = [1, 1]} : vector<8x192xf32> to vector<8x64xf32>
      %344 = vector.extract_strided_slice %341 {offsets = [0, 128], sizes = [8, 64], strides = [1, 1]} : vector<8x192xf32> to vector<8x64xf32>
      %345 = vector.extract_strided_slice %335 {offsets = [0, 192], sizes = [8, 64], strides = [1, 1]} : vector<8x256xf32> to vector<8x64xf32>
      %346 = math.tanh %345 : vector<8x64xf32>
      %347 = arith.mulf %343, %305 : vector<8x64xf32>
      %348 = arith.mulf %342, %346 : vector<8x64xf32>
      %349 = arith.addf %347, %348 : vector<8x64xf32>
      %350 = math.tanh %349 : vector<8x64xf32>
      %351 = arith.mulf %344, %350 : vector<8x64xf32>
      %cst_88 = arith.constant dense<0.000000e+00> : vector<8x256xf32>
      %352 = tpu.matmul %351, %8, %cst_88 {dimension_numbers = #tpu.dot_dimension_numbers<[1], [0], [0], [1], [0, 0, 1, 1], [], []>} : vector<8x64xf32>, vector<64x256xf32>, vector<8x256xf32> -> vector<8x256xf32>
      %353 = arith.addf %352, %327 : vector<8x256xf32>
      %354 = arith.addf %353, %10 : vector<8x256xf32>
      %355 = vector.extract_strided_slice %354 {offsets = [0, 0], sizes = [8, 192], strides = [1, 1]} : vector<8x256xf32> to vector<8x192xf32>
      %356 = arith.negf %355 : vector<8x192xf32>
      %357 = math.exp %356 : vector<8x192xf32>
      %cst_89 = arith.constant 1.000000e+00 : f32
      %358 = vector.broadcast %cst_89 : f32 to vector<8x192xf32>
      %359 = arith.addf %358, %357 : vector<8x192xf32>
      %360 = arith.divf %358, %359 : vector<8x192xf32>
      %361 = vector.extract_strided_slice %360 {offsets = [0, 0], sizes = [8, 64], strides = [1, 1]} : vector<8x192xf32> to vector<8x64xf32>
      %362 = vector.extract_strided_slice %360 {offsets = [0, 64], sizes = [8, 64], strides = [1, 1]} : vector<8x192xf32> to vector<8x64xf32>
      %363 = vector.extract_strided_slice %360 {offsets = [0, 128], sizes = [8, 64], strides = [1, 1]} : vector<8x192xf32> to vector<8x64xf32>
      %364 = vector.extract_strided_slice %354 {offsets = [0, 192], sizes = [8, 64], strides = [1, 1]} : vector<8x256xf32> to vector<8x64xf32>
      %365 = math.tanh %364 : vector<8x64xf32>
      %366 = arith.mulf %362, %324 : vector<8x64xf32>
      %367 = arith.mulf %361, %365 : vector<8x64xf32>
      %368 = arith.addf %366, %367 : vector<8x64xf32>
      %369 = math.tanh %368 : vector<8x64xf32>
      %370 = arith.mulf %363, %369 : vector<8x64xf32>
      %cst_90 = arith.constant dense<0.000000e+00> : vector<8x256xf32>
      %371 = tpu.matmul %370, %9, %cst_90 {dimension_numbers = #tpu.dot_dimension_numbers<[1], [0], [0], [1], [0, 0, 1, 1], [], []>} : vector<8x64xf32>, vector<64x256xf32>, vector<8x256xf32> -> vector<8x256xf32>
      scf.yield %351, %349, %370, %368, %371 : vector<8x64xf32>, vector<8x64xf32>, vector<8x64xf32>, vector<8x64xf32>, vector<8x256xf32>
    }
    %c8_i32_17 = arith.constant 8 : i32
    %c0_18 = arith.constant 0 : index
    %c0_19 = arith.constant 0 : index
    %15 = vector.load %arg7[%c0_18, %c0_19] : memref<64x128xf32, #tpu.memory_space<vmem>>, vector<64x128xf32>
    %cst_20 = arith.constant dense<0.000000e+00> : vector<8x128xf32>
    %16 = tpu.matmul %14#2, %15, %cst_20 {dimension_numbers = #tpu.dot_dimension_numbers<[1], [0], [0], [1], [0, 0, 1, 1], [], []>} : vector<8x64xf32>, vector<64x128xf32>, vector<8x128xf32> -> vector<8x128xf32>
    %c0_21 = arith.constant 0 : index
    %c0_22 = arith.constant 0 : index
    %17 = vector.load %arg8[%c0_21, %c0_22] : memref<8x128xf32, #tpu.memory_space<vmem>>, vector<8x128xf32>
    %18 = arith.addf %16, %17 : vector<8x128xf32>
    %c0_23 = arith.constant 0 : index
    %c0_24 = arith.constant 0 : index
    %19 = vector.load %arg9[%c0_23, %c0_24] : memref<8x128xf32, #tpu.memory_space<vmem>>, vector<8x128xf32>
    tpu.vector_store %arg9[%c0_23, %c0_24], %18 {strides = array<i32>} : memref<8x128xf32, #tpu.memory_space<vmem>>, vector<8x128xf32>,
    return
  }
}

</mosaic_0001>

<llo_original>
// kernel: tpu_custom_call.1
$region0: #{tpu_custom_call.1}
  #allocation0 [shape = 'u32[]', space=smem, size = 0x4, offset = 0x4, fixed_abs, tag = 'smem constant byte address 0x4 - core index']
  #allocation1 [shape = 'u32[144,128]{1,0:T(1,128)}', space=vmem, size = 0x12000, scoped, tag = 'internal scratch']
  #allocation2 [shape = 'f32[512,256]{1,0:T(8,128)}', space=vmem, size = 0x80000, scoped, tag = 'scratch operand']
  %s0 = inlined_call_operand.vmem [shape: f32[512,2], index: 0, kind: input, shape index: {}]
  %s1 = inlined_call_operand.vmem [shape: f32[2,256], index: 1, kind: input, shape index: {}]
  %s2 = inlined_call_operand.vmem [shape: f32[64,256], index: 2, kind: input, shape index: {}]
  %s3 = inlined_call_operand.vmem [shape: f32[1,256], index: 3, kind: input, shape index: {}]
  %s4 = inlined_call_operand.vmem [shape: f32[64,256], index: 4, kind: input, shape index: {}]
  %s5 = inlined_call_operand.vmem [shape: f32[64,256], index: 5, kind: input, shape index: {}]
  %s6 = inlined_call_operand.vmem [shape: f32[8,256], index: 6, kind: input, shape index: {}]
  %s7 = inlined_call_operand.vmem [shape: f32[64,128], index: 7, kind: input, shape index: {}]
  %s8 = inlined_call_operand.vmem [shape: f32[8,128], index: 8, kind: input, shape index: {}]
  %s9 = inlined_call_operand.hbm [shape: f32[8,128], index: 9, kind: output, shape index: {}]
  %s10 = sld [smem:[#allocation0]]
  $region53: #{tpu_custom_call.1} parent=0
    _
  %s12 = ssub.s32 1, %s10
  %s13 = scalar_select 0, %s12, %s10
  $region1: #{tpu_custom_call.1} parent=0
    #allocation3 [shape = 'u8[4096]{0}', space=vmem, size = 0x1000, scoped, tag = 'output window, operand 0, single buffered']
    #allocation4 [shape = 's32[1]{0}', space=sflag, size = 0x4, scoped, tag = 'scoped memory for tpu_custom_call.1']
    %14 = vsyncpa [#allocation4], 0
    // Predicated region
    $region2: #{tpu_custom_call.1} parent=1 // pred_check
      _
    $region3: #{tpu_custom_call.1} parent=1 // pred_check_branch
      %16 = sbr.rel (0) target = $region5
    $region4: #{tpu_custom_call.1} parent=1 // pred_region
      _
    $region5: #{tpu_custom_call.1} parent=1 // pred_fallthru
      _
    // Predicated region
    $region6: #{tpu_custom_call.1} parent=1 // pred_check
      _
    $region7: #{tpu_custom_call.1} parent=1 // pred_check_branch
      %18 = sbr.rel (0) target = $region9
    $region8: #{tpu_custom_call.1} parent=1 // pred_region
      _
    $region9: #{tpu_custom_call.1} parent=1 // pred_fallthru
      _
    // Predicated region
    $region10: #{tpu_custom_call.1} parent=1 // pred_check
      _
    $region11: #{tpu_custom_call.1} parent=1 // pred_check_branch
      %20 = sbr.rel (0) target = $region13
    $region12: #{tpu_custom_call.1} parent=1 // pred_region
      _
    $region13: #{tpu_custom_call.1} parent=1 // pred_fallthru
      _
    // Predicated region
    $region14: #{tpu_custom_call.1} parent=1 // pred_check
      _
    $region15: #{tpu_custom_call.1} parent=1 // pred_check_branch
      %22 = sbr.rel (0) target = $region17
    $region16: #{tpu_custom_call.1} parent=1 // pred_region
      _
    $region17: #{tpu_custom_call.1} parent=1 // pred_fallthru
      _
    // Predicated region
    $region18: #{tpu_custom_call.1} parent=1 // pred_check
      _
    $region19: #{tpu_custom_call.1} parent=1 // pred_check_branch
      %24 = sbr.rel (0) target = $region21
    $region20: #{tpu_custom_call.1} parent=1 // pred_region
      _
    $region21: #{tpu_custom_call.1} parent=1 // pred_fallthru
      _
    // Predicated region
    $region22: #{tpu_custom_call.1} parent=1 // pred_check
      _
    $region23: #{tpu_custom_call.1} parent=1 // pred_check_branch
      %26 = sbr.rel (0) target = $region25
    $region24: #{tpu_custom_call.1} parent=1 // pred_region
      _
    $region25: #{tpu_custom_call.1} parent=1 // pred_fallthru
      _
    // Predicated region
    $region26: #{tpu_custom_call.1} parent=1 // pred_check
      _
    $region27: #{tpu_custom_call.1} parent=1 // pred_check_branch
      %28 = sbr.rel (0) target = $region29
    $region28: #{tpu_custom_call.1} parent=1 // pred_region
      _
    $region29: #{tpu_custom_call.1} parent=1 // pred_fallthru
      _
    // Predicated region
    $region30: #{tpu_custom_call.1} parent=1 // pred_check
      _
    $region31: #{tpu_custom_call.1} parent=1 // pred_check_branch
      %30 = sbr.rel (0) target = $region33
    $region32: #{tpu_custom_call.1} parent=1 // pred_region
      _
    $region33: #{tpu_custom_call.1} parent=1 // pred_fallthru
      _
    // Predicated region
    $region34: #{tpu_custom_call.1} parent=1 // pred_check
      _
    $region35: #{tpu_custom_call.1} parent=1 // pred_check_branch
      %32 = sbr.rel (0) target = $region37
    $region36: #{tpu_custom_call.1} parent=1 // pred_region
      _
    $region37: #{tpu_custom_call.1} parent=1 // pred_fallthru
      _
    %v33 = vld [vmem:[%s0] sm:$0xff]
    %v34 = vld [vmem:[%s0 + $0x8] sm:$0xff]
    %v35 = vld [vmem:[%s0 + $0x10] sm:$0xff]
    %v36 = vld [vmem:[%s0 + $0x18] sm:$0xff]
    %v37 = vld [vmem:[%s0 + $0x20] sm:$0xff]
    %v38 = vld [vmem:[%s0 + $0x28] sm:$0xff]
    %v39 = vld [vmem:[%s0 + $0x30] sm:$0xff]
    %v40 = vld [vmem:[%s0 + $0x38] sm:$0xff]
    %v41 = vld [vmem:[%s0 + $0x40] sm:$0xff]
    %v42 = vld [vmem:[%s0 + $0x48] sm:$0xff]
    %v43 = vld [vmem:[%s0 + $0x50] sm:$0xff]
    %v44 = vld [vmem:[%s0 + $0x58] sm:$0xff]
    %v45 = vld [vmem:[%s0 + $0x60] sm:$0xff]
    %v46 = vld [vmem:[%s0 + $0x68] sm:$0xff]
    %v47 = vld [vmem:[%s0 + $0x70] sm:$0xff]
    %v48 = vld [vmem:[%s0 + $0x78] sm:$0xff]
    %v49 = vld [vmem:[%s0 + $0x80] sm:$0xff]
    %v50 = vld [vmem:[%s0 + $0x88] sm:$0xff]
    %v51 = vld [vmem:[%s0 + $0x90] sm:$0xff]
    %v52 = vld [vmem:[%s0 + $0x98] sm:$0xff]
    %v53 = vld [vmem:[%s0 + $0xa0] sm:$0xff]
    %v54 = vld [vmem:[%s0 + $0xa8] sm:$0xff]
    %v55 = vld [vmem:[%s0 + $0xb0] sm:$0xff]
    %v56 = vld [vmem:[%s0 + $0xb8] sm:$0xff]
    %v57 = vld [vmem:[%s0 + $0xc0] sm:$0xff]
    %v58 = vld [vmem:[%s0 + $0xc8] sm:$0xff]
    %v59 = vld [vmem:[%s0 + $0xd0] sm:$0xff]
    %v60 = vld [vmem:[%s0 + $0xd8] sm:$0xff]
    %v61 = vld [vmem:[%s0 + $0xe0] sm:$0xff]
    %v62 = vld [vmem:[%s0 + $0xe8] sm:$0xff]
    %v63 = vld [vmem:[%s0 + $0xf0] sm:$0xff]
    %v64 = vld [vmem:[%s0 + $0xf8] sm:$0xff]
    %v65 = vld [vmem:[%s0 + $0x100] sm:$0xff]
    %v66 = vld [vmem:[%s0 + $0x108] sm:$0xff]
    %v67 = vld [vmem:[%s0 + $0x110] sm:$0xff]
    %v68 = vld [vmem:[%s0 + $0x118] sm:$0xff]
    %v69 = vld [vmem:[%s0 + $0x120] sm:$0xff]
    %v70 = vld [vmem:[%s0 + $0x128] sm:$0xff]
    %v71 = vld [vmem:[%s0 + $0x130] sm:$0xff]
    %v72 = vld [vmem:[%s0 + $0x138] sm:$0xff]
    %v73 = vld [vmem:[%s0 + $0x140] sm:$0xff]
    %v74 = vld [vmem:[%s0 + $0x148] sm:$0xff]
    %v75 = vld [vmem:[%s0 + $0x150] sm:$0xff]
    %v76 = vld [vmem:[%s0 + $0x158] sm:$0xff]
    %v77 = vld [vmem:[%s0 + $0x160] sm:$0xff]
    %v78 = vld [vmem:[%s0 + $0x168] sm:$0xff]
    %v79 = vld [vmem:[%s0 + $0x170] sm:$0xff]
    %v80 = vld [vmem:[%s0 + $0x178] sm:$0xff]
    %v81 = vld [vmem:[%s0 + $0x180] sm:$0xff]
    %v82 = vld [vmem:[%s0 + $0x188] sm:$0xff]
    %v83 = vld [vmem:[%s0 + $0x190] sm:$0xff]
    %v84 = vld [vmem:[%s0 + $0x198] sm:$0xff]
    %v85 = vld [vmem:[%s0 + $0x1a0] sm:$0xff]
    %v86 = vld [vmem:[%s0 + $0x1a8] sm:$0xff]
    %v87 = vld [vmem:[%s0 + $0x1b0] sm:$0xff]
    %v88 = vld [vmem:[%s0 + $0x1b8] sm:$0xff]
    %v89 = vld [vmem:[%s0 + $0x1c0] sm:$0xff]
    %v90 = vld [vmem:[%s0 + $0x1c8] sm:$0xff]
    %v91 = vld [vmem:[%s0 + $0x1d0] sm:$0xff]
    %v92 = vld [vmem:[%s0 + $0x1d8] sm:$0xff]
    %v93 = vld [vmem:[%s0 + $0x1e0] sm:$0xff]
    %v94 = vld [vmem:[%s0 + $0x1e8] sm:$0xff]
    %v95 = vld [vmem:[%s0 + $0x1f0] sm:$0xff]
    %v96 = vld [vmem:[%s0 + $0x1f8] sm:$0xff]
    %v97 = vld [vmem:[%s1] sm:$0xf]
    %v98 = vld [vmem:[%s3] sm:$0x3]
    %v100 = vlaneseq
    %v101 = vshrl.u32 %v100, 7
    %v102 = vsub.s32 0, %v101
    %v103 = vrot.slane %v98, %v102
    %v104 = vlaneseq
    %v105 = vshrl.u32 %v104, 7
    %v106 = vsub.s32 1, %v105
    %v107 = vrot.slane %v98, %v106
    %v112 = vunpack.c.l.s4 1983009808
    %v113 = vunpack.c.0.s8 %v112
    %v114 = vlaneseq
    %v115 = vshrl.u32 %v114, 7
    %v116 = vsub.s32 %v113, %v115
    %v117 = vrot.slane %v97, %v116
    %v118 = vcombine.high %v117, %v117
    %vm119 = vcmask 15360
    %v121 = vsel %vm119, %v33, 0
    %v124 = vsel %vm119, %v34, 0
    %v127 = vsel %vm119, %v35, 0
    %v130 = vsel %vm119, %v36, 0
    %v133 = vsel %vm119, %v37, 0
    %v136 = vsel %vm119, %v38, 0
    %v139 = vsel %vm119, %v39, 0
    %v142 = vsel %vm119, %v40, 0
    %v145 = vsel %vm119, %v41, 0
    %v148 = vsel %vm119, %v42, 0
    %v151 = vsel %vm119, %v43, 0
    %v154 = vsel %vm119, %v44, 0
    %v157 = vsel %vm119, %v45, 0
    %v160 = vsel %vm119, %v46, 0
    %v163 = vsel %vm119, %v47, 0
    %v166 = vsel %vm119, %v48, 0
    %v169 = vsel %vm119, %v49, 0
    %v172 = vsel %vm119, %v50, 0
    %v175 = vsel %vm119, %v51, 0
    %v178 = vsel %vm119, %v52, 0
    %v181 = vsel %vm119, %v53, 0
    %v184 = vsel %vm119, %v54, 0
    %v187 = vsel %vm119, %v55, 0
    %v190 = vsel %vm119, %v56, 0
    %v193 = vsel %vm119, %v57, 0
    %v196 = vsel %vm119, %v58, 0
    %v199 = vsel %vm119, %v59, 0
    %v202 = vsel %vm119, %v60, 0
    %v205 = vsel %vm119, %v61, 0
    %v208 = vsel %vm119, %v62, 0
    %v211 = vsel %vm119, %v63, 0
    %v214 = vsel %vm119, %v64, 0
    %v217 = vsel %vm119, %v65, 0
    %v220 = vsel %vm119, %v66, 0
    %v223 = vsel %vm119, %v67, 0
    %v226 = vsel %vm119, %v68, 0
    %v229 = vsel %vm119, %v69, 0
    %v232 = vsel %vm119, %v70, 0
    %v235 = vsel %vm119, %v71, 0
    %v238 = vsel %vm119, %v72, 0
    %v241 = vsel %vm119, %v73, 0
    %v244 = vsel %vm119, %v74, 0
    %v247 = vsel %vm119, %v75, 0
    %v250 = vsel %vm119, %v76, 0
    %v253 = vsel %vm119, %v77, 0
    %v256 = vsel %vm119, %v78, 0
    %v259 = vsel %vm119, %v79, 0
    %v262 = vsel %vm119, %v80, 0
    %v265 = vsel %vm119, %v81, 0
    %v268 = vsel %vm119, %v82, 0
    %v271 = vsel %vm119, %v83, 0
    %v274 = vsel %vm119, %v84, 0
    %v277 = vsel %vm119, %v85, 0
    %v280 = vsel %vm119, %v86, 0
    %v283 = vsel %vm119, %v87, 0
    %v286 = vsel %vm119, %v88, 0
    %v289 = vsel %vm119, %v89, 0
    %v292 = vsel %vm119, %v90, 0
    %v295 = vsel %vm119, %v91, 0
    %v298 = vsel %vm119, %v92, 0
    %v301 = vsel %vm119, %v93, 0
    %v304 = vsel %vm119, %v94, 0
    %v307 = vsel %vm119, %v95, 0
    %v310 = vsel %vm119, %v96, 0
    %vm312 = vcmask 1041408
    %v313 = vsel %vm312, %v117, 0
    %v315 = vsel %vm312, %v118, 0
    %317 = vmatprep.subr.mxu0 0.0
    %318 = vmatpush1.msra.mxu0 0.0
    %319 = vmatprep.subr.mxu0 0.0
    %320 = vmatpush1.msra.mxu0 0.0
    %321 = vmatprep.subr.mxu0 0.0
    %322 = vmatpush1.msra.mxu0 0.0
    %323 = vmatprep.subr.mxu0 0.0
    %324 = vmatpush1.msra.mxu0 0.0
    %325 = vmatprep.subr.mxu0 0.0
    %326 = vmatpush1.msra.mxu0 0.0
    %327 = vmatprep.subr.mxu0 0.0
    %328 = vmatpush1.msra.mxu0 0.0
    %329 = vmatprep.subr.mxu0 0.0
    %330 = vmatpush1.msra.mxu0 0.0
    %331 = vmatprep.subr.mxu0 0.0
    %332 = vmatpush1.msra.mxu0 0.0
    %333 = vmatprep.subr.mxu0 0.0
    %334 = vmatpush1.msra.mxu0 0.0
    %335 = vmatprep.subr.mxu0 0.0
    %336 = vmatpush1.msra.mxu0 0.0
    %337 = vmatprep.subr.mxu0 0.0
    %338 = vmatpush1.msra.mxu0 0.0
    %339 = vmatprep.subr.mxu0 0.0
    %340 = vmatpush1.msra.mxu0 0.0
    %341 = vmatprep.subr.mxu0 0.0
    %342 = vmatpush1.msra.mxu0 0.0
    %343 = vmatprep.subr.mxu0 0.0
    %344 = vmatpush1.msra.mxu0 0.0
    %345 = vmatprep.subr.mxu0 0.0
    %346 = vmatpush1.msra.mxu0 0.0
    %347 = vmatprep.subr.mxu0 %v315
    %348 = vmatpush1.msra.mxu0 %v313
    %349 = vmatprep.subr.mxu0 0.0
    %350 = vmatpush2.msra.mxu0 0.0
    %351 = vmatprep.subr.mxu0 0.0
    %352 = vmatpush2.msra.mxu0 0.0
    %353 = vmatprep.subr.mxu0 0.0
    %354 = vmatpush2.msra.mxu0 0.0
    %355 = vmatprep.subr.mxu0 0.0
    %356 = vmatpush2.msra.mxu0 0.0
    %357 = vmatprep.subr.mxu0 0.0
    %358 = vmatpush2.msra.mxu0 0.0
    %359 = vmatprep.subr.mxu0 0.0
    %360 = vmatpush2.msra.mxu0 0.0
    %361 = vmatprep.subr.mxu0 0.0
    %362 = vmatpush2.msra.mxu0 0.0
    %363 = vmatprep.subr.mxu0 0.0
    %364 = vmatpush2.msra.mxu0 0.0
    %365 = vmatprep.subr.mxu0 0.0
    %366 = vmatpush2.msra.mxu0 0.0
    %367 = vmatprep.subr.mxu0 0.0
    %368 = vmatpush2.msra.mxu0 0.0
    %369 = vmatprep.subr.mxu0 0.0
    %370 = vmatpush2.msra.mxu0 0.0
    %371 = vmatprep.subr.mxu0 0.0
    %372 = vmatpush2.msra.mxu0 0.0
    %373 = vmatprep.subr.mxu0 0.0
    %374 = vmatpush2.msra.mxu0 0.0
    %375 = vmatprep.subr.mxu0 0.0
    %376 = vmatpush2.msra.mxu0 0.0
    %377 = vmatprep.subr.mxu0 0.0
    %378 = vmatpush2.msra.mxu0 0.0
    %379 = vmatprep.subr.mxu0 0.0
    %380 = vmatpush2.msra.mxu0 0.0
    %381 = vmatprep.mubr.f32.mxu0 0.0
    %382 = vmatmul.mubr.f32.gmra.mxu0 %v121
    %v383 = vpop.f32.mrf.mxu0
    %v384 = vadd.f32 %v103, %v383
    %v385 = vpop.f32.mrf.mxu0
    %v386 = vadd.f32 %v107, %v385
    %387 = vmatprep.mubr.f32.mxu0 0.0
    %388 = vmatmul.mubr.f32.gmra.mxu0 %v124
    %v389 = vpop.f32.mrf.mxu0
    %v390 = vadd.f32 %v103, %v389
    %v391 = vpop.f32.mrf.mxu0
    %v392 = vadd.f32 %v107, %v391
    %393 = vmatprep.mubr.f32.mxu0 0.0
    %394 = vmatmul.mubr.f32.gmra.mxu0 %v127
    %v395 = vpop.f32.mrf.mxu0
    %v396 = vadd.f32 %v103, %v395
    %v397 = vpop.f32.mrf.mxu0
    %v398 = vadd.f32 %v107, %v397
    %399 = vmatprep.mubr.f32.mxu0 0.0
    %400 = vmatmul.mubr.f32.gmra.mxu0 %v130
    %v401 = vpop.f32.mrf.mxu0
    %v402 = vadd.f32 %v103, %v401
    %v403 = vpop.f32.mrf.mxu0
    %v404 = vadd.f32 %v107, %v403
    %405 = vmatprep.mubr.f32.mxu0 0.0
    %406 = vmatmul.mubr.f32.gmra.mxu0 %v133
    %v407 = vpop.f32.mrf.mxu0
    %v408 = vadd.f32 %v103, %v407
    %v409 = vpop.f32.mrf.mxu0
    %v410 = vadd.f32 %v107, %v409
    %411 = vmatprep.mubr.f32.mxu0 0.0
    %412 = vmatmul.mubr.f32.gmra.mxu0 %v136
    %v413 = vpop.f32.mrf.mxu0
    %v414 = vadd.f32 %v103, %v413
    %v415 = vpop.f32.mrf.mxu0
    %v416 = vadd.f32 %v107, %v415
    %417 = vmatprep.mubr.f32.mxu0 0.0
    %418 = vmatmul.mubr.f32.gmra.mxu0 %v139
    %v419 = vpop.f32.mrf.mxu0
    %v420 = vadd.f32 %v103, %v419
    %v421 = vpop.f32.mrf.mxu0
    %v422 = vadd.f32 %v107, %v421
    %423 = vmatprep.mubr.f32.mxu0 0.0
    %424 = vmatmul.mubr.f32.gmra.mxu0 %v142
    %v425 = vpop.f32.mrf.mxu0
    %v426 = vadd.f32 %v103, %v425
    %v427 = vpop.f32.mrf.mxu0
    %v428 = vadd.f32 %v107, %v427
    %429 = vmatprep.mubr.f32.mxu0 0.0
    %430 = vmatmul.mubr.f32.gmra.mxu0 %v145
    %v431 = vpop.f32.mrf.mxu0
    %v432 = vadd.f32 %v103, %v431
    %v433 = vpop.f32.mrf.mxu0
    %v434 = vadd.f32 %v107, %v433
    %435 = vmatprep.mubr.f32.mxu0 0.0
    %436 = vmatmul.mubr.f32.gmra.mxu0 %v148
    %v437 = vpop.f32.mrf.mxu0
    %v438 = vadd.f32 %v103, %v437
    %v439 = vpop.f32.mrf.mxu0
    %v440 = vadd.f32 %v107, %v439
    %441 = vmatprep.mubr.f32.mxu0 0.0
    %442 = vmatmul.mubr.f32.gmra.mxu0 %v151
    %v443 = vpop.f32.mrf.mxu0
    %v444 = vadd.f32 %v103, %v443
    %v445 = vpop.f32.mrf.mxu0
    %v446 = vadd.f32 %v107, %v445
    %447 = vmatprep.mubr.f32.mxu0 0.0
    %448 = vmatmul.mubr.f32.gmra.mxu0 %v154
    %v449 = vpop.f32.mrf.mxu0
    %v450 = vadd.f32 %v103, %v449
    %v451 = vpop.f32.mrf.mxu0
    %v452 = vadd.f32 %v107, %v451
    %453 = vmatprep.mubr.f32.mxu0 0.0
    %454 = vmatmul.mubr.f32.gmra.mxu0 %v157
    %v455 = vpop.f32.mrf.mxu0
    %v456 = vadd.f32 %v103, %v455
    %v457 = vpop.f32.mrf.mxu0
    %v458 = vadd.f32 %v107, %v457
    %459 = vmatprep.mubr.f32.mxu0 0.0
    %460 = vmatmul.mubr.f32.gmra.mxu0 %v160
    %v461 = vpop.f32.mrf.mxu0
    %v462 = vadd.f32 %v103, %v461
    %v463 = vpop.f32.mrf.mxu0
    %v464 = vadd.f32 %v107, %v463
    %465 = vmatprep.mubr.f32.mxu0 0.0
    %466 = vmatmul.mubr.f32.gmra.mxu0 %v163
    %v467 = vpop.f32.mrf.mxu0
    %v468 = vadd.f32 %v103, %v467
    %v469 = vpop.f32.mrf.mxu0
    %v470 = vadd.f32 %v107, %v469
    %471 = vmatprep.mubr.f32.mxu0 0.0
    %472 = vmatmul.mubr.f32.gmra.mxu0 %v166
    %v473 = vpop.f32.mrf.mxu0
    %v474 = vadd.f32 %v103, %v473
    %v475 = vpop.f32.mrf.mxu0
    %v476 = vadd.f32 %v107, %v475
    %477 = vmatprep.mubr.f32.mxu0 0.0
    %478 = vmatmul.mubr.f32.gmra.mxu0 %v169
    %v479 = vpop.f32.mrf.mxu0
    %v480 = vadd.f32 %v103, %v479
    %v481 = vpop.f32.mrf.mxu0
    %v482 = vadd.f32 %v107, %v481
    %483 = vmatprep.mubr.f32.mxu0 0.0
    %484 = vmatmul.mubr.f32.gmra.mxu0 %v172
    %v485 = vpop.f32.mrf.mxu0
    %v486 = vadd.f32 %v103, %v485
    %v487 = vpop.f32.mrf.mxu0
    %v488 = vadd.f32 %v107, %v487
    %489 = vmatprep.mubr.f32.mxu0 0.0
    %490 = vmatmul.mubr.f32.gmra.mxu0 %v175
    %v491 = vpop.f32.mrf.mxu0
    %v492 = vadd.f32 %v103, %v491
    %v493 = vpop.f32.mrf.mxu0
    %v494 = vadd.f32 %v107, %v493
    %495 = vmatprep.mubr.f32.mxu0 0.0
    %496 = vmatmul.mubr.f32.gmra.mxu0 %v178
    %v497 = vpop.f32.mrf.mxu0
    %v498 = vadd.f32 %v103, %v497
    %v499 = vpop.f32.mrf.mxu0
    %v500 = vadd.f32 %v107, %v499
    %501 = vmatprep.mubr.f32.mxu0 0.0
    %502 = vmatmul.mubr.f32.gmra.mxu0 %v181
    %v503 = vpop.f32.mrf.mxu0
    %v504 = vadd.f32 %v103, %v503
    %v505 = vpop.f32.mrf.mxu0
    %v506 = vadd.f32 %v107, %v505
    %507 = vmatprep.mubr.f32.mxu0 0.0
    %508 = vmatmul.mubr.f32.gmra.mxu0 %v184
    %v509 = vpop.f32.mrf.mxu0
    %v510 = vadd.f32 %v103, %v509
    %v511 = vpop.f32.mrf.mxu0
    %v512 = vadd.f32 %v107, %v511
    %513 = vmatprep.mubr.f32.mxu0 0.0
    %514 = vmatmul.mubr.f32.gmra.mxu0 %v187
    %v515 = vpop.f32.mrf.mxu0
    %v516 = vadd.f32 %v103, %v515
    %v517 = vpop.f32.mrf.mxu0
    %v518 = vadd.f32 %v107, %v517
    %519 = vmatprep.mubr.f32.mxu0 0.0
    %520 = vmatmul.mubr.f32.gmra.mxu0 %v190
    %v521 = vpop.f32.mrf.mxu0
    %v522 = vadd.f32 %v103, %v521
    %v523 = vpop.f32.mrf.mxu0
    %v524 = vadd.f32 %v107, %v523
    %525 = vmatprep.mubr.f32.mxu0 0.0
    %526 = vmatmul.mubr.f32.gmra.mxu0 %v193
    %v527 = vpop.f32.mrf.mxu0
    %v528 = vadd.f32 %v103, %v527
    %v529 = vpop.f32.mrf.mxu0
    %v530 = vadd.f32 %v107, %v529
    %531 = vmatprep.mubr.f32.mxu0 0.0
    %532 = vmatmul.mubr.f32.gmra.mxu0 %v196
    %v533 = vpop.f32.mrf.mxu0
    %v534 = vadd.f32 %v103, %v533
    %v535 = vpop.f32.mrf.mxu0
    %v536 = vadd.f32 %v107, %v535
    %537 = vmatprep.mubr.f32.mxu0 0.0
    %538 = vmatmul.mubr.f32.gmra.mxu0 %v199
    %v539 = vpop.f32.mrf.mxu0
    %v540 = vadd.f32 %v103, %v539
    %v541 = vpop.f32.mrf.mxu0
    %v542 = vadd.f32 %v107, %v541
    %543 = vmatprep.mubr.f32.mxu0 0.0
    %544 = vmatmul.mubr.f32.gmra.mxu0 %v202
    %v545 = vpop.f32.mrf.mxu0
    %v546 = vadd.f32 %v103, %v545
    %v547 = vpop.f32.mrf.mxu0
    %v548 = vadd.f32 %v107, %v547
    %549 = vmatprep.mubr.f32.mxu0 0.0
    %550 = vmatmul.mubr.f32.gmra.mxu0 %v205
    %v551 = vpop.f32.mrf.mxu0
    %v552 = vadd.f32 %v103, %v551
    %v553 = vpop.f32.mrf.mxu0
    %v554 = vadd.f32 %v107, %v553
    %555 = vmatprep.mubr.f32.mxu0 0.0
    %556 = vmatmul.mubr.f32.gmra.mxu0 %v208
    %v557 = vpop.f32.mrf.mxu0
    %v558 = vadd.f32 %v103, %v557
    %v559 = vpop.f32.mrf.mxu0
    %v560 = vadd.f32 %v107, %v559
    %561 = vmatprep.mubr.f32.mxu0 0.0
    %562 = vmatmul.mubr.f32.gmra.mxu0 %v211
    %v563 = vpop.f32.mrf.mxu0
    %v564 = vadd.f32 %v103, %v563
    %v565 = vpop.f32.mrf.mxu0
    %v566 = vadd.f32 %v107, %v565
    %567 = vmatprep.mubr.f32.mxu0 0.0
    %568 = vmatmul.mubr.f32.gmra.mxu0 %v214
    %v569 = vpop.f32.mrf.mxu0
    %v570 = vadd.f32 %v103, %v569
    %v571 = vpop.f32.mrf.mxu0
    %v572 = vadd.f32 %v107, %v571
    %573 = vmatprep.mubr.f32.mxu0 0.0
    %574 = vmatmul.mubr.f32.gmra.mxu0 %v217
    %v575 = vpop.f32.mrf.mxu0
    %v576 = vadd.f32 %v103, %v575
    %v577 = vpop.f32.mrf.mxu0
    %v578 = vadd.f32 %v107, %v577
    %579 = vmatprep.mubr.f32.mxu0 0.0
    %580 = vmatmul.mubr.f32.gmra.mxu0 %v220
    %v581 = vpop.f32.mrf.mxu0
    %v582 = vadd.f32 %v103, %v581
    %v583 = vpop.f32.mrf.mxu0
    %v584 = vadd.f32 %v107, %v583
    %585 = vmatprep.mubr.f32.mxu0 0.0
    %586 = vmatmul.mubr.f32.gmra.mxu0 %v223
    %v587 = vpop.f32.mrf.mxu0
    %v588 = vadd.f32 %v103, %v587
    %v589 = vpop.f32.mrf.mxu0
    %v590 = vadd.f32 %v107, %v589
    %591 = vmatprep.mubr.f32.mxu0 0.0
    %592 = vmatmul.mubr.f32.gmra.mxu0 %v226
    %v593 = vpop.f32.mrf.mxu0
    %v594 = vadd.f32 %v103, %v593
    %v595 = vpop.f32.mrf.mxu0
    %v596 = vadd.f32 %v107, %v595
    %597 = vmatprep.mubr.f32.mxu0 0.0
    %598 = vmatmul.mubr.f32.gmra.mxu0 %v229
    %v599 = vpop.f32.mrf.mxu0
    %v600 = vadd.f32 %v103, %v599
    %v601 = vpop.f32.mrf.mxu0
    %v602 = vadd.f32 %v107, %v601
    %603 = vmatprep.mubr.f32.mxu0 0.0
    %604 = vmatmul.mubr.f32.gmra.mxu0 %v232
    %v605 = vpop.f32.mrf.mxu0
    %v606 = vadd.f32 %v103, %v605
    %v607 = vpop.f32.mrf.mxu0
    %v608 = vadd.f32 %v107, %v607
    %609 = vmatprep.mubr.f32.mxu0 0.0
    %610 = vmatmul.mubr.f32.gmra.mxu0 %v235
    %v611 = vpop.f32.mrf.mxu0
    %v612 = vadd.f32 %v103, %v611
    %v613 = vpop.f32.mrf.mxu0
    %v614 = vadd.f32 %v107, %v613
    %615 = vmatprep.mubr.f32.mxu0 0.0
    %616 = vmatmul.mubr.f32.gmra.mxu0 %v238
    %v617 = vpop.f32.mrf.mxu0
    %v618 = vadd.f32 %v103, %v617
    %v619 = vpop.f32.mrf.mxu0
    %v620 = vadd.f32 %v107, %v619
    %621 = vmatprep.mubr.f32.mxu0 0.0
    %622 = vmatmul.mubr.f32.gmra.mxu0 %v241
    %v623 = vpop.f32.mrf.mxu0
    %v624 = vadd.f32 %v103, %v623
    %v625 = vpop.f32.mrf.mxu0
    %v626 = vadd.f32 %v107, %v625
    %627 = vmatprep.mubr.f32.mxu0 0.0
    %628 = vmatmul.mubr.f32.gmra.mxu0 %v244
    %v629 = vpop.f32.mrf.mxu0
    %v630 = vadd.f32 %v103, %v629
    %v631 = vpop.f32.mrf.mxu0
    %v632 = vadd.f32 %v107, %v631
    %633 = vmatprep.mubr.f32.mxu0 0.0
    %634 = vmatmul.mubr.f32.gmra.mxu0 %v247
    %v635 = vpop.f32.mrf.mxu0
    %v636 = vadd.f32 %v103, %v635
    %v637 = vpop.f32.mrf.mxu0
    %v638 = vadd.f32 %v107, %v637
    %639 = vmatprep.mubr.f32.mxu0 0.0
    %640 = vmatmul.mubr.f32.gmra.mxu0 %v250
    %v641 = vpop.f32.mrf.mxu0
    %v642 = vadd.f32 %v103, %v641
    %v643 = vpop.f32.mrf.mxu0
    %v644 = vadd.f32 %v107, %v643
    %645 = vmatprep.mubr.f32.mxu0 0.0
    %646 = vmatmul.mubr.f32.gmra.mxu0 %v253
    %v647 = vpop.f32.mrf.mxu0
    %v648 = vadd.f32 %v103, %v647
    %v649 = vpop.f32.mrf.mxu0
    %v650 = vadd.f32 %v107, %v649
    %651 = vmatprep.mubr.f32.mxu0 0.0
    %652 = vmatmul.mubr.f32.gmra.mxu0 %v256
    %v653 = vpop.f32.mrf.mxu0
    %v654 = vadd.f32 %v103, %v653
    %v655 = vpop.f32.mrf.mxu0
    %v656 = vadd.f32 %v107, %v655
    %657 = vmatprep.mubr.f32.mxu0 0.0
    %658 = vmatmul.mubr.f32.gmra.mxu0 %v259
    %v659 = vpop.f32.mrf.mxu0
    %v660 = vadd.f32 %v103, %v659
    %v661 = vpop.f32.mrf.mxu0
    %v662 = vadd.f32 %v107, %v661
    %663 = vmatprep.mubr.f32.mxu0 0.0
    %664 = vmatmul.mubr.f32.gmra.mxu0 %v262
    %v665 = vpop.f32.mrf.mxu0
    %v666 = vadd.f32 %v103, %v665
    %v667 = vpop.f32.mrf.mxu0
    %v668 = vadd.f32 %v107, %v667
    %669 = vmatprep.mubr.f32.mxu0 0.0
    %670 = vmatmul.mubr.f32.gmra.mxu0 %v265
    %v671 = vpop.f32.mrf.mxu0
    %v672 = vadd.f32 %v103, %v671
    %v673 = vpop.f32.mrf.mxu0
    %v674 = vadd.f32 %v107, %v673
    %675 = vmatprep.mubr.f32.mxu0 0.0
    %676 = vmatmul.mubr.f32.gmra.mxu0 %v268
    %v677 = vpop.f32.mrf.mxu0
    %v678 = vadd.f32 %v103, %v677
    %v679 = vpop.f32.mrf.mxu0
    %v680 = vadd.f32 %v107, %v679
    %681 = vmatprep.mubr.f32.mxu0 0.0
    %682 = vmatmul.mubr.f32.gmra.mxu0 %v271
    %v683 = vpop.f32.mrf.mxu0
    %v684 = vadd.f32 %v103, %v683
    %v685 = vpop.f32.mrf.mxu0
    %v686 = vadd.f32 %v107, %v685
    %687 = vmatprep.mubr.f32.mxu0 0.0
    %688 = vmatmul.mubr.f32.gmra.mxu0 %v274
    %v689 = vpop.f32.mrf.mxu0
    %v690 = vadd.f32 %v103, %v689
    %v691 = vpop.f32.mrf.mxu0
    %v692 = vadd.f32 %v107, %v691
    %693 = vmatprep.mubr.f32.mxu0 0.0
    %694 = vmatmul.mubr.f32.gmra.mxu0 %v277
    %v695 = vpop.f32.mrf.mxu0
    %v696 = vadd.f32 %v103, %v695
    %v697 = vpop.f32.mrf.mxu0
    %v698 = vadd.f32 %v107, %v697
    %699 = vmatprep.mubr.f32.mxu0 0.0
    %700 = vmatmul.mubr.f32.gmra.mxu0 %v280
    %v701 = vpop.f32.mrf.mxu0
    %v702 = vadd.f32 %v103, %v701
    %v703 = vpop.f32.mrf.mxu0
    %v704 = vadd.f32 %v107, %v703
    %705 = vmatprep.mubr.f32.mxu0 0.0
    %706 = vmatmul.mubr.f32.gmra.mxu0 %v283
    %v707 = vpop.f32.mrf.mxu0
    %v708 = vadd.f32 %v103, %v707
    %v709 = vpop.f32.mrf.mxu0
    %v710 = vadd.f32 %v107, %v709
    %711 = vmatprep.mubr.f32.mxu0 0.0
    %712 = vmatmul.mubr.f32.gmra.mxu0 %v286
    %v713 = vpop.f32.mrf.mxu0
    %v714 = vadd.f32 %v103, %v713
    %v715 = vpop.f32.mrf.mxu0
    %v716 = vadd.f32 %v107, %v715
    %717 = vmatprep.mubr.f32.mxu0 0.0
    %718 = vmatmul.mubr.f32.gmra.mxu0 %v289
    %v719 = vpop.f32.mrf.mxu0
    %v720 = vadd.f32 %v103, %v719
    %v721 = vpop.f32.mrf.mxu0
    %v722 = vadd.f32 %v107, %v721
    %723 = vmatprep.mubr.f32.mxu0 0.0
    %724 = vmatmul.mubr.f32.gmra.mxu0 %v292
    %v725 = vpop.f32.mrf.mxu0
    %v726 = vadd.f32 %v103, %v725
    %v727 = vpop.f32.mrf.mxu0
    %v728 = vadd.f32 %v107, %v727
    %729 = vmatprep.mubr.f32.mxu0 0.0
    %730 = vmatmul.mubr.f32.gmra.mxu0 %v295
    %v731 = vpop.f32.mrf.mxu0
    %v732 = vadd.f32 %v103, %v731
    %v733 = vpop.f32.mrf.mxu0
    %v734 = vadd.f32 %v107, %v733
    %735 = vmatprep.mubr.f32.mxu0 0.0
    %736 = vmatmul.mubr.f32.gmra.mxu0 %v298
    %v737 = vpop.f32.mrf.mxu0
    %v738 = vadd.f32 %v103, %v737
    %v739 = vpop.f32.mrf.mxu0
    %v740 = vadd.f32 %v107, %v739
    %741 = vmatprep.mubr.f32.mxu0 0.0
    %742 = vmatmul.mubr.f32.gmra.mxu0 %v301
    %v743 = vpop.f32.mrf.mxu0
    %v744 = vadd.f32 %v103, %v743
    %v745 = vpop.f32.mrf.mxu0
    %v746 = vadd.f32 %v107, %v745
    %747 = vmatprep.mubr.f32.mxu0 0.0
    %748 = vmatmul.mubr.f32.gmra.mxu0 %v304
    %v749 = vpop.f32.mrf.mxu0
    %v750 = vadd.f32 %v103, %v749
    %v751 = vpop.f32.mrf.mxu0
    %v752 = vadd.f32 %v107, %v751
    %753 = vmatprep.mubr.f32.mxu0 0.0
    %754 = vmatmul.mubr.f32.gmra.mxu0 %v307
    %v755 = vpop.f32.mrf.mxu0
    %v756 = vadd.f32 %v103, %v755
    %v757 = vpop.f32.mrf.mxu0
    %v758 = vadd.f32 %v107, %v757
    %759 = vmatprep.mubr.f32.mxu0 0.0
    %760 = vmatmul.mubr.f32.gmra.mxu0 %v310
    %v761 = vpop.f32.mrf.mxu0
    %v762 = vadd.f32 %v103, %v761
    %v763 = vpop.f32.mrf.mxu0
    %v764 = vadd.f32 %v107, %v763
    %765 = vdwg.mxu0
    %766 = vst [vmem:[#allocation2] sm:$0xff] %v384
    %767 = vst [vmem:[#allocation2 + $0x8] sm:$0xff] %v386
    %768 = vst [vmem:[#allocation2 + $0x10] sm:$0xff] %v390
    %769 = vst [vmem:[#allocation2 + $0x18] sm:$0xff] %v392
    %770 = vst [vmem:[#allocation2 + $0x20] sm:$0xff] %v396
    %771 = vst [vmem:[#allocation2 + $0x28] sm:$0xff] %v398
    %772 = vst [vmem:[#allocation2 + $0x30] sm:$0xff] %v402
    %773 = vst [vmem:[#allocation2 + $0x38] sm:$0xff] %v404
    %774 = vst [vmem:[#allocation2 + $0x40] sm:$0xff] %v408
    %775 = vst [vmem:[#allocation2 + $0x48] sm:$0xff] %v410
    %776 = vst [vmem:[#allocation2 + $0x50] sm:$0xff] %v414
    %777 = vst [vmem:[#allocation2 + $0x58] sm:$0xff] %v416
    %778 = vst [vmem:[#allocation2 + $0x60] sm:$0xff] %v420
    %779 = vst [vmem:[#allocation2 + $0x68] sm:$0xff] %v422
    %780 = vst [vmem:[#allocation2 + $0x70] sm:$0xff] %v426
    %781 = vst [vmem:[#allocation2 + $0x78] sm:$0xff] %v428
    %782 = vst [vmem:[#allocation2 + $0x80] sm:$0xff] %v432
    %783 = vst [vmem:[#allocation2 + $0x88] sm:$0xff] %v434
    %784 = vst [vmem:[#allocation2 + $0x90] sm:$0xff] %v438
    %785 = vst [vmem:[#allocation2 + $0x98] sm:$0xff] %v440
    %786 = vst [vmem:[#allocation2 + $0xa0] sm:$0xff] %v444
    %787 = vst [vmem:[#allocation2 + $0xa8] sm:$0xff] %v446
    %788 = vst [vmem:[#allocation2 + $0xb0] sm:$0xff] %v450
    %789 = vst [vmem:[#allocation2 + $0xb8] sm:$0xff] %v452
    %790 = vst [vmem:[#allocation2 + $0xc0] sm:$0xff] %v456
    %791 = vst [vmem:[#allocation2 + $0xc8] sm:$0xff] %v458
    %792 = vst [vmem:[#allocation2 + $0xd0] sm:$0xff] %v462
    %793 = vst [vmem:[#allocation2 + $0xd8] sm:$0xff] %v464
    %794 = vst [vmem:[#allocation2 + $0xe0] sm:$0xff] %v468
    %795 = vst [vmem:[#allocation2 + $0xe8] sm:$0xff] %v470
    %796 = vst [vmem:[#allocation2 + $0xf0] sm:$0xff] %v474
    %797 = vst [vmem:[#allocation2 + $0xf8] sm:$0xff] %v476
    %798 = vst [vmem:[#allocation2 + $0x100] sm:$0xff] %v480
    %799 = vst [vmem:[#allocation2 + $0x108] sm:$0xff] %v482
    %800 = vst [vmem:[#allocation2 + $0x110] sm:$0xff] %v486
    %801 = vst [vmem:[#allocation2 + $0x118] sm:$0xff] %v488
    %802 = vst [vmem:[#allocation2 + $0x120] sm:$0xff] %v492
    %803 = vst [vmem:[#allocation2 + $0x128] sm:$0xff] %v494
    %804 = vst [vmem:[#allocation2 + $0x130] sm:$0xff] %v498
    %805 = vst [vmem:[#allocation2 + $0x138] sm:$0xff] %v500
    %806 = vst [vmem:[#allocation2 + $0x140] sm:$0xff] %v504
    %807 = vst [vmem:[#allocation2 + $0x148] sm:$0xff] %v506
    %808 = vst [vmem:[#allocation2 + $0x150] sm:$0xff] %v510
    %809 = vst [vmem:[#allocation2 + $0x158] sm:$0xff] %v512
    %810 = vst [vmem:[#allocation2 + $0x160] sm:$0xff] %v516
    %811 = vst [vmem:[#allocation2 + $0x168] sm:$0xff] %v518
    %812 = vst [vmem:[#allocation2 + $0x170] sm:$0xff] %v522
    %813 = vst [vmem:[#allocation2 + $0x178] sm:$0xff] %v524
    %814 = vst [vmem:[#allocation2 + $0x180] sm:$0xff] %v528
    %815 = vst [vmem:[#allocation2 + $0x188] sm:$0xff] %v530
    %816 = vst [vmem:[#allocation2 + $0x190] sm:$0xff] %v534
    %817 = vst [vmem:[#allocation2 + $0x198] sm:$0xff] %v536
    %818 = vst [vmem:[#allocation2 + $0x1a0] sm:$0xff] %v540
    %819 = vst [vmem:[#allocation2 + $0x1a8] sm:$0xff] %v542
    %820 = vst [vmem:[#allocation2 + $0x1b0] sm:$0xff] %v546
    %821 = vst [vmem:[#allocation2 + $0x1b8] sm:$0xff] %v548
    %822 = vst [vmem:[#allocation2 + $0x1c0] sm:$0xff] %v552
    %823 = vst [vmem:[#allocation2 + $0x1c8] sm:$0xff] %v554
    %824 = vst [vmem:[#allocation2 + $0x1d0] sm:$0xff] %v558
    %825 = vst [vmem:[#allocation2 + $0x1d8] sm:$0xff] %v560
    %826 = vst [vmem:[#allocation2 + $0x1e0] sm:$0xff] %v564
    %827 = vst [vmem:[#allocation2 + $0x1e8] sm:$0xff] %v566
    %828 = vst [vmem:[#allocation2 + $0x1f0] sm:$0xff] %v570
    %829 = vst [vmem:[#allocation2 + $0x1f8] sm:$0xff] %v572
    %830 = vst [vmem:[#allocation2 + $0x200] sm:$0xff] %v576
    %831 = vst [vmem:[#allocation2 + $0x208] sm:$0xff] %v578
    %832 = vst [vmem:[#allocation2 + $0x210] sm:$0xff] %v582
    %833 = vst [vmem:[#allocation2 + $0x218] sm:$0xff] %v584
    %834 = vst [vmem:[#allocation2 + $0x220] sm:$0xff] %v588
    %835 = vst [vmem:[#allocation2 + $0x228] sm:$0xff] %v590
    %836 = vst [vmem:[#allocation2 + $0x230] sm:$0xff] %v594
    %837 = vst [vmem:[#allocation2 + $0x238] sm:$0xff] %v596
    %838 = vst [vmem:[#allocation2 + $0x240] sm:$0xff] %v600
    %839 = vst [vmem:[#allocation2 + $0x248] sm:$0xff] %v602
    %840 = vst [vmem:[#allocation2 + $0x250] sm:$0xff] %v606
    %841 = vst [vmem:[#allocation2 + $0x258] sm:$0xff] %v608
    %842 = vst [vmem:[#allocation2 + $0x260] sm:$0xff] %v612
    %843 = vst [vmem:[#allocation2 + $0x268] sm:$0xff] %v614
    %844 = vst [vmem:[#allocation2 + $0x270] sm:$0xff] %v618
    %845 = vst [vmem:[#allocation2 + $0x278] sm:$0xff] %v620
    %846 = vst [vmem:[#allocation2 + $0x280] sm:$0xff] %v624
    %847 = vst [vmem:[#allocation2 + $0x288] sm:$0xff] %v626
    %848 = vst [vmem:[#allocation2 + $0x290] sm:$0xff] %v630
    %849 = vst [vmem:[#allocation2 + $0x298] sm:$0xff] %v632
    %850 = vst [vmem:[#allocation2 + $0x2a0] sm:$0xff] %v636
    %851 = vst [vmem:[#allocation2 + $0x2a8] sm:$0xff] %v638
    %852 = vst [vmem:[#allocation2 + $0x2b0] sm:$0xff] %v642
    %853 = vst [vmem:[#allocation2 + $0x2b8] sm:$0xff] %v644
    %854 = vst [vmem:[#allocation2 + $0x2c0] sm:$0xff] %v648
    %855 = vst [vmem:[#allocation2 + $0x2c8] sm:$0xff] %v650
    %856 = vst [vmem:[#allocation2 + $0x2d0] sm:$0xff] %v654
    %857 = vst [vmem:[#allocation2 + $0x2d8] sm:$0xff] %v656
    %858 = vst [vmem:[#allocation2 + $0x2e0] sm:$0xff] %v660
    %859 = vst [vmem:[#allocation2 + $0x2e8] sm:$0xff] %v662
    %860 = vst [vmem:[#allocation2 + $0x2f0] sm:$0xff] %v666
    %861 = vst [vmem:[#allocation2 + $0x2f8] sm:$0xff] %v668
    %862 = vst [vmem:[#allocation2 + $0x300] sm:$0xff] %v672
    %863 = vst [vmem:[#allocation2 + $0x308] sm:$0xff] %v674
    %864 = vst [vmem:[#allocation2 + $0x310] sm:$0xff] %v678
    %865 = vst [vmem:[#allocation2 + $0x318] sm:$0xff] %v680
    %866 = vst [vmem:[#allocation2 + $0x320] sm:$0xff] %v684
    %867 = vst [vmem:[#allocation2 + $0x328] sm:$0xff] %v686
    %868 = vst [vmem:[#allocation2 + $0x330] sm:$0xff] %v690
    %869 = vst [vmem:[#allocation2 + $0x338] sm:$0xff] %v692
    %870 = vst [vmem:[#allocation2 + $0x340] sm:$0xff] %v696
    %871 = vst [vmem:[#allocation2 + $0x348] sm:$0xff] %v698
    %872 = vst [vmem:[#allocation2 + $0x350] sm:$0xff] %v702
    %873 = vst [vmem:[#allocation2 + $0x358] sm:$0xff] %v704
    %874 = vst [vmem:[#allocation2 + $0x360] sm:$0xff] %v708
    %875 = vst [vmem:[#allocation2 + $0x368] sm:$0xff] %v710
    %876 = vst [vmem:[#allocation2 + $0x370] sm:$0xff] %v714
    %877 = vst [vmem:[#allocation2 + $0x378] sm:$0xff] %v716
    %878 = vst [vmem:[#allocation2 + $0x380] sm:$0xff] %v720
    %879 = vst [vmem:[#allocation2 + $0x388] sm:$0xff] %v722
    %880 = vst [vmem:[#allocation2 + $0x390] sm:$0xff] %v726
    %881 = vst [vmem:[#allocation2 + $0x398] sm:$0xff] %v728
    %882 = vst [vmem:[#allocation2 + $0x3a0] sm:$0xff] %v732
    %883 = vst [vmem:[#allocation2 + $0x3a8] sm:$0xff] %v734
    %884 = vst [vmem:[#allocation2 + $0x3b0] sm:$0xff] %v738
    %885 = vst [vmem:[#allocation2 + $0x3b8] sm:$0xff] %v740
    %886 = vst [vmem:[#allocation2 + $0x3c0] sm:$0xff] %v744
    %887 = vst [vmem:[#allocation2 + $0x3c8] sm:$0xff] %v746
    %888 = vst [vmem:[#allocation2 + $0x3d0] sm:$0xff] %v750
    %889 = vst [vmem:[#allocation2 + $0x3d8] sm:$0xff] %v752
    %890 = vst [vmem:[#allocation2 + $0x3e0] sm:$0xff] %v756
    %891 = vst [vmem:[#allocation2 + $0x3e8] sm:$0xff] %v758
    %892 = vst [vmem:[#allocation2 + $0x3f0] sm:$0xff] %v762
    %893 = vst [vmem:[#allocation2 + $0x3f8] sm:$0xff] %v764
    %v894 = vld [vmem:[%s2] sm:$0xff]
    %v895 = vld [vmem:[%s2 + $0x8] sm:$0xff]
    %v896 = vld [vmem:[%s2 + $0x10] sm:$0xff]
    %v897 = vld [vmem:[%s2 + $0x18] sm:$0xff]
    %v898 = vld [vmem:[%s2 + $0x20] sm:$0xff]
    %v899 = vld [vmem:[%s2 + $0x28] sm:$0xff]
    %v900 = vld [vmem:[%s2 + $0x30] sm:$0xff]
    %v901 = vld [vmem:[%s2 + $0x38] sm:$0xff]
    %v902 = vld [vmem:[%s2 + $0x40] sm:$0xff]
    %v903 = vld [vmem:[%s2 + $0x48] sm:$0xff]
    %v904 = vld [vmem:[%s2 + $0x50] sm:$0xff]
    %v905 = vld [vmem:[%s2 + $0x58] sm:$0xff]
    %v906 = vld [vmem:[%s2 + $0x60] sm:$0xff]
    %v907 = vld [vmem:[%s2 + $0x68] sm:$0xff]
    %v908 = vld [vmem:[%s2 + $0x70] sm:$0xff]
    %v909 = vld [vmem:[%s2 + $0x78] sm:$0xff]
    %v910 = vld [vmem:[%s4] sm:$0xff]
    %v911 = vld [vmem:[%s4 + $0x8] sm:$0xff]
    %v912 = vld [vmem:[%s4 + $0x10] sm:$0xff]
    %v913 = vld [vmem:[%s4 + $0x18] sm:$0xff]
    %v914 = vld [vmem:[%s4 + $0x20] sm:$0xff]
    %v915 = vld [vmem:[%s4 + $0x28] sm:$0xff]
    %v916 = vld [vmem:[%s4 + $0x30] sm:$0xff]
    %v917 = vld [vmem:[%s4 + $0x38] sm:$0xff]
    %v918 = vld [vmem:[%s4 + $0x40] sm:$0xff]
    %v919 = vld [vmem:[%s4 + $0x48] sm:$0xff]
    %v920 = vld [vmem:[%s4 + $0x50] sm:$0xff]
    %v921 = vld [vmem:[%s4 + $0x58] sm:$0xff]
    %v922 = vld [vmem:[%s4 + $0x60] sm:$0xff]
    %v923 = vld [vmem:[%s4 + $0x68] sm:$0xff]
    %v924 = vld [vmem:[%s4 + $0x70] sm:$0xff]
    %v925 = vld [vmem:[%s4 + $0x78] sm:$0xff]
    %v926 = vld [vmem:[%s5] sm:$0xff]
    %v927 = vld [vmem:[%s5 + $0x8] sm:$0xff]
    %v928 = vld [vmem:[%s5 + $0x10] sm:$0xff]
    %v929 = vld [vmem:[%s5 + $0x18] sm:$0xff]
    %v930 = vld [vmem:[%s5 + $0x20] sm:$0xff]
    %v931 = vld [vmem:[%s5 + $0x28] sm:$0xff]
    %v932 = vld [vmem:[%s5 + $0x30] sm:$0xff]
    %v933 = vld [vmem:[%s5 + $0x38] sm:$0xff]
    %v934 = vld [vmem:[%s5 + $0x40] sm:$0xff]
    %v935 = vld [vmem:[%s5 + $0x48] sm:$0xff]
    %v936 = vld [vmem:[%s5 + $0x50] sm:$0xff]
    %v937 = vld [vmem:[%s5 + $0x58] sm:$0xff]
    %v938 = vld [vmem:[%s5 + $0x60] sm:$0xff]
    %v939 = vld [vmem:[%s5 + $0x68] sm:$0xff]
    %v940 = vld [vmem:[%s5 + $0x70] sm:$0xff]
    %v941 = vld [vmem:[%s5 + $0x78] sm:$0xff]
    %v942 = vld [vmem:[%s6] sm:$0xff]
    %v943 = vld [vmem:[%s6 + $0x8] sm:$0xff]
    loop: start=0, step=1, limit=8
    $region38: #{tpu_custom_call.1} parent=1 // loop_pre_header
      _
    $region39: #{tpu_custom_call.1} parent=1 // loop_header
      %s945 = sphi 0, %s949
      %p946 = scmp.ge.s32.totalorder %s945, 8
      %v950 = vphi 0.0, %v3115
      %v951 = vphi 0.0, %v3109
      %v952 = vphi 0.0, %v3221
      %v953 = vphi 0.0, %v3215
      %v954 = vphi 0.0, %v3292
      %v955 = vphi 0.0, %v3294
    $region40: #{tpu_custom_call.1} parent=1 // loop_header_branch
      %948 = sbr.rel (%p946) target = $region44
    $region41: #{tpu_custom_call.1} parent=1 // loop_body
      %s956 = smul.u32 %s945, 64
      %s957 = sshra.s32 %s956, 3
      %s958 = sand.u32 %s956, 7
      %s959 = smul.u32 %s957, 2
      %s960 = smul.addr %s959, 8
      %s961 = scalar_lea.vmem [#allocation2], %s960
      %v962 = vld [vmem:[%s961] sm:$0xff]
      %v963 = vld [vmem:[%s961 + $0x8] sm:$0xff]
      %vm964 = vcmask 523264
      %v966 = vsel %vm964, %v950, 0
      %968 = vmatprep.subr.mxu0 0.0
      %969 = vmatpush1.msra.mxu0 0.0
      %970 = vmatprep.subr.mxu0 0.0
      %971 = vmatpush1.msra.mxu0 0.0
      %972 = vmatprep.subr.mxu0 0.0
      %973 = vmatpush1.msra.mxu0 0.0
      %974 = vmatprep.subr.mxu0 0.0
      %975 = vmatpush1.msra.mxu0 0.0
      %976 = vmatprep.subr.mxu0 0.0
      %977 = vmatpush1.msra.mxu0 0.0
      %978 = vmatprep.subr.mxu0 0.0
      %979 = vmatpush1.msra.mxu0 0.0
      %980 = vmatprep.subr.mxu0 0.0
      %981 = vmatpush1.msra.mxu0 0.0
      %982 = vmatprep.subr.mxu0 0.0
      %983 = vmatpush1.msra.mxu0 0.0
      %984 = vmatprep.subr.mxu0 %v909
      %985 = vmatpush1.msra.mxu0 %v908
      %986 = vmatprep.subr.mxu0 %v907
      %987 = vmatpush1.msra.mxu0 %v906
      %988 = vmatprep.subr.mxu0 %v905
      %989 = vmatpush1.msra.mxu0 %v904
      %990 = vmatprep.subr.mxu0 %v903
      %991 = vmatpush1.msra.mxu0 %v902
      %992 = vmatprep.subr.mxu0 %v901
      %993 = vmatpush1.msra.mxu0 %v900
      %994 = vmatprep.subr.mxu0 %v899
      %995 = vmatpush1.msra.mxu0 %v898
      %996 = vmatprep.subr.mxu0 %v897
      %997 = vmatpush1.msra.mxu0 %v896
      %998 = vmatprep.subr.mxu0 %v895
      %999 = vmatpush1.msra.mxu0 %v894
      %1000 = vmatprep.subr.mxu0 0.0
      %1001 = vmatpush2.msra.mxu0 0.0
      %1002 = vmatprep.subr.mxu0 0.0
      %1003 = vmatpush2.msra.mxu0 0.0
      %1004 = vmatprep.subr.mxu0 0.0
      %1005 = vmatpush2.msra.mxu0 0.0
      %1006 = vmatprep.subr.mxu0 0.0
      %1007 = vmatpush2.msra.mxu0 0.0
      %1008 = vmatprep.subr.mxu0 0.0
      %1009 = vmatpush2.msra.mxu0 0.0
      %1010 = vmatprep.subr.mxu0 0.0
      %1011 = vmatpush2.msra.mxu0 0.0
      %1012 = vmatprep.subr.mxu0 0.0
      %1013 = vmatpush2.msra.mxu0 0.0
      %1014 = vmatprep.subr.mxu0 0.0
      %1015 = vmatpush2.msra.mxu0 0.0
      %1016 = vmatprep.subr.mxu0 0.0
      %1017 = vmatpush2.msra.mxu0 0.0
      %1018 = vmatprep.subr.mxu0 0.0
      %1019 = vmatpush2.msra.mxu0 0.0
      %1020 = vmatprep.subr.mxu0 0.0
      %1021 = vmatpush2.msra.mxu0 0.0
      %1022 = vmatprep.subr.mxu0 0.0
      %1023 = vmatpush2.msra.mxu0 0.0
      %1024 = vmatprep.subr.mxu0 0.0
      %1025 = vmatpush2.msra.mxu0 0.0
      %1026 = vmatprep.subr.mxu0 0.0
      %1027 = vmatpush2.msra.mxu0 0.0
      %1028 = vmatprep.subr.mxu0 0.0
      %1029 = vmatpush2.msra.mxu0 0.0
      %1030 = vmatprep.subr.mxu0 0.0
      %1031 = vmatpush2.msra.mxu0 0.0
      %1032 = vmatprep.mubr.f32.mxu0 0.0
      %1033 = vmatmul.mubr.f32.gmra.mxu0 %v966
      %v1034 = vpop.f32.mrf.mxu0
      %v1035 = vadd.f32 0.0, %v1034
      %v1036 = vpop.f32.mrf.mxu0
      %v1037 = vadd.f32 0.0, %v1036
      %1038 = vdwg.mxu0
      %v1039 = vadd.f32 %v962, %v1035
      %v1040 = vadd.f32 %v963, %v1037
      %v1041 = vxor.u32 %v1039, 2147483648
      %v1042 = vxor.u32 %v1040, 2147483648
      %v1043 = vmul.f32 %v1041, 1.442695
      %v1044 = vpow.pop %v1043
      %v1045 = vmul.f32 %v1042, 1.442695
      %v1046 = vpow.pop %v1045
      %v1047 = vadd.f32 %v1044, 1.0
      %v1048 = vadd.f32 %v1046, 1.0
      %v1049 = vrcp.pop %v1047
      %v1050 = vmul.f32 1.0, %v1049
      %v1051 = vrcp.pop %v1048
      %v1052 = vmul.f32 1.0, %v1051
      %v1053 = vtanh.pop %v1040
      %v1054 = vmul.f32 %v1050, %v951
      %1056 = vrot.lane.b32.xlu0 %v1053, 64
      %v1057 = vpop.permute.xlu0 %1056
      %v1059 = vmul.f32 %v1050, %v1057
      %1061 = vrot.lane.b32.xlu0 %v1059, 64
      %v1062 = vpop.permute.xlu0 %1061
      %v1064 = vadd.f32 %v1054, %v1062
      %v1065 = vtanh.pop %v1064
      %1067 = vrot.lane.b32.xlu0 %v1065, 64
      %v1068 = vpop.permute.xlu0 %1067
      %v1070 = vmul.f32 %v1052, %v1068
      %v1072 = vsel %vm964, %v1070, 0
      %1074 = vmatprep.subr.mxu0 0.0
      %1075 = vmatpush1.msra.mxu0 0.0
      %1076 = vmatprep.subr.mxu0 0.0
      %1077 = vmatpush1.msra.mxu0 0.0
      %1078 = vmatprep.subr.mxu0 0.0
      %1079 = vmatpush1.msra.mxu0 0.0
      %1080 = vmatprep.subr.mxu0 0.0
      %1081 = vmatpush1.msra.mxu0 0.0
      %1082 = vmatprep.subr.mxu0 0.0
      %1083 = vmatpush1.msra.mxu0 0.0
      %1084 = vmatprep.subr.mxu0 0.0
      %1085 = vmatpush1.msra.mxu0 0.0
      %1086 = vmatprep.subr.mxu0 0.0
      %1087 = vmatpush1.msra.mxu0 0.0
      %1088 = vmatprep.subr.mxu0 0.0
      %1089 = vmatpush1.msra.mxu0 0.0
      %1090 = vmatprep.subr.mxu0 %v925
      %1091 = vmatpush1.msra.mxu0 %v924
      %1092 = vmatprep.subr.mxu0 %v923
      %1093 = vmatpush1.msra.mxu0 %v922
      %1094 = vmatprep.subr.mxu0 %v921
      %1095 = vmatpush1.msra.mxu0 %v920
      %1096 = vmatprep.subr.mxu0 %v919
      %1097 = vmatpush1.msra.mxu0 %v918
      %1098 = vmatprep.subr.mxu0 %v917
      %1099 = vmatpush1.msra.mxu0 %v916
      %1100 = vmatprep.subr.mxu0 %v915
      %1101 = vmatpush1.msra.mxu0 %v914
      %1102 = vmatprep.subr.mxu0 %v913
      %1103 = vmatpush1.msra.mxu0 %v912
      %1104 = vmatprep.subr.mxu0 %v911
      %1105 = vmatpush1.msra.mxu0 %v910
      %1106 = vmatprep.subr.mxu0 0.0
      %1107 = vmatpush2.msra.mxu0 0.0
      %1108 = vmatprep.subr.mxu0 0.0
      %1109 = vmatpush2.msra.mxu0 0.0
      %1110 = vmatprep.subr.mxu0 0.0
      %1111 = vmatpush2.msra.mxu0 0.0
      %1112 = vmatprep.subr.mxu0 0.0
      %1113 = vmatpush2.msra.mxu0 0.0
      %1114 = vmatprep.subr.mxu0 0.0
      %1115 = vmatpush2.msra.mxu0 0.0
      %1116 = vmatprep.subr.mxu0 0.0
      %1117 = vmatpush2.msra.mxu0 0.0
      %1118 = vmatprep.subr.mxu0 0.0
      %1119 = vmatpush2.msra.mxu0 0.0
      %1120 = vmatprep.subr.mxu0 0.0
      %1121 = vmatpush2.msra.mxu0 0.0
      %1122 = vmatprep.subr.mxu0 0.0
      %1123 = vmatpush2.msra.mxu0 0.0
      %1124 = vmatprep.subr.mxu0 0.0
      %1125 = vmatpush2.msra.mxu0 0.0
      %1126 = vmatprep.subr.mxu0 0.0
      %1127 = vmatpush2.msra.mxu0 0.0
      %1128 = vmatprep.subr.mxu0 0.0
      %1129 = vmatpush2.msra.mxu0 0.0
      %1130 = vmatprep.subr.mxu0 0.0
      %1131 = vmatpush2.msra.mxu0 0.0
      %1132 = vmatprep.subr.mxu0 0.0
      %1133 = vmatpush2.msra.mxu0 0.0
      %1134 = vmatprep.subr.mxu0 0.0
      %1135 = vmatpush2.msra.mxu0 0.0
      %1136 = vmatprep.subr.mxu0 0.0
      %1137 = vmatpush2.msra.mxu0 0.0
      %1138 = vmatprep.mubr.f32.mxu0 0.0
      %1139 = vmatmul.mubr.f32.gmra.mxu0 %v1072
      %v1140 = vpop.f32.mrf.mxu0
      %v1141 = vadd.f32 %v954, %v1140
      %v1142 = vpop.f32.mrf.mxu0
      %v1143 = vadd.f32 %v955, %v1142
      %1144 = vdwg.mxu0
      %v1145 = vadd.f32 %v1141, %v942
      %v1146 = vadd.f32 %v1143, %v943
      %v1147 = vxor.u32 %v1145, 2147483648
      %v1148 = vxor.u32 %v1146, 2147483648
      %v1149 = vmul.f32 %v1147, 1.442695
      %v1150 = vpow.pop %v1149
      %v1151 = vmul.f32 %v1148, 1.442695
      %v1152 = vpow.pop %v1151
      %v1153 = vadd.f32 %v1150, 1.0
      %v1154 = vadd.f32 %v1152, 1.0
      %v1155 = vrcp.pop %v1153
      %v1156 = vmul.f32 1.0, %v1155
      %v1157 = vrcp.pop %v1154
      %v1158 = vmul.f32 1.0, %v1157
      %v1159 = vtanh.pop %v1146
      %v1160 = vmul.f32 %v1156, %v953
      %1162 = vrot.lane.b32.xlu0 %v1159, 64
      %v1163 = vpop.permute.xlu0 %1162
      %v1165 = vmul.f32 %v1156, %v1163
      %1167 = vrot.lane.b32.xlu0 %v1165, 64
      %v1168 = vpop.permute.xlu0 %1167
      %v1170 = vadd.f32 %v1160, %v1168
      %v1171 = vtanh.pop %v1170
      %1173 = vrot.lane.b32.xlu0 %v1171, 64
      %v1174 = vpop.permute.xlu0 %1173
      %v1176 = vmul.f32 %v1158, %v1174
      %v1178 = vsel %vm964, %v1176, 0
      %1180 = vmatprep.subr.mxu0 0.0
      %1181 = vmatpush1.msra.mxu0 0.0
      %1182 = vmatprep.subr.mxu0 0.0
      %1183 = vmatpush1.msra.mxu0 0.0
      %1184 = vmatprep.subr.mxu0 0.0
      %1185 = vmatpush1.msra.mxu0 0.0
      %1186 = vmatprep.subr.mxu0 0.0
      %1187 = vmatpush1.msra.mxu0 0.0
      %1188 = vmatprep.subr.mxu0 0.0
      %1189 = vmatpush1.msra.mxu0 0.0
      %1190 = vmatprep.subr.mxu0 0.0
      %1191 = vmatpush1.msra.mxu0 0.0
      %1192 = vmatprep.subr.mxu0 0.0
      %1193 = vmatpush1.msra.mxu0 0.0
      %1194 = vmatprep.subr.mxu0 0.0
      %1195 = vmatpush1.msra.mxu0 0.0
      %1196 = vmatprep.subr.mxu0 %v941
      %1197 = vmatpush1.msra.mxu0 %v940
      %1198 = vmatprep.subr.mxu0 %v939
      %1199 = vmatpush1.msra.mxu0 %v938
      %1200 = vmatprep.subr.mxu0 %v937
      %1201 = vmatpush1.msra.mxu0 %v936
      %1202 = vmatprep.subr.mxu0 %v935
      %1203 = vmatpush1.msra.mxu0 %v934
      %1204 = vmatprep.subr.mxu0 %v933
      %1205 = vmatpush1.msra.mxu0 %v932
      %1206 = vmatprep.subr.mxu0 %v931
      %1207 = vmatpush1.msra.mxu0 %v930
      %1208 = vmatprep.subr.mxu0 %v929
      %1209 = vmatpush1.msra.mxu0 %v928
      %1210 = vmatprep.subr.mxu0 %v927
      %1211 = vmatpush1.msra.mxu0 %v926
      %1212 = vmatprep.subr.mxu0 0.0
      %1213 = vmatpush2.msra.mxu0 0.0
      %1214 = vmatprep.subr.mxu0 0.0
      %1215 = vmatpush2.msra.mxu0 0.0
      %1216 = vmatprep.subr.mxu0 0.0
      %1217 = vmatpush2.msra.mxu0 0.0
      %1218 = vmatprep.subr.mxu0 0.0
      %1219 = vmatpush2.msra.mxu0 0.0
      %1220 = vmatprep.subr.mxu0 0.0
      %1221 = vmatpush2.msra.mxu0 0.0
      %1222 = vmatprep.subr.mxu0 0.0
      %1223 = vmatpush2.msra.mxu0 0.0
      %1224 = vmatprep.subr.mxu0 0.0
      %1225 = vmatpush2.msra.mxu0 0.0
      %1226 = vmatprep.subr.mxu0 0.0
      %1227 = vmatpush2.msra.mxu0 0.0
      %1228 = vmatprep.subr.mxu0 0.0
      %1229 = vmatpush2.msra.mxu0 0.0
      %1230 = vmatprep.subr.mxu0 0.0
      %1231 = vmatpush2.msra.mxu0 0.0
      %1232 = vmatprep.subr.mxu0 0.0
      %1233 = vmatpush2.msra.mxu0 0.0
      %1234 = vmatprep.subr.mxu0 0.0
      %1235 = vmatpush2.msra.mxu0 0.0
      %1236 = vmatprep.subr.mxu0 0.0
      %1237 = vmatpush2.msra.mxu0 0.0
      %1238 = vmatprep.subr.mxu0 0.0
      %1239 = vmatpush2.msra.mxu0 0.0
      %1240 = vmatprep.subr.mxu0 0.0
      %1241 = vmatpush2.msra.mxu0 0.0
      %1242 = vmatprep.subr.mxu0 0.0
      %1243 = vmatpush2.msra.mxu0 0.0
      %1244 = vmatprep.mubr.f32.mxu0 0.0
      %1245 = vmatmul.mubr.f32.gmra.mxu0 %v1178
      %v1246 = vpop.f32.mrf.mxu0
      %v1247 = vadd.f32 0.0, %v1246
      %v1248 = vpop.f32.mrf.mxu0
      %v1249 = vadd.f32 0.0, %v1248
      %1250 = vdwg.mxu0
      %s1251 = smul.u32 %s945, 8
      %s1252 = sadd.s32 %s1251, 1
      %s1253 = smul.u32 %s1252, 8
      %s1254 = sshra.s32 %s1253, 3
      %s1255 = sand.u32 %s1253, 7
      %s1256 = smul.u32 %s1254, 2
      %s1257 = smul.addr %s1256, 8
      %s1258 = scalar_lea.vmem [#allocation2], %s1257
      %v1259 = vld [vmem:[%s1258] sm:$0xff]
      %v1260 = vld [vmem:[%s1258 + $0x8] sm:$0xff]
      %1261 = vmatprep.subr.mxu0 0.0
      %1262 = vmatpush1.msra.mxu0 0.0
      %1263 = vmatprep.subr.mxu0 0.0
      %1264 = vmatpush1.msra.mxu0 0.0
      %1265 = vmatprep.subr.mxu0 0.0
      %1266 = vmatpush1.msra.mxu0 0.0
      %1267 = vmatprep.subr.mxu0 0.0
      %1268 = vmatpush1.msra.mxu0 0.0
      %1269 = vmatprep.subr.mxu0 0.0
      %1270 = vmatpush1.msra.mxu0 0.0
      %1271 = vmatprep.subr.mxu0 0.0
      %1272 = vmatpush1.msra.mxu0 0.0
      %1273 = vmatprep.subr.mxu0 0.0
      %1274 = vmatpush1.msra.mxu0 0.0
      %1275 = vmatprep.subr.mxu0 0.0
      %1276 = vmatpush1.msra.mxu0 0.0
      %1277 = vmatprep.subr.mxu0 %v909
      %1278 = vmatpush1.msra.mxu0 %v908
      %1279 = vmatprep.subr.mxu0 %v907
      %1280 = vmatpush1.msra.mxu0 %v906
      %1281 = vmatprep.subr.mxu0 %v905
      %1282 = vmatpush1.msra.mxu0 %v904
      %1283 = vmatprep.subr.mxu0 %v903
      %1284 = vmatpush1.msra.mxu0 %v902
      %1285 = vmatprep.subr.mxu0 %v901
      %1286 = vmatpush1.msra.mxu0 %v900
      %1287 = vmatprep.subr.mxu0 %v899
      %1288 = vmatpush1.msra.mxu0 %v898
      %1289 = vmatprep.subr.mxu0 %v897
      %1290 = vmatpush1.msra.mxu0 %v896
      %1291 = vmatprep.subr.mxu0 %v895
      %1292 = vmatpush1.msra.mxu0 %v894
      %1293 = vmatprep.subr.mxu0 0.0
      %1294 = vmatpush2.msra.mxu0 0.0
      %1295 = vmatprep.subr.mxu0 0.0
      %1296 = vmatpush2.msra.mxu0 0.0
      %1297 = vmatprep.subr.mxu0 0.0
      %1298 = vmatpush2.msra.mxu0 0.0
      %1299 = vmatprep.subr.mxu0 0.0
      %1300 = vmatpush2.msra.mxu0 0.0
      %1301 = vmatprep.subr.mxu0 0.0
      %1302 = vmatpush2.msra.mxu0 0.0
      %1303 = vmatprep.subr.mxu0 0.0
      %1304 = vmatpush2.msra.mxu0 0.0
      %1305 = vmatprep.subr.mxu0 0.0
      %1306 = vmatpush2.msra.mxu0 0.0
      %1307 = vmatprep.subr.mxu0 0.0
      %1308 = vmatpush2.msra.mxu0 0.0
      %1309 = vmatprep.subr.mxu0 0.0
      %1310 = vmatpush2.msra.mxu0 0.0
      %1311 = vmatprep.subr.mxu0 0.0
      %1312 = vmatpush2.msra.mxu0 0.0
      %1313 = vmatprep.subr.mxu0 0.0
      %1314 = vmatpush2.msra.mxu0 0.0
      %1315 = vmatprep.subr.mxu0 0.0
      %1316 = vmatpush2.msra.mxu0 0.0
      %1317 = vmatprep.subr.mxu0 0.0
      %1318 = vmatpush2.msra.mxu0 0.0
      %1319 = vmatprep.subr.mxu0 0.0
      %1320 = vmatpush2.msra.mxu0 0.0
      %1321 = vmatprep.subr.mxu0 0.0
      %1322 = vmatpush2.msra.mxu0 0.0
      %1323 = vmatprep.subr.mxu0 0.0
      %1324 = vmatpush2.msra.mxu0 0.0
      %1325 = vmatprep.mubr.f32.mxu0 0.0
      %1326 = vmatmul.mubr.f32.gmra.mxu0 %v1072
      %v1327 = vpop.f32.mrf.mxu0
      %v1328 = vadd.f32 0.0, %v1327
      %v1329 = vpop.f32.mrf.mxu0
      %v1330 = vadd.f32 0.0, %v1329
      %1331 = vdwg.mxu0
      %v1332 = vadd.f32 %v1259, %v1328
      %v1333 = vadd.f32 %v1260, %v1330
      %v1334 = vxor.u32 %v1332, 2147483648
      %v1335 = vxor.u32 %v1333, 2147483648
      %v1336 = vmul.f32 %v1334, 1.442695
      %v1337 = vpow.pop %v1336
      %v1338 = vmul.f32 %v1335, 1.442695
      %v1339 = vpow.pop %v1338
      %v1340 = vadd.f32 %v1337, 1.0
      %v1341 = vadd.f32 %v1339, 1.0
      %v1342 = vrcp.pop %v1340
      %v1343 = vmul.f32 1.0, %v1342
      %v1344 = vrcp.pop %v1341
      %v1345 = vmul.f32 1.0, %v1344
      %v1346 = vtanh.pop %v1333
      %v1347 = vmul.f32 %v1343, %v1064
      %1349 = vrot.lane.b32.xlu0 %v1346, 64
      %v1350 = vpop.permute.xlu0 %1349
      %v1352 = vmul.f32 %v1343, %v1350
      %1354 = vrot.lane.b32.xlu0 %v1352, 64
      %v1355 = vpop.permute.xlu0 %1354
      %v1357 = vadd.f32 %v1347, %v1355
      %v1358 = vtanh.pop %v1357
      %1360 = vrot.lane.b32.xlu0 %v1358, 64
      %v1361 = vpop.permute.xlu0 %1360
      %v1363 = vmul.f32 %v1345, %v1361
      %v1365 = vsel %vm964, %v1363, 0
      %1367 = vmatprep.subr.mxu0 0.0
      %1368 = vmatpush1.msra.mxu0 0.0
      %1369 = vmatprep.subr.mxu0 0.0
      %1370 = vmatpush1.msra.mxu0 0.0
      %1371 = vmatprep.subr.mxu0 0.0
      %1372 = vmatpush1.msra.mxu0 0.0
      %1373 = vmatprep.subr.mxu0 0.0
      %1374 = vmatpush1.msra.mxu0 0.0
      %1375 = vmatprep.subr.mxu0 0.0
      %1376 = vmatpush1.msra.mxu0 0.0
      %1377 = vmatprep.subr.mxu0 0.0
      %1378 = vmatpush1.msra.mxu0 0.0
      %1379 = vmatprep.subr.mxu0 0.0
      %1380 = vmatpush1.msra.mxu0 0.0
      %1381 = vmatprep.subr.mxu0 0.0
      %1382 = vmatpush1.msra.mxu0 0.0
      %1383 = vmatprep.subr.mxu0 %v925
      %1384 = vmatpush1.msra.mxu0 %v924
      %1385 = vmatprep.subr.mxu0 %v923
      %1386 = vmatpush1.msra.mxu0 %v922
      %1387 = vmatprep.subr.mxu0 %v921
      %1388 = vmatpush1.msra.mxu0 %v920
      %1389 = vmatprep.subr.mxu0 %v919
      %1390 = vmatpush1.msra.mxu0 %v918
      %1391 = vmatprep.subr.mxu0 %v917
      %1392 = vmatpush1.msra.mxu0 %v916
      %1393 = vmatprep.subr.mxu0 %v915
      %1394 = vmatpush1.msra.mxu0 %v914
      %1395 = vmatprep.subr.mxu0 %v913
      %1396 = vmatpush1.msra.mxu0 %v912
      %1397 = vmatprep.subr.mxu0 %v911
      %1398 = vmatpush1.msra.mxu0 %v910
      %1399 = vmatprep.subr.mxu0 0.0
      %1400 = vmatpush2.msra.mxu0 0.0
      %1401 = vmatprep.subr.mxu0 0.0
      %1402 = vmatpush2.msra.mxu0 0.0
      %1403 = vmatprep.subr.mxu0 0.0
      %1404 = vmatpush2.msra.mxu0 0.0
      %1405 = vmatprep.subr.mxu0 0.0
      %1406 = vmatpush2.msra.mxu0 0.0
      %1407 = vmatprep.subr.mxu0 0.0
      %1408 = vmatpush2.msra.mxu0 0.0
      %1409 = vmatprep.subr.mxu0 0.0
      %1410 = vmatpush2.msra.mxu0 0.0
      %1411 = vmatprep.subr.mxu0 0.0
      %1412 = vmatpush2.msra.mxu0 0.0
      %1413 = vmatprep.subr.mxu0 0.0
      %1414 = vmatpush2.msra.mxu0 0.0
      %1415 = vmatprep.subr.mxu0 0.0
      %1416 = vmatpush2.msra.mxu0 0.0
      %1417 = vmatprep.subr.mxu0 0.0
      %1418 = vmatpush2.msra.mxu0 0.0
      %1419 = vmatprep.subr.mxu0 0.0
      %1420 = vmatpush2.msra.mxu0 0.0
      %1421 = vmatprep.subr.mxu0 0.0
      %1422 = vmatpush2.msra.mxu0 0.0
      %1423 = vmatprep.subr.mxu0 0.0
      %1424 = vmatpush2.msra.mxu0 0.0
      %1425 = vmatprep.subr.mxu0 0.0
      %1426 = vmatpush2.msra.mxu0 0.0
      %1427 = vmatprep.subr.mxu0 0.0
      %1428 = vmatpush2.msra.mxu0 0.0
      %1429 = vmatprep.subr.mxu0 0.0
      %1430 = vmatpush2.msra.mxu0 0.0
      %1431 = vmatprep.mubr.f32.mxu0 0.0
      %1432 = vmatmul.mubr.f32.gmra.mxu0 %v1365
      %v1433 = vpop.f32.mrf.mxu0
      %v1434 = vadd.f32 %v1247, %v1433
      %v1435 = vpop.f32.mrf.mxu0
      %v1436 = vadd.f32 %v1249, %v1435
      %1437 = vdwg.mxu0
      %v1438 = vadd.f32 %v1434, %v942
      %v1439 = vadd.f32 %v1436, %v943
      %v1440 = vxor.u32 %v1438, 2147483648
      %v1441 = vxor.u32 %v1439, 2147483648
      %v1442 = vmul.f32 %v1440, 1.442695
      %v1443 = vpow.pop %v1442
      %v1444 = vmul.f32 %v1441, 1.442695
      %v1445 = vpow.pop %v1444
      %v1446 = vadd.f32 %v1443, 1.0
      %v1447 = vadd.f32 %v1445, 1.0
      %v1448 = vrcp.pop %v1446
      %v1449 = vmul.f32 1.0, %v1448
      %v1450 = vrcp.pop %v1447
      %v1451 = vmul.f32 1.0, %v1450
      %v1452 = vtanh.pop %v1439
      %v1453 = vmul.f32 %v1449, %v1170
      %1455 = vrot.lane.b32.xlu0 %v1452, 64
      %v1456 = vpop.permute.xlu0 %1455
      %v1458 = vmul.f32 %v1449, %v1456
      %1460 = vrot.lane.b32.xlu0 %v1458, 64
      %v1461 = vpop.permute.xlu0 %1460
      %v1463 = vadd.f32 %v1453, %v1461
      %v1464 = vtanh.pop %v1463
      %1466 = vrot.lane.b32.xlu0 %v1464, 64
      %v1467 = vpop.permute.xlu0 %1466
      %v1469 = vmul.f32 %v1451, %v1467
      %v1471 = vsel %vm964, %v1469, 0
      %1473 = vmatprep.subr.mxu0 0.0
      %1474 = vmatpush1.msra.mxu0 0.0
      %1475 = vmatprep.subr.mxu0 0.0
      %1476 = vmatpush1.msra.mxu0 0.0
      %1477 = vmatprep.subr.mxu0 0.0
      %1478 = vmatpush1.msra.mxu0 0.0
      %1479 = vmatprep.subr.mxu0 0.0
      %1480 = vmatpush1.msra.mxu0 0.0
      %1481 = vmatprep.subr.mxu0 0.0
      %1482 = vmatpush1.msra.mxu0 0.0
      %1483 = vmatprep.subr.mxu0 0.0
      %1484 = vmatpush1.msra.mxu0 0.0
      %1485 = vmatprep.subr.mxu0 0.0
      %1486 = vmatpush1.msra.mxu0 0.0
      %1487 = vmatprep.subr.mxu0 0.0
      %1488 = vmatpush1.msra.mxu0 0.0
      %1489 = vmatprep.subr.mxu0 %v941
      %1490 = vmatpush1.msra.mxu0 %v940
      %1491 = vmatprep.subr.mxu0 %v939
      %1492 = vmatpush1.msra.mxu0 %v938
      %1493 = vmatprep.subr.mxu0 %v937
      %1494 = vmatpush1.msra.mxu0 %v936
      %1495 = vmatprep.subr.mxu0 %v935
      %1496 = vmatpush1.msra.mxu0 %v934
      %1497 = vmatprep.subr.mxu0 %v933
      %1498 = vmatpush1.msra.mxu0 %v932
      %1499 = vmatprep.subr.mxu0 %v931
      %1500 = vmatpush1.msra.mxu0 %v930
      %1501 = vmatprep.subr.mxu0 %v929
      %1502 = vmatpush1.msra.mxu0 %v928
      %1503 = vmatprep.subr.mxu0 %v927
      %1504 = vmatpush1.msra.mxu0 %v926
      %1505 = vmatprep.subr.mxu0 0.0
      %1506 = vmatpush2.msra.mxu0 0.0
      %1507 = vmatprep.subr.mxu0 0.0
      %1508 = vmatpush2.msra.mxu0 0.0
      %1509 = vmatprep.subr.mxu0 0.0
      %1510 = vmatpush2.msra.mxu0 0.0
      %1511 = vmatprep.subr.mxu0 0.0
      %1512 = vmatpush2.msra.mxu0 0.0
      %1513 = vmatprep.subr.mxu0 0.0
      %1514 = vmatpush2.msra.mxu0 0.0
      %1515 = vmatprep.subr.mxu0 0.0
      %1516 = vmatpush2.msra.mxu0 0.0
      %1517 = vmatprep.subr.mxu0 0.0
      %1518 = vmatpush2.msra.mxu0 0.0
      %1519 = vmatprep.subr.mxu0 0.0
      %1520 = vmatpush2.msra.mxu0 0.0
      %1521 = vmatprep.subr.mxu0 0.0
      %1522 = vmatpush2.msra.mxu0 0.0
      %1523 = vmatprep.subr.mxu0 0.0
      %1524 = vmatpush2.msra.mxu0 0.0
      %1525 = vmatprep.subr.mxu0 0.0
      %1526 = vmatpush2.msra.mxu0 0.0
      %1527 = vmatprep.subr.mxu0 0.0
      %1528 = vmatpush2.msra.mxu0 0.0
      %1529 = vmatprep.subr.mxu0 0.0
      %1530 = vmatpush2.msra.mxu0 0.0
      %1531 = vmatprep.subr.mxu0 0.0
      %1532 = vmatpush2.msra.mxu0 0.0
      %1533 = vmatprep.subr.mxu0 0.0
      %1534 = vmatpush2.msra.mxu0 0.0
      %1535 = vmatprep.subr.mxu0 0.0
      %1536 = vmatpush2.msra.mxu0 0.0
      %1537 = vmatprep.mubr.f32.mxu0 0.0
      %1538 = vmatmul.mubr.f32.gmra.mxu0 %v1471
      %v1539 = vpop.f32.mrf.mxu0
      %v1540 = vadd.f32 0.0, %v1539
      %v1541 = vpop.f32.mrf.mxu0
      %v1542 = vadd.f32 0.0, %v1541
      %1543 = vdwg.mxu0
      %s1544 = sadd.s32 %s1251, 2
      %s1545 = smul.u32 %s1544, 8
      %s1546 = sshra.s32 %s1545, 3
      %s1547 = sand.u32 %s1545, 7
      %s1548 = smul.u32 %s1546, 2
      %s1549 = smul.addr %s1548, 8
      %s1550 = scalar_lea.vmem [#allocation2], %s1549
      %v1551 = vld [vmem:[%s1550] sm:$0xff]
      %v1552 = vld [vmem:[%s1550 + $0x8] sm:$0xff]
      %1553 = vmatprep.subr.mxu0 0.0
      %1554 = vmatpush1.msra.mxu0 0.0
      %1555 = vmatprep.subr.mxu0 0.0
      %1556 = vmatpush1.msra.mxu0 0.0
      %1557 = vmatprep.subr.mxu0 0.0
      %1558 = vmatpush1.msra.mxu0 0.0
      %1559 = vmatprep.subr.mxu0 0.0
      %1560 = vmatpush1.msra.mxu0 0.0
      %1561 = vmatprep.subr.mxu0 0.0
      %1562 = vmatpush1.msra.mxu0 0.0
      %1563 = vmatprep.subr.mxu0 0.0
      %1564 = vmatpush1.msra.mxu0 0.0
      %1565 = vmatprep.subr.mxu0 0.0
      %1566 = vmatpush1.msra.mxu0 0.0
      %1567 = vmatprep.subr.mxu0 0.0
      %1568 = vmatpush1.msra.mxu0 0.0
      %1569 = vmatprep.subr.mxu0 %v909
      %1570 = vmatpush1.msra.mxu0 %v908
      %1571 = vmatprep.subr.mxu0 %v907
      %1572 = vmatpush1.msra.mxu0 %v906
      %1573 = vmatprep.subr.mxu0 %v905
      %1574 = vmatpush1.msra.mxu0 %v904
      %1575 = vmatprep.subr.mxu0 %v903
      %1576 = vmatpush1.msra.mxu0 %v902
      %1577 = vmatprep.subr.mxu0 %v901
      %1578 = vmatpush1.msra.mxu0 %v900
      %1579 = vmatprep.subr.mxu0 %v899
      %1580 = vmatpush1.msra.mxu0 %v898
      %1581 = vmatprep.subr.mxu0 %v897
      %1582 = vmatpush1.msra.mxu0 %v896
      %1583 = vmatprep.subr.mxu0 %v895
      %1584 = vmatpush1.msra.mxu0 %v894
      %1585 = vmatprep.subr.mxu0 0.0
      %1586 = vmatpush2.msra.mxu0 0.0
      %1587 = vmatprep.subr.mxu0 0.0
      %1588 = vmatpush2.msra.mxu0 0.0
      %1589 = vmatprep.subr.mxu0 0.0
      %1590 = vmatpush2.msra.mxu0 0.0
      %1591 = vmatprep.subr.mxu0 0.0
      %1592 = vmatpush2.msra.mxu0 0.0
      %1593 = vmatprep.subr.mxu0 0.0
      %1594 = vmatpush2.msra.mxu0 0.0
      %1595 = vmatprep.subr.mxu0 0.0
      %1596 = vmatpush2.msra.mxu0 0.0
      %1597 = vmatprep.subr.mxu0 0.0
      %1598 = vmatpush2.msra.mxu0 0.0
      %1599 = vmatprep.subr.mxu0 0.0
      %1600 = vmatpush2.msra.mxu0 0.0
      %1601 = vmatprep.subr.mxu0 0.0
      %1602 = vmatpush2.msra.mxu0 0.0
      %1603 = vmatprep.subr.mxu0 0.0
      %1604 = vmatpush2.msra.mxu0 0.0
      %1605 = vmatprep.subr.mxu0 0.0
      %1606 = vmatpush2.msra.mxu0 0.0
      %1607 = vmatprep.subr.mxu0 0.0
      %1608 = vmatpush2.msra.mxu0 0.0
      %1609 = vmatprep.subr.mxu0 0.0
      %1610 = vmatpush2.msra.mxu0 0.0
      %1611 = vmatprep.subr.mxu0 0.0
      %1612 = vmatpush2.msra.mxu0 0.0
      %1613 = vmatprep.subr.mxu0 0.0
      %1614 = vmatpush2.msra.mxu0 0.0
      %1615 = vmatprep.subr.mxu0 0.0
      %1616 = vmatpush2.msra.mxu0 0.0
      %1617 = vmatprep.mubr.f32.mxu0 0.0
      %1618 = vmatmul.mubr.f32.gmra.mxu0 %v1365
      %v1619 = vpop.f32.mrf.mxu0
      %v1620 = vadd.f32 0.0, %v1619
      %v1621 = vpop.f32.mrf.mxu0
      %v1622 = vadd.f32 0.0, %v1621
      %1623 = vdwg.mxu0
      %v1624 = vadd.f32 %v1551, %v1620
      %v1625 = vadd.f32 %v1552, %v1622
      %v1626 = vxor.u32 %v1624, 2147483648
      %v1627 = vxor.u32 %v1625, 2147483648
      %v1628 = vmul.f32 %v1626, 1.442695
      %v1629 = vpow.pop %v1628
      %v1630 = vmul.f32 %v1627, 1.442695
      %v1631 = vpow.pop %v1630
      %v1632 = vadd.f32 %v1629, 1.0
      %v1633 = vadd.f32 %v1631, 1.0
      %v1634 = vrcp.pop %v1632
      %v1635 = vmul.f32 1.0, %v1634
      %v1636 = vrcp.pop %v1633
      %v1637 = vmul.f32 1.0, %v1636
      %v1638 = vtanh.pop %v1625
      %v1639 = vmul.f32 %v1635, %v1357
      %1641 = vrot.lane.b32.xlu0 %v1638, 64
      %v1642 = vpop.permute.xlu0 %1641
      %v1644 = vmul.f32 %v1635, %v1642
      %1646 = vrot.lane.b32.xlu0 %v1644, 64
      %v1647 = vpop.permute.xlu0 %1646
      %v1649 = vadd.f32 %v1639, %v1647
      %v1650 = vtanh.pop %v1649
      %1652 = vrot.lane.b32.xlu0 %v1650, 64
      %v1653 = vpop.permute.xlu0 %1652
      %v1655 = vmul.f32 %v1637, %v1653
      %v1657 = vsel %vm964, %v1655, 0
      %1659 = vmatprep.subr.mxu0 0.0
      %1660 = vmatpush1.msra.mxu0 0.0
      %1661 = vmatprep.subr.mxu0 0.0
      %1662 = vmatpush1.msra.mxu0 0.0
      %1663 = vmatprep.subr.mxu0 0.0
      %1664 = vmatpush1.msra.mxu0 0.0
      %1665 = vmatprep.subr.mxu0 0.0
      %1666 = vmatpush1.msra.mxu0 0.0
      %1667 = vmatprep.subr.mxu0 0.0
      %1668 = vmatpush1.msra.mxu0 0.0
      %1669 = vmatprep.subr.mxu0 0.0
      %1670 = vmatpush1.msra.mxu0 0.0
      %1671 = vmatprep.subr.mxu0 0.0
      %1672 = vmatpush1.msra.mxu0 0.0
      %1673 = vmatprep.subr.mxu0 0.0
      %1674 = vmatpush1.msra.mxu0 0.0
      %1675 = vmatprep.subr.mxu0 %v925
      %1676 = vmatpush1.msra.mxu0 %v924
      %1677 = vmatprep.subr.mxu0 %v923
      %1678 = vmatpush1.msra.mxu0 %v922
      %1679 = vmatprep.subr.mxu0 %v921
      %1680 = vmatpush1.msra.mxu0 %v920
      %1681 = vmatprep.subr.mxu0 %v919
      %1682 = vmatpush1.msra.mxu0 %v918
      %1683 = vmatprep.subr.mxu0 %v917
      %1684 = vmatpush1.msra.mxu0 %v916
      %1685 = vmatprep.subr.mxu0 %v915
      %1686 = vmatpush1.msra.mxu0 %v914
      %1687 = vmatprep.subr.mxu0 %v913
      %1688 = vmatpush1.msra.mxu0 %v912
      %1689 = vmatprep.subr.mxu0 %v911
      %1690 = vmatpush1.msra.mxu0 %v910
      %1691 = vmatprep.subr.mxu0 0.0
      %1692 = vmatpush2.msra.mxu0 0.0
      %1693 = vmatprep.subr.mxu0 0.0
      %1694 = vmatpush2.msra.mxu0 0.0
      %1695 = vmatprep.subr.mxu0 0.0
      %1696 = vmatpush2.msra.mxu0 0.0
      %1697 = vmatprep.subr.mxu0 0.0
      %1698 = vmatpush2.msra.mxu0 0.0
      %1699 = vmatprep.subr.mxu0 0.0
      %1700 = vmatpush2.msra.mxu0 0.0
      %1701 = vmatprep.subr.mxu0 0.0
      %1702 = vmatpush2.msra.mxu0 0.0
      %1703 = vmatprep.subr.mxu0 0.0
      %1704 = vmatpush2.msra.mxu0 0.0
      %1705 = vmatprep.subr.mxu0 0.0
      %1706 = vmatpush2.msra.mxu0 0.0
      %1707 = vmatprep.subr.mxu0 0.0
      %1708 = vmatpush2.msra.mxu0 0.0
      %1709 = vmatprep.subr.mxu0 0.0
      %1710 = vmatpush2.msra.mxu0 0.0
      %1711 = vmatprep.subr.mxu0 0.0
      %1712 = vmatpush2.msra.mxu0 0.0
      %1713 = vmatprep.subr.mxu0 0.0
      %1714 = vmatpush2.msra.mxu0 0.0
      %1715 = vmatprep.subr.mxu0 0.0
      %1716 = vmatpush2.msra.mxu0 0.0
      %1717 = vmatprep.subr.mxu0 0.0
      %1718 = vmatpush2.msra.mxu0 0.0
      %1719 = vmatprep.subr.mxu0 0.0
      %1720 = vmatpush2.msra.mxu0 0.0
      %1721 = vmatprep.subr.mxu0 0.0
      %1722 = vmatpush2.msra.mxu0 0.0
      %1723 = vmatprep.mubr.f32.mxu0 0.0
      %1724 = vmatmul.mubr.f32.gmra.mxu0 %v1657
      %v1725 = vpop.f32.mrf.mxu0
      %v1726 = vadd.f32 %v1540, %v1725
      %v1727 = vpop.f32.mrf.mxu0
      %v1728 = vadd.f32 %v1542, %v1727
      %1729 = vdwg.mxu0
      %v1730 = vadd.f32 %v1726, %v942
      %v1731 = vadd.f32 %v1728, %v943
      %v1732 = vxor.u32 %v1730, 2147483648
      %v1733 = vxor.u32 %v1731, 2147483648
      %v1734 = vmul.f32 %v1732, 1.442695
      %v1735 = vpow.pop %v1734
      %v1736 = vmul.f32 %v1733, 1.442695
      %v1737 = vpow.pop %v1736
      %v1738 = vadd.f32 %v1735, 1.0
      %v1739 = vadd.f32 %v1737, 1.0
      %v1740 = vrcp.pop %v1738
      %v1741 = vmul.f32 1.0, %v1740
      %v1742 = vrcp.pop %v1739
      %v1743 = vmul.f32 1.0, %v1742
      %v1744 = vtanh.pop %v1731
      %v1745 = vmul.f32 %v1741, %v1463
      %1747 = vrot.lane.b32.xlu0 %v1744, 64
      %v1748 = vpop.permute.xlu0 %1747
      %v1750 = vmul.f32 %v1741, %v1748
      %1752 = vrot.lane.b32.xlu0 %v1750, 64
      %v1753 = vpop.permute.xlu0 %1752
      %v1755 = vadd.f32 %v1745, %v1753
      %v1756 = vtanh.pop %v1755
      %1758 = vrot.lane.b32.xlu0 %v1756, 64
      %v1759 = vpop.permute.xlu0 %1758
      %v1761 = vmul.f32 %v1743, %v1759
      %v1763 = vsel %vm964, %v1761, 0
      %1765 = vmatprep.subr.mxu0 0.0
      %1766 = vmatpush1.msra.mxu0 0.0
      %1767 = vmatprep.subr.mxu0 0.0
      %1768 = vmatpush1.msra.mxu0 0.0
      %1769 = vmatprep.subr.mxu0 0.0
      %1770 = vmatpush1.msra.mxu0 0.0
      %1771 = vmatprep.subr.mxu0 0.0
      %1772 = vmatpush1.msra.mxu0 0.0
      %1773 = vmatprep.subr.mxu0 0.0
      %1774 = vmatpush1.msra.mxu0 0.0
      %1775 = vmatprep.subr.mxu0 0.0
      %1776 = vmatpush1.msra.mxu0 0.0
      %1777 = vmatprep.subr.mxu0 0.0
      %1778 = vmatpush1.msra.mxu0 0.0
      %1779 = vmatprep.subr.mxu0 0.0
      %1780 = vmatpush1.msra.mxu0 0.0
      %1781 = vmatprep.subr.mxu0 %v941
      %1782 = vmatpush1.msra.mxu0 %v940
      %1783 = vmatprep.subr.mxu0 %v939
      %1784 = vmatpush1.msra.mxu0 %v938
      %1785 = vmatprep.subr.mxu0 %v937
      %1786 = vmatpush1.msra.mxu0 %v936
      %1787 = vmatprep.subr.mxu0 %v935
      %1788 = vmatpush1.msra.mxu0 %v934
      %1789 = vmatprep.subr.mxu0 %v933
      %1790 = vmatpush1.msra.mxu0 %v932
      %1791 = vmatprep.subr.mxu0 %v931
      %1792 = vmatpush1.msra.mxu0 %v930
      %1793 = vmatprep.subr.mxu0 %v929
      %1794 = vmatpush1.msra.mxu0 %v928
      %1795 = vmatprep.subr.mxu0 %v927
      %1796 = vmatpush1.msra.mxu0 %v926
      %1797 = vmatprep.subr.mxu0 0.0
      %1798 = vmatpush2.msra.mxu0 0.0
      %1799 = vmatprep.subr.mxu0 0.0
      %1800 = vmatpush2.msra.mxu0 0.0
      %1801 = vmatprep.subr.mxu0 0.0
      %1802 = vmatpush2.msra.mxu0 0.0
      %1803 = vmatprep.subr.mxu0 0.0
      %1804 = vmatpush2.msra.mxu0 0.0
      %1805 = vmatprep.subr.mxu0 0.0
      %1806 = vmatpush2.msra.mxu0 0.0
      %1807 = vmatprep.subr.mxu0 0.0
      %1808 = vmatpush2.msra.mxu0 0.0
      %1809 = vmatprep.subr.mxu0 0.0
      %1810 = vmatpush2.msra.mxu0 0.0
      %1811 = vmatprep.subr.mxu0 0.0
      %1812 = vmatpush2.msra.mxu0 0.0
      %1813 = vmatprep.subr.mxu0 0.0
      %1814 = vmatpush2.msra.mxu0 0.0
      %1815 = vmatprep.subr.mxu0 0.0
      %1816 = vmatpush2.msra.mxu0 0.0
      %1817 = vmatprep.subr.mxu0 0.0
      %1818 = vmatpush2.msra.mxu0 0.0
      %1819 = vmatprep.subr.mxu0 0.0
      %1820 = vmatpush2.msra.mxu0 0.0
      %1821 = vmatprep.subr.mxu0 0.0
      %1822 = vmatpush2.msra.mxu0 0.0
      %1823 = vmatprep.subr.mxu0 0.0
      %1824 = vmatpush2.msra.mxu0 0.0
      %1825 = vmatprep.subr.mxu0 0.0
      %1826 = vmatpush2.msra.mxu0 0.0
      %1827 = vmatprep.subr.mxu0 0.0
      %1828 = vmatpush2.msra.mxu0 0.0
      %1829 = vmatprep.mubr.f32.mxu0 0.0
      %1830 = vmatmul.mubr.f32.gmra.mxu0 %v1763
      %v1831 = vpop.f32.mrf.mxu0
      %v1832 = vadd.f32 0.0, %v1831
      %v1833 = vpop.f32.mrf.mxu0
      %v1834 = vadd.f32 0.0, %v1833
      %1835 = vdwg.mxu0
      %s1836 = sadd.s32 %s1251, 3
      %s1837 = smul.u32 %s1836, 8
      %s1838 = sshra.s32 %s1837, 3
      %s1839 = sand.u32 %s1837, 7
      %s1840 = smul.u32 %s1838, 2
      %s1841 = smul.addr %s1840, 8
      %s1842 = scalar_lea.vmem [#allocation2], %s1841
      %v1843 = vld [vmem:[%s1842] sm:$0xff]
      %v1844 = vld [vmem:[%s1842 + $0x8] sm:$0xff]
      %1845 = vmatprep.subr.mxu0 0.0
      %1846 = vmatpush1.msra.mxu0 0.0
      %1847 = vmatprep.subr.mxu0 0.0
      %1848 = vmatpush1.msra.mxu0 0.0
      %1849 = vmatprep.subr.mxu0 0.0
      %1850 = vmatpush1.msra.mxu0 0.0
      %1851 = vmatprep.subr.mxu0 0.0
      %1852 = vmatpush1.msra.mxu0 0.0
      %1853 = vmatprep.subr.mxu0 0.0
      %1854 = vmatpush1.msra.mxu0 0.0
      %1855 = vmatprep.subr.mxu0 0.0
      %1856 = vmatpush1.msra.mxu0 0.0
      %1857 = vmatprep.subr.mxu0 0.0
      %1858 = vmatpush1.msra.mxu0 0.0
      %1859 = vmatprep.subr.mxu0 0.0
      %1860 = vmatpush1.msra.mxu0 0.0
      %1861 = vmatprep.subr.mxu0 %v909
      %1862 = vmatpush1.msra.mxu0 %v908
      %1863 = vmatprep.subr.mxu0 %v907
      %1864 = vmatpush1.msra.mxu0 %v906
      %1865 = vmatprep.subr.mxu0 %v905
      %1866 = vmatpush1.msra.mxu0 %v904
      %1867 = vmatprep.subr.mxu0 %v903
      %1868 = vmatpush1.msra.mxu0 %v902
      %1869 = vmatprep.subr.mxu0 %v901
      %1870 = vmatpush1.msra.mxu0 %v900
      %1871 = vmatprep.subr.mxu0 %v899
      %1872 = vmatpush1.msra.mxu0 %v898
      %1873 = vmatprep.subr.mxu0 %v897
      %1874 = vmatpush1.msra.mxu0 %v896
      %1875 = vmatprep.subr.mxu0 %v895
      %1876 = vmatpush1.msra.mxu0 %v894
      %1877 = vmatprep.subr.mxu0 0.0
      %1878 = vmatpush2.msra.mxu0 0.0
      %1879 = vmatprep.subr.mxu0 0.0
      %1880 = vmatpush2.msra.mxu0 0.0
      %1881 = vmatprep.subr.mxu0 0.0
      %1882 = vmatpush2.msra.mxu0 0.0
      %1883 = vmatprep.subr.mxu0 0.0
      %1884 = vmatpush2.msra.mxu0 0.0
      %1885 = vmatprep.subr.mxu0 0.0
      %1886 = vmatpush2.msra.mxu0 0.0
      %1887 = vmatprep.subr.mxu0 0.0
      %1888 = vmatpush2.msra.mxu0 0.0
      %1889 = vmatprep.subr.mxu0 0.0
      %1890 = vmatpush2.msra.mxu0 0.0
      %1891 = vmatprep.subr.mxu0 0.0
      %1892 = vmatpush2.msra.mxu0 0.0
      %1893 = vmatprep.subr.mxu0 0.0
      %1894 = vmatpush2.msra.mxu0 0.0
      %1895 = vmatprep.subr.mxu0 0.0
      %1896 = vmatpush2.msra.mxu0 0.0
      %1897 = vmatprep.subr.mxu0 0.0
      %1898 = vmatpush2.msra.mxu0 0.0
      %1899 = vmatprep.subr.mxu0 0.0
      %1900 = vmatpush2.msra.mxu0 0.0
      %1901 = vmatprep.subr.mxu0 0.0
      %1902 = vmatpush2.msra.mxu0 0.0
      %1903 = vmatprep.subr.mxu0 0.0
      %1904 = vmatpush2.msra.mxu0 0.0
      %1905 = vmatprep.subr.mxu0 0.0
      %1906 = vmatpush2.msra.mxu0 0.0
      %1907 = vmatprep.subr.mxu0 0.0
      %1908 = vmatpush2.msra.mxu0 0.0
      %1909 = vmatprep.mubr.f32.mxu0 0.0
      %1910 = vmatmul.mubr.f32.gmra.mxu0 %v1657
      %v1911 = vpop.f32.mrf.mxu0
      %v1912 = vadd.f32 0.0, %v1911
      %v1913 = vpop.f32.mrf.mxu0
      %v1914 = vadd.f32 0.0, %v1913
      %1915 = vdwg.mxu0
      %v1916 = vadd.f32 %v1843, %v1912
      %v1917 = vadd.f32 %v1844, %v1914
      %v1918 = vxor.u32 %v1916, 2147483648
      %v1919 = vxor.u32 %v1917, 2147483648
      %v1920 = vmul.f32 %v1918, 1.442695
      %v1921 = vpow.pop %v1920
      %v1922 = vmul.f32 %v1919, 1.442695
      %v1923 = vpow.pop %v1922
      %v1924 = vadd.f32 %v1921, 1.0
      %v1925 = vadd.f32 %v1923, 1.0
      %v1926 = vrcp.pop %v1924
      %v1927 = vmul.f32 1.0, %v1926
      %v1928 = vrcp.pop %v1925
      %v1929 = vmul.f32 1.0, %v1928
      %v1930 = vtanh.pop %v1917
      %v1931 = vmul.f32 %v1927, %v1649
      %1933 = vrot.lane.b32.xlu0 %v1930, 64
      %v1934 = vpop.permute.xlu0 %1933
      %v1936 = vmul.f32 %v1927, %v1934
      %1938 = vrot.lane.b32.xlu0 %v1936, 64
      %v1939 = vpop.permute.xlu0 %1938
      %v1941 = vadd.f32 %v1931, %v1939
      %v1942 = vtanh.pop %v1941
      %1944 = vrot.lane.b32.xlu0 %v1942, 64
      %v1945 = vpop.permute.xlu0 %1944
      %v1947 = vmul.f32 %v1929, %v1945
      %v1949 = vsel %vm964, %v1947, 0
      %1951 = vmatprep.subr.mxu0 0.0
      %1952 = vmatpush1.msra.mxu0 0.0
      %1953 = vmatprep.subr.mxu0 0.0
      %1954 = vmatpush1.msra.mxu0 0.0
      %1955 = vmatprep.subr.mxu0 0.0
      %1956 = vmatpush1.msra.mxu0 0.0
      %1957 = vmatprep.subr.mxu0 0.0
      %1958 = vmatpush1.msra.mxu0 0.0
      %1959 = vmatprep.subr.mxu0 0.0
      %1960 = vmatpush1.msra.mxu0 0.0
      %1961 = vmatprep.subr.mxu0 0.0
      %1962 = vmatpush1.msra.mxu0 0.0
      %1963 = vmatprep.subr.mxu0 0.0
      %1964 = vmatpush1.msra.mxu0 0.0
      %1965 = vmatprep.subr.mxu0 0.0
      %1966 = vmatpush1.msra.mxu0 0.0
      %1967 = vmatprep.subr.mxu0 %v925
      %1968 = vmatpush1.msra.mxu0 %v924
      %1969 = vmatprep.subr.mxu0 %v923
      %1970 = vmatpush1.msra.mxu0 %v922
      %1971 = vmatprep.subr.mxu0 %v921
      %1972 = vmatpush1.msra.mxu0 %v920
      %1973 = vmatprep.subr.mxu0 %v919
      %1974 = vmatpush1.msra.mxu0 %v918
      %1975 = vmatprep.subr.mxu0 %v917
      %1976 = vmatpush1.msra.mxu0 %v916
      %1977 = vmatprep.subr.mxu0 %v915
      %1978 = vmatpush1.msra.mxu0 %v914
      %1979 = vmatprep.subr.mxu0 %v913
      %1980 = vmatpush1.msra.mxu0 %v912
      %1981 = vmatprep.subr.mxu0 %v911
      %1982 = vmatpush1.msra.mxu0 %v910
      %1983 = vmatprep.subr.mxu0 0.0
      %1984 = vmatpush2.msra.mxu0 0.0
      %1985 = vmatprep.subr.mxu0 0.0
      %1986 = vmatpush2.msra.mxu0 0.0
      %1987 = vmatprep.subr.mxu0 0.0
      %1988 = vmatpush2.msra.mxu0 0.0
      %1989 = vmatprep.subr.mxu0 0.0
      %1990 = vmatpush2.msra.mxu0 0.0
      %1991 = vmatprep.subr.mxu0 0.0
      %1992 = vmatpush2.msra.mxu0 0.0
      %1993 = vmatprep.subr.mxu0 0.0
      %1994 = vmatpush2.msra.mxu0 0.0
      %1995 = vmatprep.subr.mxu0 0.0
      %1996 = vmatpush2.msra.mxu0 0.0
      %1997 = vmatprep.subr.mxu0 0.0
      %1998 = vmatpush2.msra.mxu0 0.0
      %1999 = vmatprep.subr.mxu0 0.0
      %2000 = vmatpush2.msra.mxu0 0.0
      %2001 = vmatprep.subr.mxu0 0.0
      %2002 = vmatpush2.msra.mxu0 0.0
      %2003 = vmatprep.subr.mxu0 0.0
      %2004 = vmatpush2.msra.mxu0 0.0
      %2005 = vmatprep.subr.mxu0 0.0
      %2006 = vmatpush2.msra.mxu0 0.0
      %2007 = vmatprep.subr.mxu0 0.0
      %2008 = vmatpush2.msra.mxu0 0.0
      %2009 = vmatprep.subr.mxu0 0.0
      %2010 = vmatpush2.msra.mxu0 0.0
      %2011 = vmatprep.subr.mxu0 0.0
      %2012 = vmatpush2.msra.mxu0 0.0
      %2013 = vmatprep.subr.mxu0 0.0
      %2014 = vmatpush2.msra.mxu0 0.0
      %2015 = vmatprep.mubr.f32.mxu0 0.0
      %2016 = vmatmul.mubr.f32.gmra.mxu0 %v1949
      %v2017 = vpop.f32.mrf.mxu0
      %v2018 = vadd.f32 %v1832, %v2017
      %v2019 = vpop.f32.mrf.mxu0
      %v2020 = vadd.f32 %v1834, %v2019
      %2021 = vdwg.mxu0
      %v2022 = vadd.f32 %v2018, %v942
      %v2023 = vadd.f32 %v2020, %v943
      %v2024 = vxor.u32 %v2022, 2147483648
      %v2025 = vxor.u32 %v2023, 2147483648
      %v2026 = vmul.f32 %v2024, 1.442695
      %v2027 = vpow.pop %v2026
      %v2028 = vmul.f32 %v2025, 1.442695
      %v2029 = vpow.pop %v2028
      %v2030 = vadd.f32 %v2027, 1.0
      %v2031 = vadd.f32 %v2029, 1.0
      %v2032 = vrcp.pop %v2030
      %v2033 = vmul.f32 1.0, %v2032
      %v2034 = vrcp.pop %v2031
      %v2035 = vmul.f32 1.0, %v2034
      %v2036 = vtanh.pop %v2023
      %v2037 = vmul.f32 %v2033, %v1755
      %2039 = vrot.lane.b32.xlu0 %v2036, 64
      %v2040 = vpop.permute.xlu0 %2039
      %v2042 = vmul.f32 %v2033, %v2040
      %2044 = vrot.lane.b32.xlu0 %v2042, 64
      %v2045 = vpop.permute.xlu0 %2044
      %v2047 = vadd.f32 %v2037, %v2045
      %v2048 = vtanh.pop %v2047
      %2050 = vrot.lane.b32.xlu0 %v2048, 64
      %v2051 = vpop.permute.xlu0 %2050
      %v2053 = vmul.f32 %v2035, %v2051
      %v2055 = vsel %vm964, %v2053, 0
      %2057 = vmatprep.subr.mxu0 0.0
      %2058 = vmatpush1.msra.mxu0 0.0
      %2059 = vmatprep.subr.mxu0 0.0
      %2060 = vmatpush1.msra.mxu0 0.0
      %2061 = vmatprep.subr.mxu0 0.0
      %2062 = vmatpush1.msra.mxu0 0.0
      %2063 = vmatprep.subr.mxu0 0.0
      %2064 = vmatpush1.msra.mxu0 0.0
      %2065 = vmatprep.subr.mxu0 0.0
      %2066 = vmatpush1.msra.mxu0 0.0
      %2067 = vmatprep.subr.mxu0 0.0
      %2068 = vmatpush1.msra.mxu0 0.0
      %2069 = vmatprep.subr.mxu0 0.0
      %2070 = vmatpush1.msra.mxu0 0.0
      %2071 = vmatprep.subr.mxu0 0.0
      %2072 = vmatpush1.msra.mxu0 0.0
      %2073 = vmatprep.subr.mxu0 %v941
      %2074 = vmatpush1.msra.mxu0 %v940
      %2075 = vmatprep.subr.mxu0 %v939
      %2076 = vmatpush1.msra.mxu0 %v938
      %2077 = vmatprep.subr.mxu0 %v937
      %2078 = vmatpush1.msra.mxu0 %v936
      %2079 = vmatprep.subr.mxu0 %v935
      %2080 = vmatpush1.msra.mxu0 %v934
      %2081 = vmatprep.subr.mxu0 %v933
      %2082 = vmatpush1.msra.mxu0 %v932
      %2083 = vmatprep.subr.mxu0 %v931
      %2084 = vmatpush1.msra.mxu0 %v930
      %2085 = vmatprep.subr.mxu0 %v929
      %2086 = vmatpush1.msra.mxu0 %v928
      %2087 = vmatprep.subr.mxu0 %v927
      %2088 = vmatpush1.msra.mxu0 %v926
      %2089 = vmatprep.subr.mxu0 0.0
      %2090 = vmatpush2.msra.mxu0 0.0
      %2091 = vmatprep.subr.mxu0 0.0
      %2092 = vmatpush2.msra.mxu0 0.0
      %2093 = vmatprep.subr.mxu0 0.0
      %2094 = vmatpush2.msra.mxu0 0.0
      %2095 = vmatprep.subr.mxu0 0.0
      %2096 = vmatpush2.msra.mxu0 0.0
      %2097 = vmatprep.subr.mxu0 0.0
      %2098 = vmatpush2.msra.mxu0 0.0
      %2099 = vmatprep.subr.mxu0 0.0
      %2100 = vmatpush2.msra.mxu0 0.0
      %2101 = vmatprep.subr.mxu0 0.0
      %2102 = vmatpush2.msra.mxu0 0.0
      %2103 = vmatprep.subr.mxu0 0.0
      %2104 = vmatpush2.msra.mxu0 0.0
      %2105 = vmatprep.subr.mxu0 0.0
      %2106 = vmatpush2.msra.mxu0 0.0
      %2107 = vmatprep.subr.mxu0 0.0
      %2108 = vmatpush2.msra.mxu0 0.0
      %2109 = vmatprep.subr.mxu0 0.0
      %2110 = vmatpush2.msra.mxu0 0.0
      %2111 = vmatprep.subr.mxu0 0.0
      %2112 = vmatpush2.msra.mxu0 0.0
      %2113 = vmatprep.subr.mxu0 0.0
      %2114 = vmatpush2.msra.mxu0 0.0
      %2115 = vmatprep.subr.mxu0 0.0
      %2116 = vmatpush2.msra.mxu0 0.0
      %2117 = vmatprep.subr.mxu0 0.0
      %2118 = vmatpush2.msra.mxu0 0.0
      %2119 = vmatprep.subr.mxu0 0.0
      %2120 = vmatpush2.msra.mxu0 0.0
      %2121 = vmatprep.mubr.f32.mxu0 0.0
      %2122 = vmatmul.mubr.f32.gmra.mxu0 %v2055
      %v2123 = vpop.f32.mrf.mxu0
      %v2124 = vadd.f32 0.0, %v2123
      %v2125 = vpop.f32.mrf.mxu0
      %v2126 = vadd.f32 0.0, %v2125
      %2127 = vdwg.mxu0
      %s2128 = sadd.s32 %s1251, 4
      %s2129 = smul.u32 %s2128, 8
      %s2130 = sshra.s32 %s2129, 3
      %s2131 = sand.u32 %s2129, 7
      %s2132 = smul.u32 %s2130, 2
      %s2133 = smul.addr %s2132, 8
      %s2134 = scalar_lea.vmem [#allocation2], %s2133
      %v2135 = vld [vmem:[%s2134] sm:$0xff]
      %v2136 = vld [vmem:[%s2134 + $0x8] sm:$0xff]
      %2137 = vmatprep.subr.mxu0 0.0
      %2138 = vmatpush1.msra.mxu0 0.0
      %2139 = vmatprep.subr.mxu0 0.0
      %2140 = vmatpush1.msra.mxu0 0.0
      %2141 = vmatprep.subr.mxu0 0.0
      %2142 = vmatpush1.msra.mxu0 0.0
      %2143 = vmatprep.subr.mxu0 0.0
      %2144 = vmatpush1.msra.mxu0 0.0
      %2145 = vmatprep.subr.mxu0 0.0
      %2146 = vmatpush1.msra.mxu0 0.0
      %2147 = vmatprep.subr.mxu0 0.0
      %2148 = vmatpush1.msra.mxu0 0.0
      %2149 = vmatprep.subr.mxu0 0.0
      %2150 = vmatpush1.msra.mxu0 0.0
      %2151 = vmatprep.subr.mxu0 0.0
      %2152 = vmatpush1.msra.mxu0 0.0
      %2153 = vmatprep.subr.mxu0 %v909
      %2154 = vmatpush1.msra.mxu0 %v908
      %2155 = vmatprep.subr.mxu0 %v907
      %2156 = vmatpush1.msra.mxu0 %v906
      %2157 = vmatprep.subr.mxu0 %v905
      %2158 = vmatpush1.msra.mxu0 %v904
      %2159 = vmatprep.subr.mxu0 %v903
      %2160 = vmatpush1.msra.mxu0 %v902
      %2161 = vmatprep.subr.mxu0 %v901
      %2162 = vmatpush1.msra.mxu0 %v900
      %2163 = vmatprep.subr.mxu0 %v899
      %2164 = vmatpush1.msra.mxu0 %v898
      %2165 = vmatprep.subr.mxu0 %v897
      %2166 = vmatpush1.msra.mxu0 %v896
      %2167 = vmatprep.subr.mxu0 %v895
      %2168 = vmatpush1.msra.mxu0 %v894
      %2169 = vmatprep.subr.mxu0 0.0
      %2170 = vmatpush2.msra.mxu0 0.0
      %2171 = vmatprep.subr.mxu0 0.0
      %2172 = vmatpush2.msra.mxu0 0.0
      %2173 = vmatprep.subr.mxu0 0.0
      %2174 = vmatpush2.msra.mxu0 0.0
      %2175 = vmatprep.subr.mxu0 0.0
      %2176 = vmatpush2.msra.mxu0 0.0
      %2177 = vmatprep.subr.mxu0 0.0
      %2178 = vmatpush2.msra.mxu0 0.0
      %2179 = vmatprep.subr.mxu0 0.0
      %2180 = vmatpush2.msra.mxu0 0.0
      %2181 = vmatprep.subr.mxu0 0.0
      %2182 = vmatpush2.msra.mxu0 0.0
      %2183 = vmatprep.subr.mxu0 0.0
      %2184 = vmatpush2.msra.mxu0 0.0
      %2185 = vmatprep.subr.mxu0 0.0
      %2186 = vmatpush2.msra.mxu0 0.0
      %2187 = vmatprep.subr.mxu0 0.0
      %2188 = vmatpush2.msra.mxu0 0.0
      %2189 = vmatprep.subr.mxu0 0.0
      %2190 = vmatpush2.msra.mxu0 0.0
      %2191 = vmatprep.subr.mxu0 0.0
      %2192 = vmatpush2.msra.mxu0 0.0
      %2193 = vmatprep.subr.mxu0 0.0
      %2194 = vmatpush2.msra.mxu0 0.0
      %2195 = vmatprep.subr.mxu0 0.0
      %2196 = vmatpush2.msra.mxu0 0.0
      %2197 = vmatprep.subr.mxu0 0.0
      %2198 = vmatpush2.msra.mxu0 0.0
      %2199 = vmatprep.subr.mxu0 0.0
      %2200 = vmatpush2.msra.mxu0 0.0
      %2201 = vmatprep.mubr.f32.mxu0 0.0
      %2202 = vmatmul.mubr.f32.gmra.mxu0 %v1949
      %v2203 = vpop.f32.mrf.mxu0
      %v2204 = vadd.f32 0.0, %v2203
      %v2205 = vpop.f32.mrf.mxu0
      %v2206 = vadd.f32 0.0, %v2205
      %2207 = vdwg.mxu0
      %v2208 = vadd.f32 %v2135, %v2204
      %v2209 = vadd.f32 %v2136, %v2206
      %v2210 = vxor.u32 %v2208, 2147483648
      %v2211 = vxor.u32 %v2209, 2147483648
      %v2212 = vmul.f32 %v2210, 1.442695
      %v2213 = vpow.pop %v2212
      %v2214 = vmul.f32 %v2211, 1.442695
      %v2215 = vpow.pop %v2214
      %v2216 = vadd.f32 %v2213, 1.0
      %v2217 = vadd.f32 %v2215, 1.0
      %v2218 = vrcp.pop %v2216
      %v2219 = vmul.f32 1.0, %v2218
      %v2220 = vrcp.pop %v2217
      %v2221 = vmul.f32 1.0, %v2220
      %v2222 = vtanh.pop %v2209
      %v2223 = vmul.f32 %v2219, %v1941
      %2225 = vrot.lane.b32.xlu0 %v2222, 64
      %v2226 = vpop.permute.xlu0 %2225
      %v2228 = vmul.f32 %v2219, %v2226
      %2230 = vrot.lane.b32.xlu0 %v2228, 64
      %v2231 = vpop.permute.xlu0 %2230
      %v2233 = vadd.f32 %v2223, %v2231
      %v2234 = vtanh.pop %v2233
      %2236 = vrot.lane.b32.xlu0 %v2234, 64
      %v2237 = vpop.permute.xlu0 %2236
      %v2239 = vmul.f32 %v2221, %v2237
      %v2241 = vsel %vm964, %v2239, 0
      %2243 = vmatprep.subr.mxu0 0.0
      %2244 = vmatpush1.msra.mxu0 0.0
      %2245 = vmatprep.subr.mxu0 0.0
      %2246 = vmatpush1.msra.mxu0 0.0
      %2247 = vmatprep.subr.mxu0 0.0
      %2248 = vmatpush1.msra.mxu0 0.0
      %2249 = vmatprep.subr.mxu0 0.0
      %2250 = vmatpush1.msra.mxu0 0.0
      %2251 = vmatprep.subr.mxu0 0.0
      %2252 = vmatpush1.msra.mxu0 0.0
      %2253 = vmatprep.subr.mxu0 0.0
      %2254 = vmatpush1.msra.mxu0 0.0
      %2255 = vmatprep.subr.mxu0 0.0
      %2256 = vmatpush1.msra.mxu0 0.0
      %2257 = vmatprep.subr.mxu0 0.0
      %2258 = vmatpush1.msra.mxu0 0.0
      %2259 = vmatprep.subr.mxu0 %v925
      %2260 = vmatpush1.msra.mxu0 %v924
      %2261 = vmatprep.subr.mxu0 %v923
      %2262 = vmatpush1.msra.mxu0 %v922
      %2263 = vmatprep.subr.mxu0 %v921
      %2264 = vmatpush1.msra.mxu0 %v920
      %2265 = vmatprep.subr.mxu0 %v919
      %2266 = vmatpush1.msra.mxu0 %v918
      %2267 = vmatprep.subr.mxu0 %v917
      %2268 = vmatpush1.msra.mxu0 %v916
      %2269 = vmatprep.subr.mxu0 %v915
      %2270 = vmatpush1.msra.mxu0 %v914
      %2271 = vmatprep.subr.mxu0 %v913
      %2272 = vmatpush1.msra.mxu0 %v912
      %2273 = vmatprep.subr.mxu0 %v911
      %2274 = vmatpush1.msra.mxu0 %v910
      %2275 = vmatprep.subr.mxu0 0.0
      %2276 = vmatpush2.msra.mxu0 0.0
      %2277 = vmatprep.subr.mxu0 0.0
      %2278 = vmatpush2.msra.mxu0 0.0
      %2279 = vmatprep.subr.mxu0 0.0
      %2280 = vmatpush2.msra.mxu0 0.0
      %2281 = vmatprep.subr.mxu0 0.0
      %2282 = vmatpush2.msra.mxu0 0.0
      %2283 = vmatprep.subr.mxu0 0.0
      %2284 = vmatpush2.msra.mxu0 0.0
      %2285 = vmatprep.subr.mxu0 0.0
      %2286 = vmatpush2.msra.mxu0 0.0
      %2287 = vmatprep.subr.mxu0 0.0
      %2288 = vmatpush2.msra.mxu0 0.0
      %2289 = vmatprep.subr.mxu0 0.0
      %2290 = vmatpush2.msra.mxu0 0.0
      %2291 = vmatprep.subr.mxu0 0.0
      %2292 = vmatpush2.msra.mxu0 0.0
      %2293 = vmatprep.subr.mxu0 0.0
      %2294 = vmatpush2.msra.mxu0 0.0
      %2295 = vmatprep.subr.mxu0 0.0
      %2296 = vmatpush2.msra.mxu0 0.0
      %2297 = vmatprep.subr.mxu0 0.0
      %2298 = vmatpush2.msra.mxu0 0.0
      %2299 = vmatprep.subr.mxu0 0.0
      %2300 = vmatpush2.msra.mxu0 0.0
      %2301 = vmatprep.subr.mxu0 0.0
      %2302 = vmatpush2.msra.mxu0 0.0
      %2303 = vmatprep.subr.mxu0 0.0
      %2304 = vmatpush2.msra.mxu0 0.0
      %2305 = vmatprep.subr.mxu0 0.0
      %2306 = vmatpush2.msra.mxu0 0.0
      %2307 = vmatprep.mubr.f32.mxu0 0.0
      %2308 = vmatmul.mubr.f32.gmra.mxu0 %v2241
      %v2309 = vpop.f32.mrf.mxu0
      %v2310 = vadd.f32 %v2124, %v2309
      %v2311 = vpop.f32.mrf.mxu0
      %v2312 = vadd.f32 %v2126, %v2311
      %2313 = vdwg.mxu0
      %v2314 = vadd.f32 %v2310, %v942
      %v2315 = vadd.f32 %v2312, %v943
      %v2316 = vxor.u32 %v2314, 2147483648
      %v2317 = vxor.u32 %v2315, 2147483648
      %v2318 = vmul.f32 %v2316, 1.442695
      %v2319 = vpow.pop %v2318
      %v2320 = vmul.f32 %v2317, 1.442695
      %v2321 = vpow.pop %v2320
      %v2322 = vadd.f32 %v2319, 1.0
      %v2323 = vadd.f32 %v2321, 1.0
      %v2324 = vrcp.pop %v2322
      %v2325 = vmul.f32 1.0, %v2324
      %v2326 = vrcp.pop %v2323
      %v2327 = vmul.f32 1.0, %v2326
      %v2328 = vtanh.pop %v2315
      %v2329 = vmul.f32 %v2325, %v2047
      %2331 = vrot.lane.b32.xlu0 %v2328, 64
      %v2332 = vpop.permute.xlu0 %2331
      %v2334 = vmul.f32 %v2325, %v2332
      %2336 = vrot.lane.b32.xlu0 %v2334, 64
      %v2337 = vpop.permute.xlu0 %2336
      %v2339 = vadd.f32 %v2329, %v2337
      %v2340 = vtanh.pop %v2339
      %2342 = vrot.lane.b32.xlu0 %v2340, 64
      %v2343 = vpop.permute.xlu0 %2342
      %v2345 = vmul.f32 %v2327, %v2343
      %v2347 = vsel %vm964, %v2345, 0
      %2349 = vmatprep.subr.mxu0 0.0
      %2350 = vmatpush1.msra.mxu0 0.0
      %2351 = vmatprep.subr.mxu0 0.0
      %2352 = vmatpush1.msra.mxu0 0.0
      %2353 = vmatprep.subr.mxu0 0.0
      %2354 = vmatpush1.msra.mxu0 0.0
      %2355 = vmatprep.subr.mxu0 0.0
      %2356 = vmatpush1.msra.mxu0 0.0
      %2357 = vmatprep.subr.mxu0 0.0
      %2358 = vmatpush1.msra.mxu0 0.0
      %2359 = vmatprep.subr.mxu0 0.0
      %2360 = vmatpush1.msra.mxu0 0.0
      %2361 = vmatprep.subr.mxu0 0.0
      %2362 = vmatpush1.msra.mxu0 0.0
      %2363 = vmatprep.subr.mxu0 0.0
      %2364 = vmatpush1.msra.mxu0 0.0
      %2365 = vmatprep.subr.mxu0 %v941
      %2366 = vmatpush1.msra.mxu0 %v940
      %2367 = vmatprep.subr.mxu0 %v939
      %2368 = vmatpush1.msra.mxu0 %v938
      %2369 = vmatprep.subr.mxu0 %v937
      %2370 = vmatpush1.msra.mxu0 %v936
      %2371 = vmatprep.subr.mxu0 %v935
      %2372 = vmatpush1.msra.mxu0 %v934
      %2373 = vmatprep.subr.mxu0 %v933
      %2374 = vmatpush1.msra.mxu0 %v932
      %2375 = vmatprep.subr.mxu0 %v931
      %2376 = vmatpush1.msra.mxu0 %v930
      %2377 = vmatprep.subr.mxu0 %v929
      %2378 = vmatpush1.msra.mxu0 %v928
      %2379 = vmatprep.subr.mxu0 %v927
      %2380 = vmatpush1.msra.mxu0 %v926
      %2381 = vmatprep.subr.mxu0 0.0
      %2382 = vmatpush2.msra.mxu0 0.0
      %2383 = vmatprep.subr.mxu0 0.0
      %2384 = vmatpush2.msra.mxu0 0.0
      %2385 = vmatprep.subr.mxu0 0.0
      %2386 = vmatpush2.msra.mxu0 0.0
      %2387 = vmatprep.subr.mxu0 0.0
      %2388 = vmatpush2.msra.mxu0 0.0
      %2389 = vmatprep.subr.mxu0 0.0
      %2390 = vmatpush2.msra.mxu0 0.0
      %2391 = vmatprep.subr.mxu0 0.0
      %2392 = vmatpush2.msra.mxu0 0.0
      %2393 = vmatprep.subr.mxu0 0.0
      %2394 = vmatpush2.msra.mxu0 0.0
      %2395 = vmatprep.subr.mxu0 0.0
      %2396 = vmatpush2.msra.mxu0 0.0
      %2397 = vmatprep.subr.mxu0 0.0
      %2398 = vmatpush2.msra.mxu0 0.0
      %2399 = vmatprep.subr.mxu0 0.0
      %2400 = vmatpush2.msra.mxu0 0.0
      %2401 = vmatprep.subr.mxu0 0.0
      %2402 = vmatpush2.msra.mxu0 0.0
      %2403 = vmatprep.subr.mxu0 0.0
      %2404 = vmatpush2.msra.mxu0 0.0
      %2405 = vmatprep.subr.mxu0 0.0
      %2406 = vmatpush2.msra.mxu0 0.0
      %2407 = vmatprep.subr.mxu0 0.0
      %2408 = vmatpush2.msra.mxu0 0.0
      %2409 = vmatprep.subr.mxu0 0.0
      %2410 = vmatpush2.msra.mxu0 0.0
      %2411 = vmatprep.subr.mxu0 0.0
      %2412 = vmatpush2.msra.mxu0 0.0
      %2413 = vmatprep.mubr.f32.mxu0 0.0
      %2414 = vmatmul.mubr.f32.gmra.mxu0 %v2347
      %v2415 = vpop.f32.mrf.mxu0
      %v2416 = vadd.f32 0.0, %v2415
      %v2417 = vpop.f32.mrf.mxu0
      %v2418 = vadd.f32 0.0, %v2417
      %2419 = vdwg.mxu0
      %s2420 = sadd.s32 %s1251, 5
      %s2421 = smul.u32 %s2420, 8
      %s2422 = sshra.s32 %s2421, 3
      %s2423 = sand.u32 %s2421, 7
      %s2424 = smul.u32 %s2422, 2
      %s2425 = smul.addr %s2424, 8
      %s2426 = scalar_lea.vmem [#allocation2], %s2425
      %v2427 = vld [vmem:[%s2426] sm:$0xff]
      %v2428 = vld [vmem:[%s2426 + $0x8] sm:$0xff]
      %2429 = vmatprep.subr.mxu0 0.0
      %2430 = vmatpush1.msra.mxu0 0.0
      %2431 = vmatprep.subr.mxu0 0.0
      %2432 = vmatpush1.msra.mxu0 0.0
      %2433 = vmatprep.subr.mxu0 0.0
      %2434 = vmatpush1.msra.mxu0 0.0
      %2435 = vmatprep.subr.mxu0 0.0
      %2436 = vmatpush1.msra.mxu0 0.0
      %2437 = vmatprep.subr.mxu0 0.0
      %2438 = vmatpush1.msra.mxu0 0.0
      %2439 = vmatprep.subr.mxu0 0.0
      %2440 = vmatpush1.msra.mxu0 0.0
      %2441 = vmatprep.subr.mxu0 0.0
      %2442 = vmatpush1.msra.mxu0 0.0
      %2443 = vmatprep.subr.mxu0 0.0
      %2444 = vmatpush1.msra.mxu0 0.0
      %2445 = vmatprep.subr.mxu0 %v909
      %2446 = vmatpush1.msra.mxu0 %v908
      %2447 = vmatprep.subr.mxu0 %v907
      %2448 = vmatpush1.msra.mxu0 %v906
      %2449 = vmatprep.subr.mxu0 %v905
      %2450 = vmatpush1.msra.mxu0 %v904
      %2451 = vmatprep.subr.mxu0 %v903
      %2452 = vmatpush1.msra.mxu0 %v902
      %2453 = vmatprep.subr.mxu0 %v901
      %2454 = vmatpush1.msra.mxu0 %v900
      %2455 = vmatprep.subr.mxu0 %v899
      %2456 = vmatpush1.msra.mxu0 %v898
      %2457 = vmatprep.subr.mxu0 %v897
      %2458 = vmatpush1.msra.mxu0 %v896
      %2459 = vmatprep.subr.mxu0 %v895
      %2460 = vmatpush1.msra.mxu0 %v894
      %2461 = vmatprep.subr.mxu0 0.0
      %2462 = vmatpush2.msra.mxu0 0.0
      %2463 = vmatprep.subr.mxu0 0.0
      %2464 = vmatpush2.msra.mxu0 0.0
      %2465 = vmatprep.subr.mxu0 0.0
      %2466 = vmatpush2.msra.mxu0 0.0
      %2467 = vmatprep.subr.mxu0 0.0
      %2468 = vmatpush2.msra.mxu0 0.0
      %2469 = vmatprep.subr.mxu0 0.0
      %2470 = vmatpush2.msra.mxu0 0.0
      %2471 = vmatprep.subr.mxu0 0.0
      %2472 = vmatpush2.msra.mxu0 0.0
      %2473 = vmatprep.subr.mxu0 0.0
      %2474 = vmatpush2.msra.mxu0 0.0
      %2475 = vmatprep.subr.mxu0 0.0
      %2476 = vmatpush2.msra.mxu0 0.0
      %2477 = vmatprep.subr.mxu0 0.0
      %2478 = vmatpush2.msra.mxu0 0.0
      %2479 = vmatprep.subr.mxu0 0.0
      %2480 = vmatpush2.msra.mxu0 0.0
      %2481 = vmatprep.subr.mxu0 0.0
      %2482 = vmatpush2.msra.mxu0 0.0
      %2483 = vmatprep.subr.mxu0 0.0
      %2484 = vmatpush2.msra.mxu0 0.0
      %2485 = vmatprep.subr.mxu0 0.0
      %2486 = vmatpush2.msra.mxu0 0.0
      %2487 = vmatprep.subr.mxu0 0.0
      %2488 = vmatpush2.msra.mxu0 0.0
      %2489 = vmatprep.subr.mxu0 0.0
      %2490 = vmatpush2.msra.mxu0 0.0
      %2491 = vmatprep.subr.mxu0 0.0
      %2492 = vmatpush2.msra.mxu0 0.0
      %2493 = vmatprep.mubr.f32.mxu0 0.0
      %2494 = vmatmul.mubr.f32.gmra.mxu0 %v2241
      %v2495 = vpop.f32.mrf.mxu0
      %v2496 = vadd.f32 0.0, %v2495
      %v2497 = vpop.f32.mrf.mxu0
      %v2498 = vadd.f32 0.0, %v2497
      %2499 = vdwg.mxu0
      %v2500 = vadd.f32 %v2427, %v2496
      %v2501 = vadd.f32 %v2428, %v2498
      %v2502 = vxor.u32 %v2500, 2147483648
      %v2503 = vxor.u32 %v2501, 2147483648
      %v2504 = vmul.f32 %v2502, 1.442695
      %v2505 = vpow.pop %v2504
      %v2506 = vmul.f32 %v2503, 1.442695
      %v2507 = vpow.pop %v2506
      %v2508 = vadd.f32 %v2505, 1.0
      %v2509 = vadd.f32 %v2507, 1.0
      %v2510 = vrcp.pop %v2508
      %v2511 = vmul.f32 1.0, %v2510
      %v2512 = vrcp.pop %v2509
      %v2513 = vmul.f32 1.0, %v2512
      %v2514 = vtanh.pop %v2501
      %v2515 = vmul.f32 %v2511, %v2233
      %2517 = vrot.lane.b32.xlu0 %v2514, 64
      %v2518 = vpop.permute.xlu0 %2517
      %v2520 = vmul.f32 %v2511, %v2518
      %2522 = vrot.lane.b32.xlu0 %v2520, 64
      %v2523 = vpop.permute.xlu0 %2522
      %v2525 = vadd.f32 %v2515, %v2523
      %v2526 = vtanh.pop %v2525
      %2528 = vrot.lane.b32.xlu0 %v2526, 64
      %v2529 = vpop.permute.xlu0 %2528
      %v2531 = vmul.f32 %v2513, %v2529
      %v2533 = vsel %vm964, %v2531, 0
      %2535 = vmatprep.subr.mxu0 0.0
      %2536 = vmatpush1.msra.mxu0 0.0
      %2537 = vmatprep.subr.mxu0 0.0
      %2538 = vmatpush1.msra.mxu0 0.0
      %2539 = vmatprep.subr.mxu0 0.0
      %2540 = vmatpush1.msra.mxu0 0.0
      %2541 = vmatprep.subr.mxu0 0.0
      %2542 = vmatpush1.msra.mxu0 0.0
      %2543 = vmatprep.subr.mxu0 0.0
      %2544 = vmatpush1.msra.mxu0 0.0
      %2545 = vmatprep.subr.mxu0 0.0
      %2546 = vmatpush1.msra.mxu0 0.0
      %2547 = vmatprep.subr.mxu0 0.0
      %2548 = vmatpush1.msra.mxu0 0.0
      %2549 = vmatprep.subr.mxu0 0.0
      %2550 = vmatpush1.msra.mxu0 0.0
      %2551 = vmatprep.subr.mxu0 %v925
      %2552 = vmatpush1.msra.mxu0 %v924
      %2553 = vmatprep.subr.mxu0 %v923
      %2554 = vmatpush1.msra.mxu0 %v922
      %2555 = vmatprep.subr.mxu0 %v921
      %2556 = vmatpush1.msra.mxu0 %v920
      %2557 = vmatprep.subr.mxu0 %v919
      %2558 = vmatpush1.msra.mxu0 %v918
      %2559 = vmatprep.subr.mxu0 %v917
      %2560 = vmatpush1.msra.mxu0 %v916
      %2561 = vmatprep.subr.mxu0 %v915
      %2562 = vmatpush1.msra.mxu0 %v914
      %2563 = vmatprep.subr.mxu0 %v913
      %2564 = vmatpush1.msra.mxu0 %v912
      %2565 = vmatprep.subr.mxu0 %v911
      %2566 = vmatpush1.msra.mxu0 %v910
      %2567 = vmatprep.subr.mxu0 0.0
      %2568 = vmatpush2.msra.mxu0 0.0
      %2569 = vmatprep.subr.mxu0 0.0
      %2570 = vmatpush2.msra.mxu0 0.0
      %2571 = vmatprep.subr.mxu0 0.0
      %2572 = vmatpush2.msra.mxu0 0.0
      %2573 = vmatprep.subr.mxu0 0.0
      %2574 = vmatpush2.msra.mxu0 0.0
      %2575 = vmatprep.subr.mxu0 0.0
      %2576 = vmatpush2.msra.mxu0 0.0
      %2577 = vmatprep.subr.mxu0 0.0
      %2578 = vmatpush2.msra.mxu0 0.0
      %2579 = vmatprep.subr.mxu0 0.0
      %2580 = vmatpush2.msra.mxu0 0.0
      %2581 = vmatprep.subr.mxu0 0.0
      %2582 = vmatpush2.msra.mxu0 0.0
      %2583 = vmatprep.subr.mxu0 0.0
      %2584 = vmatpush2.msra.mxu0 0.0
      %2585 = vmatprep.subr.mxu0 0.0
      %2586 = vmatpush2.msra.mxu0 0.0
      %2587 = vmatprep.subr.mxu0 0.0
      %2588 = vmatpush2.msra.mxu0 0.0
      %2589 = vmatprep.subr.mxu0 0.0
      %2590 = vmatpush2.msra.mxu0 0.0
      %2591 = vmatprep.subr.mxu0 0.0
      %2592 = vmatpush2.msra.mxu0 0.0
      %2593 = vmatprep.subr.mxu0 0.0
      %2594 = vmatpush2.msra.mxu0 0.0
      %2595 = vmatprep.subr.mxu0 0.0
      %2596 = vmatpush2.msra.mxu0 0.0
      %2597 = vmatprep.subr.mxu0 0.0
      %2598 = vmatpush2.msra.mxu0 0.0
      %2599 = vmatprep.mubr.f32.mxu0 0.0
      %2600 = vmatmul.mubr.f32.gmra.mxu0 %v2533
      %v2601 = vpop.f32.mrf.mxu0
      %v2602 = vadd.f32 %v2416, %v2601
      %v2603 = vpop.f32.mrf.mxu0
      %v2604 = vadd.f32 %v2418, %v2603
      %2605 = vdwg.mxu0
      %v2606 = vadd.f32 %v2602, %v942
      %v2607 = vadd.f32 %v2604, %v943
      %v2608 = vxor.u32 %v2606, 2147483648
      %v2609 = vxor.u32 %v2607, 2147483648
      %v2610 = vmul.f32 %v2608, 1.442695
      %v2611 = vpow.pop %v2610
      %v2612 = vmul.f32 %v2609, 1.442695
      %v2613 = vpow.pop %v2612
      %v2614 = vadd.f32 %v2611, 1.0
      %v2615 = vadd.f32 %v2613, 1.0
      %v2616 = vrcp.pop %v2614
      %v2617 = vmul.f32 1.0, %v2616
      %v2618 = vrcp.pop %v2615
      %v2619 = vmul.f32 1.0, %v2618
      %v2620 = vtanh.pop %v2607
      %v2621 = vmul.f32 %v2617, %v2339
      %2623 = vrot.lane.b32.xlu0 %v2620, 64
      %v2624 = vpop.permute.xlu0 %2623
      %v2626 = vmul.f32 %v2617, %v2624
      %2628 = vrot.lane.b32.xlu0 %v2626, 64
      %v2629 = vpop.permute.xlu0 %2628
      %v2631 = vadd.f32 %v2621, %v2629
      %v2632 = vtanh.pop %v2631
      %2634 = vrot.lane.b32.xlu0 %v2632, 64
      %v2635 = vpop.permute.xlu0 %2634
      %v2637 = vmul.f32 %v2619, %v2635
      %v2639 = vsel %vm964, %v2637, 0
      %2641 = vmatprep.subr.mxu0 0.0
      %2642 = vmatpush1.msra.mxu0 0.0
      %2643 = vmatprep.subr.mxu0 0.0
      %2644 = vmatpush1.msra.mxu0 0.0
      %2645 = vmatprep.subr.mxu0 0.0
      %2646 = vmatpush1.msra.mxu0 0.0
      %2647 = vmatprep.subr.mxu0 0.0
      %2648 = vmatpush1.msra.mxu0 0.0
      %2649 = vmatprep.subr.mxu0 0.0
      %2650 = vmatpush1.msra.mxu0 0.0
      %2651 = vmatprep.subr.mxu0 0.0
      %2652 = vmatpush1.msra.mxu0 0.0
      %2653 = vmatprep.subr.mxu0 0.0
      %2654 = vmatpush1.msra.mxu0 0.0
      %2655 = vmatprep.subr.mxu0 0.0
      %2656 = vmatpush1.msra.mxu0 0.0
      %2657 = vmatprep.subr.mxu0 %v941
      %2658 = vmatpush1.msra.mxu0 %v940
      %2659 = vmatprep.subr.mxu0 %v939
      %2660 = vmatpush1.msra.mxu0 %v938
      %2661 = vmatprep.subr.mxu0 %v937
      %2662 = vmatpush1.msra.mxu0 %v936
      %2663 = vmatprep.subr.mxu0 %v935
      %2664 = vmatpush1.msra.mxu0 %v934
      %2665 = vmatprep.subr.mxu0 %v933
      %2666 = vmatpush1.msra.mxu0 %v932
      %2667 = vmatprep.subr.mxu0 %v931
      %2668 = vmatpush1.msra.mxu0 %v930
      %2669 = vmatprep.subr.mxu0 %v929
      %2670 = vmatpush1.msra.mxu0 %v928
      %2671 = vmatprep.subr.mxu0 %v927
      %2672 = vmatpush1.msra.mxu0 %v926
      %2673 = vmatprep.subr.mxu0 0.0
      %2674 = vmatpush2.msra.mxu0 0.0
      %2675 = vmatprep.subr.mxu0 0.0
      %2676 = vmatpush2.msra.mxu0 0.0
      %2677 = vmatprep.subr.mxu0 0.0
      %2678 = vmatpush2.msra.mxu0 0.0
      %2679 = vmatprep.subr.mxu0 0.0
      %2680 = vmatpush2.msra.mxu0 0.0
      %2681 = vmatprep.subr.mxu0 0.0
      %2682 = vmatpush2.msra.mxu0 0.0
      %2683 = vmatprep.subr.mxu0 0.0
      %2684 = vmatpush2.msra.mxu0 0.0
      %2685 = vmatprep.subr.mxu0 0.0
      %2686 = vmatpush2.msra.mxu0 0.0
      %2687 = vmatprep.subr.mxu0 0.0
      %2688 = vmatpush2.msra.mxu0 0.0
      %2689 = vmatprep.subr.mxu0 0.0
      %2690 = vmatpush2.msra.mxu0 0.0
      %2691 = vmatprep.subr.mxu0 0.0
      %2692 = vmatpush2.msra.mxu0 0.0
      %2693 = vmatprep.subr.mxu0 0.0
      %2694 = vmatpush2.msra.mxu0 0.0
      %2695 = vmatprep.subr.mxu0 0.0
      %2696 = vmatpush2.msra.mxu0 0.0
      %2697 = vmatprep.subr.mxu0 0.0
      %2698 = vmatpush2.msra.mxu0 0.0
      %2699 = vmatprep.subr.mxu0 0.0
      %2700 = vmatpush2.msra.mxu0 0.0
      %2701 = vmatprep.subr.mxu0 0.0
      %2702 = vmatpush2.msra.mxu0 0.0
      %2703 = vmatprep.subr.mxu0 0.0
      %2704 = vmatpush2.msra.mxu0 0.0
      %2705 = vmatprep.mubr.f32.mxu0 0.0
      %2706 = vmatmul.mubr.f32.gmra.mxu0 %v2639
      %v2707 = vpop.f32.mrf.mxu0
      %v2708 = vadd.f32 0.0, %v2707
      %v2709 = vpop.f32.mrf.mxu0
      %v2710 = vadd.f32 0.0, %v2709
      %2711 = vdwg.mxu0
      %s2712 = sadd.s32 %s1251, 6
      %s2713 = smul.u32 %s2712, 8
      %s2714 = sshra.s32 %s2713, 3
      %s2715 = sand.u32 %s2713, 7
      %s2716 = smul.u32 %s2714, 2
      %s2717 = smul.addr %s2716, 8
      %s2718 = scalar_lea.vmem [#allocation2], %s2717
      %v2719 = vld [vmem:[%s2718] sm:$0xff]
      %v2720 = vld [vmem:[%s2718 + $0x8] sm:$0xff]
      %2721 = vmatprep.subr.mxu0 0.0
      %2722 = vmatpush1.msra.mxu0 0.0
      %2723 = vmatprep.subr.mxu0 0.0
      %2724 = vmatpush1.msra.mxu0 0.0
      %2725 = vmatprep.subr.mxu0 0.0
      %2726 = vmatpush1.msra.mxu0 0.0
      %2727 = vmatprep.subr.mxu0 0.0
      %2728 = vmatpush1.msra.mxu0 0.0
      %2729 = vmatprep.subr.mxu0 0.0
      %2730 = vmatpush1.msra.mxu0 0.0
      %2731 = vmatprep.subr.mxu0 0.0
      %2732 = vmatpush1.msra.mxu0 0.0
      %2733 = vmatprep.subr.mxu0 0.0
      %2734 = vmatpush1.msra.mxu0 0.0
      %2735 = vmatprep.subr.mxu0 0.0
      %2736 = vmatpush1.msra.mxu0 0.0
      %2737 = vmatprep.subr.mxu0 %v909
      %2738 = vmatpush1.msra.mxu0 %v908
      %2739 = vmatprep.subr.mxu0 %v907
      %2740 = vmatpush1.msra.mxu0 %v906
      %2741 = vmatprep.subr.mxu0 %v905
      %2742 = vmatpush1.msra.mxu0 %v904
      %2743 = vmatprep.subr.mxu0 %v903
      %2744 = vmatpush1.msra.mxu0 %v902
      %2745 = vmatprep.subr.mxu0 %v901
      %2746 = vmatpush1.msra.mxu0 %v900
      %2747 = vmatprep.subr.mxu0 %v899
      %2748 = vmatpush1.msra.mxu0 %v898
      %2749 = vmatprep.subr.mxu0 %v897
      %2750 = vmatpush1.msra.mxu0 %v896
      %2751 = vmatprep.subr.mxu0 %v895
      %2752 = vmatpush1.msra.mxu0 %v894
      %2753 = vmatprep.subr.mxu0 0.0
      %2754 = vmatpush2.msra.mxu0 0.0
      %2755 = vmatprep.subr.mxu0 0.0
      %2756 = vmatpush2.msra.mxu0 0.0
      %2757 = vmatprep.subr.mxu0 0.0
      %2758 = vmatpush2.msra.mxu0 0.0
      %2759 = vmatprep.subr.mxu0 0.0
      %2760 = vmatpush2.msra.mxu0 0.0
      %2761 = vmatprep.subr.mxu0 0.0
      %2762 = vmatpush2.msra.mxu0 0.0
      %2763 = vmatprep.subr.mxu0 0.0
      %2764 = vmatpush2.msra.mxu0 0.0
      %2765 = vmatprep.subr.mxu0 0.0
      %2766 = vmatpush2.msra.mxu0 0.0
      %2767 = vmatprep.subr.mxu0 0.0
      %2768 = vmatpush2.msra.mxu0 0.0
      %2769 = vmatprep.subr.mxu0 0.0
      %2770 = vmatpush2.msra.mxu0 0.0
      %2771 = vmatprep.subr.mxu0 0.0
      %2772 = vmatpush2.msra.mxu0 0.0
      %2773 = vmatprep.subr.mxu0 0.0
      %2774 = vmatpush2.msra.mxu0 0.0
      %2775 = vmatprep.subr.mxu0 0.0
      %2776 = vmatpush2.msra.mxu0 0.0
      %2777 = vmatprep.subr.mxu0 0.0
      %2778 = vmatpush2.msra.mxu0 0.0
      %2779 = vmatprep.subr.mxu0 0.0
      %2780 = vmatpush2.msra.mxu0 0.0
      %2781 = vmatprep.subr.mxu0 0.0
      %2782 = vmatpush2.msra.mxu0 0.0
      %2783 = vmatprep.subr.mxu0 0.0
      %2784 = vmatpush2.msra.mxu0 0.0
      %2785 = vmatprep.mubr.f32.mxu0 0.0
      %2786 = vmatmul.mubr.f32.gmra.mxu0 %v2533
      %v2787 = vpop.f32.mrf.mxu0
      %v2788 = vadd.f32 0.0, %v2787
      %v2789 = vpop.f32.mrf.mxu0
      %v2790 = vadd.f32 0.0, %v2789
      %2791 = vdwg.mxu0
      %v2792 = vadd.f32 %v2719, %v2788
      %v2793 = vadd.f32 %v2720, %v2790
      %v2794 = vxor.u32 %v2792, 2147483648
      %v2795 = vxor.u32 %v2793, 2147483648
      %v2796 = vmul.f32 %v2794, 1.442695
      %v2797 = vpow.pop %v2796
      %v2798 = vmul.f32 %v2795, 1.442695
      %v2799 = vpow.pop %v2798
      %v2800 = vadd.f32 %v2797, 1.0
      %v2801 = vadd.f32 %v2799, 1.0
      %v2802 = vrcp.pop %v2800
      %v2803 = vmul.f32 1.0, %v2802
      %v2804 = vrcp.pop %v2801
      %v2805 = vmul.f32 1.0, %v2804
      %v2806 = vtanh.pop %v2793
      %v2807 = vmul.f32 %v2803, %v2525
      %2809 = vrot.lane.b32.xlu0 %v2806, 64
      %v2810 = vpop.permute.xlu0 %2809
      %v2812 = vmul.f32 %v2803, %v2810
      %2814 = vrot.lane.b32.xlu0 %v2812, 64
      %v2815 = vpop.permute.xlu0 %2814
      %v2817 = vadd.f32 %v2807, %v2815
      %v2818 = vtanh.pop %v2817
      %2820 = vrot.lane.b32.xlu0 %v2818, 64
      %v2821 = vpop.permute.xlu0 %2820
      %v2823 = vmul.f32 %v2805, %v2821
      %v2825 = vsel %vm964, %v2823, 0
      %2827 = vmatprep.subr.mxu0 0.0
      %2828 = vmatpush1.msra.mxu0 0.0
      %2829 = vmatprep.subr.mxu0 0.0
      %2830 = vmatpush1.msra.mxu0 0.0
      %2831 = vmatprep.subr.mxu0 0.0
      %2832 = vmatpush1.msra.mxu0 0.0
      %2833 = vmatprep.subr.mxu0 0.0
      %2834 = vmatpush1.msra.mxu0 0.0
      %2835 = vmatprep.subr.mxu0 0.0
      %2836 = vmatpush1.msra.mxu0 0.0
      %2837 = vmatprep.subr.mxu0 0.0
      %2838 = vmatpush1.msra.mxu0 0.0
      %2839 = vmatprep.subr.mxu0 0.0
      %2840 = vmatpush1.msra.mxu0 0.0
      %2841 = vmatprep.subr.mxu0 0.0
      %2842 = vmatpush1.msra.mxu0 0.0
      %2843 = vmatprep.subr.mxu0 %v925
      %2844 = vmatpush1.msra.mxu0 %v924
      %2845 = vmatprep.subr.mxu0 %v923
      %2846 = vmatpush1.msra.mxu0 %v922
      %2847 = vmatprep.subr.mxu0 %v921
      %2848 = vmatpush1.msra.mxu0 %v920
      %2849 = vmatprep.subr.mxu0 %v919
      %2850 = vmatpush1.msra.mxu0 %v918
      %2851 = vmatprep.subr.mxu0 %v917
      %2852 = vmatpush1.msra.mxu0 %v916
      %2853 = vmatprep.subr.mxu0 %v915
      %2854 = vmatpush1.msra.mxu0 %v914
      %2855 = vmatprep.subr.mxu0 %v913
      %2856 = vmatpush1.msra.mxu0 %v912
      %2857 = vmatprep.subr.mxu0 %v911
      %2858 = vmatpush1.msra.mxu0 %v910
      %2859 = vmatprep.subr.mxu0 0.0
      %2860 = vmatpush2.msra.mxu0 0.0
      %2861 = vmatprep.subr.mxu0 0.0
      %2862 = vmatpush2.msra.mxu0 0.0
      %2863 = vmatprep.subr.mxu0 0.0
      %2864 = vmatpush2.msra.mxu0 0.0
      %2865 = vmatprep.subr.mxu0 0.0
      %2866 = vmatpush2.msra.mxu0 0.0
      %2867 = vmatprep.subr.mxu0 0.0
      %2868 = vmatpush2.msra.mxu0 0.0
      %2869 = vmatprep.subr.mxu0 0.0
      %2870 = vmatpush2.msra.mxu0 0.0
      %2871 = vmatprep.subr.mxu0 0.0
      %2872 = vmatpush2.msra.mxu0 0.0
      %2873 = vmatprep.subr.mxu0 0.0
      %2874 = vmatpush2.msra.mxu0 0.0
      %2875 = vmatprep.subr.mxu0 0.0
      %2876 = vmatpush2.msra.mxu0 0.0
      %2877 = vmatprep.subr.mxu0 0.0
      %2878 = vmatpush2.msra.mxu0 0.0
      %2879 = vmatprep.subr.mxu0 0.0
      %2880 = vmatpush2.msra.mxu0 0.0
      %2881 = vmatprep.subr.mxu0 0.0
      %2882 = vmatpush2.msra.mxu0 0.0
      %2883 = vmatprep.subr.mxu0 0.0
      %2884 = vmatpush2.msra.mxu0 0.0
      %2885 = vmatprep.subr.mxu0 0.0
      %2886 = vmatpush2.msra.mxu0 0.0
      %2887 = vmatprep.subr.mxu0 0.0
      %2888 = vmatpush2.msra.mxu0 0.0
      %2889 = vmatprep.subr.mxu0 0.0
      %2890 = vmatpush2.msra.mxu0 0.0
      %2891 = vmatprep.mubr.f32.mxu0 0.0
      %2892 = vmatmul.mubr.f32.gmra.mxu0 %v2825
      %v2893 = vpop.f32.mrf.mxu0
      %v2894 = vadd.f32 %v2708, %v2893
      %v2895 = vpop.f32.mrf.mxu0
      %v2896 = vadd.f32 %v2710, %v2895
      %2897 = vdwg.mxu0
      %v2898 = vadd.f32 %v2894, %v942
      %v2899 = vadd.f32 %v2896, %v943
      %v2900 = vxor.u32 %v2898, 2147483648
      %v2901 = vxor.u32 %v2899, 2147483648
      %v2902 = vmul.f32 %v2900, 1.442695
      %v2903 = vpow.pop %v2902
      %v2904 = vmul.f32 %v2901, 1.442695
      %v2905 = vpow.pop %v2904
      %v2906 = vadd.f32 %v2903, 1.0
      %v2907 = vadd.f32 %v2905, 1.0
      %v2908 = vrcp.pop %v2906
      %v2909 = vmul.f32 1.0, %v2908
      %v2910 = vrcp.pop %v2907
      %v2911 = vmul.f32 1.0, %v2910
      %v2912 = vtanh.pop %v2899
      %v2913 = vmul.f32 %v2909, %v2631
      %2915 = vrot.lane.b32.xlu0 %v2912, 64
      %v2916 = vpop.permute.xlu0 %2915
      %v2918 = vmul.f32 %v2909, %v2916
      %2920 = vrot.lane.b32.xlu0 %v2918, 64
      %v2921 = vpop.permute.xlu0 %2920
      %v2923 = vadd.f32 %v2913, %v2921
      %v2924 = vtanh.pop %v2923
      %2926 = vrot.lane.b32.xlu0 %v2924, 64
      %v2927 = vpop.permute.xlu0 %2926
      %v2929 = vmul.f32 %v2911, %v2927
      %v2931 = vsel %vm964, %v2929, 0
      %2933 = vmatprep.subr.mxu0 0.0
      %2934 = vmatpush1.msra.mxu0 0.0
      %2935 = vmatprep.subr.mxu0 0.0
      %2936 = vmatpush1.msra.mxu0 0.0
      %2937 = vmatprep.subr.mxu0 0.0
      %2938 = vmatpush1.msra.mxu0 0.0
      %2939 = vmatprep.subr.mxu0 0.0
      %2940 = vmatpush1.msra.mxu0 0.0
      %2941 = vmatprep.subr.mxu0 0.0
      %2942 = vmatpush1.msra.mxu0 0.0
      %2943 = vmatprep.subr.mxu0 0.0
      %2944 = vmatpush1.msra.mxu0 0.0
      %2945 = vmatprep.subr.mxu0 0.0
      %2946 = vmatpush1.msra.mxu0 0.0
      %2947 = vmatprep.subr.mxu0 0.0
      %2948 = vmatpush1.msra.mxu0 0.0
      %2949 = vmatprep.subr.mxu0 %v941
      %2950 = vmatpush1.msra.mxu0 %v940
      %2951 = vmatprep.subr.mxu0 %v939
      %2952 = vmatpush1.msra.mxu0 %v938
      %2953 = vmatprep.subr.mxu0 %v937
      %2954 = vmatpush1.msra.mxu0 %v936
      %2955 = vmatprep.subr.mxu0 %v935
      %2956 = vmatpush1.msra.mxu0 %v934
      %2957 = vmatprep.subr.mxu0 %v933
      %2958 = vmatpush1.msra.mxu0 %v932
      %2959 = vmatprep.subr.mxu0 %v931
      %2960 = vmatpush1.msra.mxu0 %v930
      %2961 = vmatprep.subr.mxu0 %v929
      %2962 = vmatpush1.msra.mxu0 %v928
      %2963 = vmatprep.subr.mxu0 %v927
      %2964 = vmatpush1.msra.mxu0 %v926
      %2965 = vmatprep.subr.mxu0 0.0
      %2966 = vmatpush2.msra.mxu0 0.0
      %2967 = vmatprep.subr.mxu0 0.0
      %2968 = vmatpush2.msra.mxu0 0.0
      %2969 = vmatprep.subr.mxu0 0.0
      %2970 = vmatpush2.msra.mxu0 0.0
      %2971 = vmatprep.subr.mxu0 0.0
      %2972 = vmatpush2.msra.mxu0 0.0
      %2973 = vmatprep.subr.mxu0 0.0
      %2974 = vmatpush2.msra.mxu0 0.0
      %2975 = vmatprep.subr.mxu0 0.0
      %2976 = vmatpush2.msra.mxu0 0.0
      %2977 = vmatprep.subr.mxu0 0.0
      %2978 = vmatpush2.msra.mxu0 0.0
      %2979 = vmatprep.subr.mxu0 0.0
      %2980 = vmatpush2.msra.mxu0 0.0
      %2981 = vmatprep.subr.mxu0 0.0
      %2982 = vmatpush2.msra.mxu0 0.0
      %2983 = vmatprep.subr.mxu0 0.0
      %2984 = vmatpush2.msra.mxu0 0.0
      %2985 = vmatprep.subr.mxu0 0.0
      %2986 = vmatpush2.msra.mxu0 0.0
      %2987 = vmatprep.subr.mxu0 0.0
      %2988 = vmatpush2.msra.mxu0 0.0
      %2989 = vmatprep.subr.mxu0 0.0
      %2990 = vmatpush2.msra.mxu0 0.0
      %2991 = vmatprep.subr.mxu0 0.0
      %2992 = vmatpush2.msra.mxu0 0.0
      %2993 = vmatprep.subr.mxu0 0.0
      %2994 = vmatpush2.msra.mxu0 0.0
      %2995 = vmatprep.subr.mxu0 0.0
      %2996 = vmatpush2.msra.mxu0 0.0
      %2997 = vmatprep.mubr.f32.mxu0 0.0
      %2998 = vmatmul.mubr.f32.gmra.mxu0 %v2931
      %v2999 = vpop.f32.mrf.mxu0
      %v3000 = vadd.f32 0.0, %v2999
      %v3001 = vpop.f32.mrf.mxu0
      %v3002 = vadd.f32 0.0, %v3001
      %3003 = vdwg.mxu0
      %s3004 = sadd.s32 %s1251, 7
      %s3005 = smul.u32 %s3004, 8
      %s3006 = sshra.s32 %s3005, 3
      %s3007 = sand.u32 %s3005, 7
      %s3008 = smul.u32 %s3006, 2
      %s3009 = smul.addr %s3008, 8
      %s3010 = scalar_lea.vmem [#allocation2], %s3009
      %v3011 = vld [vmem:[%s3010] sm:$0xff]
      %v3012 = vld [vmem:[%s3010 + $0x8] sm:$0xff]
      %3013 = vmatprep.subr.mxu0 0.0
      %3014 = vmatpush1.msra.mxu0 0.0
      %3015 = vmatprep.subr.mxu0 0.0
      %3016 = vmatpush1.msra.mxu0 0.0
      %3017 = vmatprep.subr.mxu0 0.0
      %3018 = vmatpush1.msra.mxu0 0.0
      %3019 = vmatprep.subr.mxu0 0.0
      %3020 = vmatpush1.msra.mxu0 0.0
      %3021 = vmatprep.subr.mxu0 0.0
      %3022 = vmatpush1.msra.mxu0 0.0
      %3023 = vmatprep.subr.mxu0 0.0
      %3024 = vmatpush1.msra.mxu0 0.0
      %3025 = vmatprep.subr.mxu0 0.0
      %3026 = vmatpush1.msra.mxu0 0.0
      %3027 = vmatprep.subr.mxu0 0.0
      %3028 = vmatpush1.msra.mxu0 0.0
      %3029 = vmatprep.subr.mxu0 %v909
      %3030 = vmatpush1.msra.mxu0 %v908
      %3031 = vmatprep.subr.mxu0 %v907
      %3032 = vmatpush1.msra.mxu0 %v906
      %3033 = vmatprep.subr.mxu0 %v905
      %3034 = vmatpush1.msra.mxu0 %v904
      %3035 = vmatprep.subr.mxu0 %v903
      %3036 = vmatpush1.msra.mxu0 %v902
      %3037 = vmatprep.subr.mxu0 %v901
      %3038 = vmatpush1.msra.mxu0 %v900
      %3039 = vmatprep.subr.mxu0 %v899
      %3040 = vmatpush1.msra.mxu0 %v898
      %3041 = vmatprep.subr.mxu0 %v897
      %3042 = vmatpush1.msra.mxu0 %v896
      %3043 = vmatprep.subr.mxu0 %v895
      %3044 = vmatpush1.msra.mxu0 %v894
      %3045 = vmatprep.subr.mxu0 0.0
      %3046 = vmatpush2.msra.mxu0 0.0
      %3047 = vmatprep.subr.mxu0 0.0
      %3048 = vmatpush2.msra.mxu0 0.0
      %3049 = vmatprep.subr.mxu0 0.0
      %3050 = vmatpush2.msra.mxu0 0.0
      %3051 = vmatprep.subr.mxu0 0.0
      %3052 = vmatpush2.msra.mxu0 0.0
      %3053 = vmatprep.subr.mxu0 0.0
      %3054 = vmatpush2.msra.mxu0 0.0
      %3055 = vmatprep.subr.mxu0 0.0
      %3056 = vmatpush2.msra.mxu0 0.0
      %3057 = vmatprep.subr.mxu0 0.0
      %3058 = vmatpush2.msra.mxu0 0.0
      %3059 = vmatprep.subr.mxu0 0.0
      %3060 = vmatpush2.msra.mxu0 0.0
      %3061 = vmatprep.subr.mxu0 0.0
      %3062 = vmatpush2.msra.mxu0 0.0
      %3063 = vmatprep.subr.mxu0 0.0
      %3064 = vmatpush2.msra.mxu0 0.0
      %3065 = vmatprep.subr.mxu0 0.0
      %3066 = vmatpush2.msra.mxu0 0.0
      %3067 = vmatprep.subr.mxu0 0.0
      %3068 = vmatpush2.msra.mxu0 0.0
      %3069 = vmatprep.subr.mxu0 0.0
      %3070 = vmatpush2.msra.mxu0 0.0
      %3071 = vmatprep.subr.mxu0 0.0
      %3072 = vmatpush2.msra.mxu0 0.0
      %3073 = vmatprep.subr.mxu0 0.0
      %3074 = vmatpush2.msra.mxu0 0.0
      %3075 = vmatprep.subr.mxu0 0.0
      %3076 = vmatpush2.msra.mxu0 0.0
      %3077 = vmatprep.mubr.f32.mxu0 0.0
      %3078 = vmatmul.mubr.f32.gmra.mxu0 %v2825
      %v3079 = vpop.f32.mrf.mxu0
      %v3080 = vadd.f32 0.0, %v3079
      %v3081 = vpop.f32.mrf.mxu0
      %v3082 = vadd.f32 0.0, %v3081
      %3083 = vdwg.mxu0
      %v3084 = vadd.f32 %v3011, %v3080
      %v3085 = vadd.f32 %v3012, %v3082
      %v3086 = vxor.u32 %v3084, 2147483648
      %v3087 = vxor.u32 %v3085, 2147483648
      %v3088 = vmul.f32 %v3086, 1.442695
      %v3089 = vpow.pop %v3088
      %v3090 = vmul.f32 %v3087, 1.442695
      %v3091 = vpow.pop %v3090
      %v3092 = vadd.f32 %v3089, 1.0
      %v3093 = vadd.f32 %v3091, 1.0
      %v3094 = vrcp.pop %v3092
      %v3095 = vmul.f32 1.0, %v3094
      %v3096 = vrcp.pop %v3093
      %v3097 = vmul.f32 1.0, %v3096
      %v3098 = vtanh.pop %v3085
      %v3099 = vmul.f32 %v3095, %v2817
      %3101 = vrot.lane.b32.xlu0 %v3098, 64
      %v3102 = vpop.permute.xlu0 %3101
      %v3104 = vmul.f32 %v3095, %v3102
      %3106 = vrot.lane.b32.xlu0 %v3104, 64
      %v3107 = vpop.permute.xlu0 %3106
      %v3109 = vadd.f32 %v3099, %v3107
      %v3110 = vtanh.pop %v3109
      %3112 = vrot.lane.b32.xlu0 %v3110, 64
      %v3113 = vpop.permute.xlu0 %3112
      %v3115 = vmul.f32 %v3097, %v3113
      %v3117 = vsel %vm964, %v3115, 0
      %3119 = vmatprep.subr.mxu0 0.0
      %3120 = vmatpush1.msra.mxu0 0.0
      %3121 = vmatprep.subr.mxu0 0.0
      %3122 = vmatpush1.msra.mxu0 0.0
      %3123 = vmatprep.subr.mxu0 0.0
      %3124 = vmatpush1.msra.mxu0 0.0
      %3125 = vmatprep.subr.mxu0 0.0
      %3126 = vmatpush1.msra.mxu0 0.0
      %3127 = vmatprep.subr.mxu0 0.0
      %3128 = vmatpush1.msra.mxu0 0.0
      %3129 = vmatprep.subr.mxu0 0.0
      %3130 = vmatpush1.msra.mxu0 0.0
      %3131 = vmatprep.subr.mxu0 0.0
      %3132 = vmatpush1.msra.mxu0 0.0
      %3133 = vmatprep.subr.mxu0 0.0
      %3134 = vmatpush1.msra.mxu0 0.0
      %3135 = vmatprep.subr.mxu0 %v925
      %3136 = vmatpush1.msra.mxu0 %v924
      %3137 = vmatprep.subr.mxu0 %v923
      %3138 = vmatpush1.msra.mxu0 %v922
      %3139 = vmatprep.subr.mxu0 %v921
      %3140 = vmatpush1.msra.mxu0 %v920
      %3141 = vmatprep.subr.mxu0 %v919
      %3142 = vmatpush1.msra.mxu0 %v918
      %3143 = vmatprep.subr.mxu0 %v917
      %3144 = vmatpush1.msra.mxu0 %v916
      %3145 = vmatprep.subr.mxu0 %v915
      %3146 = vmatpush1.msra.mxu0 %v914
      %3147 = vmatprep.subr.mxu0 %v913
      %3148 = vmatpush1.msra.mxu0 %v912
      %3149 = vmatprep.subr.mxu0 %v911
      %3150 = vmatpush1.msra.mxu0 %v910
      %3151 = vmatprep.subr.mxu0 0.0
      %3152 = vmatpush2.msra.mxu0 0.0
      %3153 = vmatprep.subr.mxu0 0.0
      %3154 = vmatpush2.msra.mxu0 0.0
      %3155 = vmatprep.subr.mxu0 0.0
      %3156 = vmatpush2.msra.mxu0 0.0
      %3157 = vmatprep.subr.mxu0 0.0
      %3158 = vmatpush2.msra.mxu0 0.0
      %3159 = vmatprep.subr.mxu0 0.0
      %3160 = vmatpush2.msra.mxu0 0.0
      %3161 = vmatprep.subr.mxu0 0.0
      %3162 = vmatpush2.msra.mxu0 0.0
      %3163 = vmatprep.subr.mxu0 0.0
      %3164 = vmatpush2.msra.mxu0 0.0
      %3165 = vmatprep.subr.mxu0 0.0
      %3166 = vmatpush2.msra.mxu0 0.0
      %3167 = vmatprep.subr.mxu0 0.0
      %3168 = vmatpush2.msra.mxu0 0.0
      %3169 = vmatprep.subr.mxu0 0.0
      %3170 = vmatpush2.msra.mxu0 0.0
      %3171 = vmatprep.subr.mxu0 0.0
      %3172 = vmatpush2.msra.mxu0 0.0
      %3173 = vmatprep.subr.mxu0 0.0
      %3174 = vmatpush2.msra.mxu0 0.0
      %3175 = vmatprep.subr.mxu0 0.0
      %3176 = vmatpush2.msra.mxu0 0.0
      %3177 = vmatprep.subr.mxu0 0.0
      %3178 = vmatpush2.msra.mxu0 0.0
      %3179 = vmatprep.subr.mxu0 0.0
      %3180 = vmatpush2.msra.mxu0 0.0
      %3181 = vmatprep.subr.mxu0 0.0
      %3182 = vmatpush2.msra.mxu0 0.0
      %3183 = vmatprep.mubr.f32.mxu0 0.0
      %3184 = vmatmul.mubr.f32.gmra.mxu0 %v3117
      %v3185 = vpop.f32.mrf.mxu0
      %v3186 = vadd.f32 %v3000, %v3185
      %v3187 = vpop.f32.mrf.mxu0
      %v3188 = vadd.f32 %v3002, %v3187
      %3189 = vdwg.mxu0
      %v3190 = vadd.f32 %v3186, %v942
      %v3191 = vadd.f32 %v3188, %v943
      %v3192 = vxor.u32 %v3190, 2147483648
      %v3193 = vxor.u32 %v3191, 2147483648
      %v3194 = vmul.f32 %v3192, 1.442695
      %v3195 = vpow.pop %v3194
      %v3196 = vmul.f32 %v3193, 1.442695
      %v3197 = vpow.pop %v3196
      %v3198 = vadd.f32 %v3195, 1.0
      %v3199 = vadd.f32 %v3197, 1.0
      %v3200 = vrcp.pop %v3198
      %v3201 = vmul.f32 1.0, %v3200
      %v3202 = vrcp.pop %v3199
      %v3203 = vmul.f32 1.0, %v3202
      %v3204 = vtanh.pop %v3191
      %v3205 = vmul.f32 %v3201, %v2923
      %3207 = vrot.lane.b32.xlu0 %v3204, 64
      %v3208 = vpop.permute.xlu0 %3207
      %v3210 = vmul.f32 %v3201, %v3208
      %3212 = vrot.lane.b32.xlu0 %v3210, 64
      %v3213 = vpop.permute.xlu0 %3212
      %v3215 = vadd.f32 %v3205, %v3213
      %v3216 = vtanh.pop %v3215
      %3218 = vrot.lane.b32.xlu0 %v3216, 64
      %v3219 = vpop.permute.xlu0 %3218
      %v3221 = vmul.f32 %v3203, %v3219
      %v3223 = vsel %vm964, %v3221, 0
      %3225 = vmatprep.subr.mxu0 0.0
      %3226 = vmatpush1.msra.mxu0 0.0
      %3227 = vmatprep.subr.mxu0 0.0
      %3228 = vmatpush1.msra.mxu0 0.0
      %3229 = vmatprep.subr.mxu0 0.0
      %3230 = vmatpush1.msra.mxu0 0.0
      %3231 = vmatprep.subr.mxu0 0.0
      %3232 = vmatpush1.msra.mxu0 0.0
      %3233 = vmatprep.subr.mxu0 0.0
      %3234 = vmatpush1.msra.mxu0 0.0
      %3235 = vmatprep.subr.mxu0 0.0
      %3236 = vmatpush1.msra.mxu0 0.0
      %3237 = vmatprep.subr.mxu0 0.0
      %3238 = vmatpush1.msra.mxu0 0.0
      %3239 = vmatprep.subr.mxu0 0.0
      %3240 = vmatpush1.msra.mxu0 0.0
      %3241 = vmatprep.subr.mxu0 %v941
      %3242 = vmatpush1.msra.mxu0 %v940
      %3243 = vmatprep.subr.mxu0 %v939
      %3244 = vmatpush1.msra.mxu0 %v938
      %3245 = vmatprep.subr.mxu0 %v937
      %3246 = vmatpush1.msra.mxu0 %v936
      %3247 = vmatprep.subr.mxu0 %v935
      %3248 = vmatpush1.msra.mxu0 %v934
      %3249 = vmatprep.subr.mxu0 %v933
      %3250 = vmatpush1.msra.mxu0 %v932
      %3251 = vmatprep.subr.mxu0 %v931
      %3252 = vmatpush1.msra.mxu0 %v930
      %3253 = vmatprep.subr.mxu0 %v929
      %3254 = vmatpush1.msra.mxu0 %v928
      %3255 = vmatprep.subr.mxu0 %v927
      %3256 = vmatpush1.msra.mxu0 %v926
      %3257 = vmatprep.subr.mxu0 0.0
      %3258 = vmatpush2.msra.mxu0 0.0
      %3259 = vmatprep.subr.mxu0 0.0
      %3260 = vmatpush2.msra.mxu0 0.0
      %3261 = vmatprep.subr.mxu0 0.0
      %3262 = vmatpush2.msra.mxu0 0.0
      %3263 = vmatprep.subr.mxu0 0.0
      %3264 = vmatpush2.msra.mxu0 0.0
      %3265 = vmatprep.subr.mxu0 0.0
      %3266 = vmatpush2.msra.mxu0 0.0
      %3267 = vmatprep.subr.mxu0 0.0
      %3268 = vmatpush2.msra.mxu0 0.0
      %3269 = vmatprep.subr.mxu0 0.0
      %3270 = vmatpush2.msra.mxu0 0.0
      %3271 = vmatprep.subr.mxu0 0.0
      %3272 = vmatpush2.msra.mxu0 0.0
      %3273 = vmatprep.subr.mxu0 0.0
      %3274 = vmatpush2.msra.mxu0 0.0
      %3275 = vmatprep.subr.mxu0 0.0
      %3276 = vmatpush2.msra.mxu0 0.0
      %3277 = vmatprep.subr.mxu0 0.0
      %3278 = vmatpush2.msra.mxu0 0.0
      %3279 = vmatprep.subr.mxu0 0.0
      %3280 = vmatpush2.msra.mxu0 0.0
      %3281 = vmatprep.subr.mxu0 0.0
      %3282 = vmatpush2.msra.mxu0 0.0
      %3283 = vmatprep.subr.mxu0 0.0
      %3284 = vmatpush2.msra.mxu0 0.0
      %3285 = vmatprep.subr.mxu0 0.0
      %3286 = vmatpush2.msra.mxu0 0.0
      %3287 = vmatprep.subr.mxu0 0.0
      %3288 = vmatpush2.msra.mxu0 0.0
      %3289 = vmatprep.mubr.f32.mxu0 0.0
      %3290 = vmatmul.mubr.f32.gmra.mxu0 %v3223
      %v3291 = vpop.f32.mrf.mxu0
      %v3292 = vadd.f32 0.0, %v3291
      %v3293 = vpop.f32.mrf.mxu0
      %v3294 = vadd.f32 0.0, %v3293
      %3295 = vdwg.mxu0
    $region42: #{tpu_custom_call.1} parent=1 // loop_footer
      %s949 = sadd.s32 1, %s945
    $region43: #{tpu_custom_call.1} parent=1 // loop_footer_branch
      %944 = sbr.rel target = $region39
    $region44: #{tpu_custom_call.1} parent=1 // loop_exit
      _
    %v3296 = vld [vmem:[%s7] sm:$0xff]
    %v3297 = vld [vmem:[%s7 + $0x8] sm:$0xff]
    %v3298 = vld [vmem:[%s7 + $0x10] sm:$0xff]
    %v3299 = vld [vmem:[%s7 + $0x18] sm:$0xff]
    %v3300 = vld [vmem:[%s7 + $0x20] sm:$0xff]
    %v3301 = vld [vmem:[%s7 + $0x28] sm:$0xff]
    %v3302 = vld [vmem:[%s7 + $0x30] sm:$0xff]
    %v3303 = vld [vmem:[%s7 + $0x38] sm:$0xff]
    %v3304 = vld [vmem:[%s8] sm:$0xff]
    %vm3305 = vcmask 523264
    %v3307 = vsel %vm3305, %v952, 0
    %3309 = vmatprep.subr.mxu0 0.0
    %3310 = vmatpush1.msra.mxu0 0.0
    %3311 = vmatprep.subr.mxu0 0.0
    %3312 = vmatpush1.msra.mxu0 0.0
    %3313 = vmatprep.subr.mxu0 0.0
    %3314 = vmatpush1.msra.mxu0 0.0
    %3315 = vmatprep.subr.mxu0 0.0
    %3316 = vmatpush1.msra.mxu0 0.0
    %3317 = vmatprep.subr.mxu0 0.0
    %3318 = vmatpush1.msra.mxu0 0.0
    %3319 = vmatprep.subr.mxu0 0.0
    %3320 = vmatpush1.msra.mxu0 0.0
    %3321 = vmatprep.subr.mxu0 0.0
    %3322 = vmatpush1.msra.mxu0 0.0
    %3323 = vmatprep.subr.mxu0 0.0
    %3324 = vmatpush1.msra.mxu0 0.0
    %3325 = vmatprep.subr.mxu0 0.0
    %3326 = vmatpush1.msra.mxu0 %v3303
    %3327 = vmatprep.subr.mxu0 0.0
    %3328 = vmatpush1.msra.mxu0 %v3302
    %3329 = vmatprep.subr.mxu0 0.0
    %3330 = vmatpush1.msra.mxu0 %v3301
    %3331 = vmatprep.subr.mxu0 0.0
    %3332 = vmatpush1.msra.mxu0 %v3300
    %3333 = vmatprep.subr.mxu0 0.0
    %3334 = vmatpush1.msra.mxu0 %v3299
    %3335 = vmatprep.subr.mxu0 0.0
    %3336 = vmatpush1.msra.mxu0 %v3298
    %3337 = vmatprep.subr.mxu0 0.0
    %3338 = vmatpush1.msra.mxu0 %v3297
    %3339 = vmatprep.subr.mxu0 0.0
    %3340 = vmatpush1.msra.mxu0 %v3296
    %3341 = vmatprep.subr.mxu0 0.0
    %3342 = vmatpush2.msra.mxu0 0.0
    %3343 = vmatprep.subr.mxu0 0.0
    %3344 = vmatpush2.msra.mxu0 0.0
    %3345 = vmatprep.subr.mxu0 0.0
    %3346 = vmatpush2.msra.mxu0 0.0
    %3347 = vmatprep.subr.mxu0 0.0
    %3348 = vmatpush2.msra.mxu0 0.0
    %3349 = vmatprep.subr.mxu0 0.0
    %3350 = vmatpush2.msra.mxu0 0.0
    %3351 = vmatprep.subr.mxu0 0.0
    %3352 = vmatpush2.msra.mxu0 0.0
    %3353 = vmatprep.subr.mxu0 0.0
    %3354 = vmatpush2.msra.mxu0 0.0
    %3355 = vmatprep.subr.mxu0 0.0
    %3356 = vmatpush2.msra.mxu0 0.0
    %3357 = vmatprep.subr.mxu0 0.0
    %3358 = vmatpush2.msra.mxu0 0.0
    %3359 = vmatprep.subr.mxu0 0.0
    %3360 = vmatpush2.msra.mxu0 0.0
    %3361 = vmatprep.subr.mxu0 0.0
    %3362 = vmatpush2.msra.mxu0 0.0
    %3363 = vmatprep.subr.mxu0 0.0
    %3364 = vmatpush2.msra.mxu0 0.0
    %3365 = vmatprep.subr.mxu0 0.0
    %3366 = vmatpush2.msra.mxu0 0.0
    %3367 = vmatprep.subr.mxu0 0.0
    %3368 = vmatpush2.msra.mxu0 0.0
    %3369 = vmatprep.subr.mxu0 0.0
    %3370 = vmatpush2.msra.mxu0 0.0
    %3371 = vmatprep.subr.mxu0 0.0
    %3372 = vmatpush2.msra.mxu0 0.0
    %3373 = vmatprep.mubr.f32.mxu0 0.0
    %3374 = vmatmul.mubr.f32.gmra.mxu0 %v3307
    %v3375 = vpop.f32.mrf.mxu0
    %v3376 = vadd.f32 %v3304, %v3375
    %v3377 = vpop.f32.mrf.mxu0
    %3378 = vdwg.mxu0
    %3379 = vst [vmem:[#allocation3] sm:$0xff] %v3376
    // Predicated region
    $region45: #{tpu_custom_call.1} parent=1 // pred_check
      _
    $region46: #{tpu_custom_call.1} parent=1 // pred_check_branch
      %3381 = sbr.rel (0) target = $region48
    $region47: #{tpu_custom_call.1} parent=1 // pred_region
      %s3383 = ssub.s32 128, 128
      %3384 = vsyncadd [#allocation4], %s3383
      %s3386 = sshll.u32 [#allocation3], 4
      %s3387 = int_to_ptr.vmem [resolvable:$true] %s3386
      %3389 = dma.vmem_to_hbm [thread:$0]  %s3387, 128, %s9, [#allocation4]
    $region48: #{tpu_custom_call.1} parent=1 // pred_fallthru
      _
    // Predicated region
    $region49: #{tpu_custom_call.1} parent=1 // pred_check
      _
    $region50: #{tpu_custom_call.1} parent=1 // pred_check_branch
      %3391 = sbr.rel (0) target = $region52
    $region51: #{tpu_custom_call.1} parent=1 // pred_region
      %3392 = dma.done [#allocation4], 128
    $region52: #{tpu_custom_call.1} parent=1 // pred_fallthru
      _
    %3393 = vsyncpa [#allocation4], 1

</llo_original>
